<compile_context>
chip_gen: v6e
topology: v6e:2x2x1
jax: 0.10.0
libtpu: 0.0.40
codegen_flags: <defaults>
</compile_context>

<pallas_src>
import functools

import jax
import jax.numpy as jnp
from jax.experimental import pallas as pl
from jax.experimental.pallas import tpu as pltpu


# ----------------------------- VMEM budgeting (generation aware) ----------------

def _vmem_capacity_bytes():
    try:
        info = pltpu.get_tpu_info()
        cap = int(getattr(info, "vmem_capacity_bytes", 64 * 2 ** 20))
        if cap <= 0:
            cap = 64 * 2 ** 20
        return cap
    except Exception:
        return 64 * 2 ** 20          # conservative (v7x-sized) fallback


_VMEM_CAP = _vmem_capacity_bytes()
_BIG_VMEM = _VMEM_CAP >= 100 * 2 ** 20                        # v5e / v6e (128 MiB)
_VMEM_LIMIT = min(_VMEM_CAP // 2, (64 if _BIG_VMEM else 32) * 2 ** 20)
_STREAM_BUDGET = min(_VMEM_CAP // 4, (32 if _BIG_VMEM else 12) * 2 ** 20)
_TILE_CAP = 8192 if _BIG_VMEM else 4096
_FUSED_BUDGET = min(_VMEM_LIMIT // 2, 16 * 2 ** 20)           # budget for the fused one-shot path
_BN_EPS = 1e-5


def _round_up(x, m):
    return (x + m - 1) // m * m


def _choose_tile_p(P, K, C):
    # double-buffered bf16 patch tile + double-buffered bf16 output tile per row.
    bytes_per_row = 2 * (K * 2) + 2 * (C * 2)
    t = max(128, (_STREAM_BUDGET // bytes_per_row) // 128 * 128)
    t = min(t, _TILE_CAP)
    t = min(t, _round_up(P, 128))
    if (not _BIG_VMEM) and t >= P and P > 256:
        # keep >= 2 tiles so both v7x TensorCores get work on "parallel" row grids.
        t = _round_up((P + 1) // 2, 128)
    return int(t)


def _compiler_params(n_axes=1, parallel=True):
    sem = tuple("parallel" if parallel else "arbitrary" for _ in range(n_axes))
    return pltpu.CompilerParams(dimension_semantics=sem, vmem_limit_bytes=_VMEM_LIMIT)


def _fused_fits(F, K, C, P):
    # bf16 patches + bf16 weights + bf16 out + f32 on-chip pre-activations (x4 margin), 2x for
    # Pallas buffer duplication, plus slack.
    est = F * (K * P * 2 + C * P * 2 + C * K * 2 + 4 * C * P * 4) + (C * 4) * 8 + 4096
    return 2 * est <= _FUSED_BUDGET


# ----------------------------- fused single-call conv kernel --------------------

def _fused_conv_bn_act_kernel(neg_slope, use_bn, F, inv_count, eps,
                              w_ref, x_ref, b_ref, g_ref, bt_ref, o_ref):
    """y_f = W_f(C,K) @ X_f(K,P) + b  for f in 0..F-1 (MXU, f32 accumulate),
    optional pooled training-mode BatchNorm over all F*P columns, (Leaky)ReLU, bf16 store.
    Everything stays in VMEM; one grid step."""
    bias = b_ref[...]                                              # (C, 1) f32
    ys = []
    for f in range(F):                                             # static unroll (F in {1, 4})
        acc = jnp.dot(w_ref[f], x_ref[f], preferred_element_type=jnp.float32)
        ys.append(acc + bias)                                      # (C, P) f32
    if use_bn:
        s = jnp.sum(ys[0], axis=1, keepdims=True)
        q = jnp.sum(ys[0] * ys[0], axis=1, keepdims=True)
        for y in ys[1:]:
            s = s + jnp.sum(y, axis=1, keepdims=True)
            q = q + jnp.sum(y * y, axis=1, keepdims=True)
        mean = s * jnp.float32(inv_count)
        var = jnp.maximum(q * jnp.float32(inv_count) - mean * mean, 0.0)
        scale = g_ref[...] * jax.lax.rsqrt(var + jnp.float32(eps))
        shift = bt_ref[...] - mean * scale
        ys = [y * scale + shift for y in ys]
    ns = jnp.float32(neg_slope)
    for f in range(F):
        y = ys[f]
        y = jnp.where(y >= 0, y, ns * y)
        o_ref[f] = y.astype(o_ref.dtype)


def fused_conv_layer(patches_F, w_F, bias, gamma, beta, *, neg_slope, use_bn, count):
    """patches_F: (F, K, P) bf16, w_F: (F, C, K) bf16 -> (F, C, P) bf16 in a single pallas_call."""
    F, K, P = patches_F.shape
    _, C, _ = w_F.shape
    b = bias.reshape(C, 1).astype(jnp.float32)
    g = gamma.reshape(C, 1).astype(jnp.float32)
    bt = beta.reshape(C, 1).astype(jnp.float32)
    kern = functools.partial(_fused_conv_bn_act_kernel, float(neg_slope), bool(use_bn),
                             int(F), 1.0 / float(count), float(_BN_EPS))
    return pl.pallas_call(
        kern,
        grid=(1,),
        in_specs=[pl.BlockSpec((F, C, K), lambda i: (0, 0, 0)),
                  pl.BlockSpec((F, K, P), lambda i: (0, 0, 0)),
                  pl.BlockSpec((C, 1), lambda i: (0, 0)),
                  pl.BlockSpec((C, 1), lambda i: (0, 0)),
                  pl.BlockSpec((C, 1), lambda i: (0, 0))],
        out_specs=pl.BlockSpec((F, C, P), lambda i: (0, 0, 0)),
        out_shape=jax.ShapeDtypeStruct((F, C, P), jnp.bfloat16),
        compiler_params=_compiler_params(1, parallel=False),
    )(w_F, patches_F, b, g, bt)


# ----------------------------- tiled fallback kernels (large P) -----------------

def _gemm_bias_act_kernel(neg_slope, apply_act, with_stats, p_valid, tile_p,
                          w_ref, x_ref, b_ref, o_ref, *stat_refs):
    # (C, K)bf16 @ (K, TILE_P)bf16 on the MXU, f32 accumulate; fused bias + optional LeakyReLU;
    # optional per-channel sum / sum-of-squares accumulated across the row grid (two-pass BN).
    acc = jnp.dot(w_ref[...], x_ref[...], preferred_element_type=jnp.float32)
    y = acc + b_ref[...]                                            # (C, TILE_P) f32
    if with_stats:
        sum_ref, ssq_ref = stat_refs
        i = pl.program_id(0)
        col = jax.lax.broadcasted_iota(jnp.int32, (1, tile_p), 1) + i * tile_p
        valid = (col < p_valid).astype(jnp.float32)                 # mask padded columns

        @pl.when(i == 0)
        def _():
            sum_ref[...] = jnp.zeros_like(sum_ref)
            ssq_ref[...] = jnp.zeros_like(ssq_ref)

        ym = y * valid
        sum_ref[...] += jnp.sum(ym, axis=1, keepdims=True)
        ssq_ref[...] += jnp.sum(ym * ym, axis=1, keepdims=True)
    if apply_act:
        y = jnp.where(y >= 0, y, jnp.float32(neg_slope) * y)
    o_ref[...] = y.astype(o_ref.dtype)                              # bf16 store


def pallas_conv_gemm(patches_T, w_T, bias, *, neg_slope=0.0, apply_act=False,
                     with_stats=False):
    """y(C, P_pad) = w_T(C, K) @ patches_T(K, P); P tiled & pipelined; bf16 output."""
    K, P = patches_T.shape
    C, K2 = w_T.shape
    assert K == K2
    tile_p = _choose_tile_p(P, K, C)
    p_pad = _round_up(P, tile_p)
    patches_T = patches_T.astype(jnp.bfloat16)           # cast BEFORE pad (no f32 pad pass)
    if p_pad != P:
        patches_T = jnp.pad(patches_T, ((0, 0), (0, p_pad - P)))
    n_tiles = p_pad // tile_p
    w_T = w_T.astype(jnp.bfloat16)
    bias = bias.reshape(C, 1).astype(jnp.float32)

    kern = functools.partial(_gemm_bias_act_kernel, float(neg_slope),
                             bool(apply_act), bool(with_stats), int(P), int(tile_p))
    in_specs = [
        pl.BlockSpec((C, K), lambda i: (0, 0)),           # weights: VMEM-resident
        pl.BlockSpec((K, tile_p), lambda i: (0, i)),      # streamed row tiles
        pl.BlockSpec((C, 1), lambda i: (0, 0)),           # bias: VMEM-resident
    ]
    if with_stats:
        out_shape = (jax.ShapeDtypeStruct((C, p_pad), jnp.bfloat16),
                     jax.ShapeDtypeStruct((C, 1), jnp.float32),
                     jax.ShapeDtypeStruct((C, 1), jnp.float32))
        out_specs = (pl.BlockSpec((C, tile_p), lambda i: (0, i)),
                     pl.BlockSpec((C, 1), lambda i: (0, 0)),    # resident accumulators
                     pl.BlockSpec((C, 1), lambda i: (0, 0)))
        parallel = False
    else:
        out_shape = jax.ShapeDtypeStruct((C, p_pad), jnp.bfloat16)
        out_specs = pl.BlockSpec((C, tile_p), lambda i: (0, i))
        parallel = True

    out = pl.pallas_call(
        kern, grid=(n_tiles,), in_specs=in_specs, out_specs=out_specs, out_shape=out_shape,
        compiler_params=_compiler_params(1, parallel),
    )(w_T, patches_T, bias)

    if with_stats:
        y, s, q = out
        return y, tile_p, s, q
    return out, tile_p


def _scale_shift_act_kernel(neg_slope, x_ref, s_ref, t_ref, o_ref):
    y = x_ref[...].astype(jnp.float32) * s_ref[...] + t_ref[...]
    y = jnp.where(y >= 0, y, jnp.float32(neg_slope) * y)
    o_ref[...] = y.astype(o_ref.dtype)


def pallas_scale_shift_act(y_pad, scale, shift, tile_p, neg_slope=0.0):
    C, p_pad = y_pad.shape
    n_tiles = p_pad // tile_p
    kern = functools.partial(_scale_shift_act_kernel, float(neg_slope))
    return pl.pallas_call(
        kern, grid=(n_tiles,),
        in_specs=[pl.BlockSpec((C, tile_p), lambda i: (0, i)),
                  pl.BlockSpec((C, 1), lambda i: (0, 0)),
                  pl.BlockSpec((C, 1), lambda i: (0, 0))],
        out_specs=pl.BlockSpec((C, tile_p), lambda i: (0, i)),
        out_shape=jax.ShapeDtypeStruct((C, p_pad), jnp.bfloat16),
        compiler_params=_compiler_params(1, parallel=True),
    )(y_pad, scale.reshape(C, 1).astype(jnp.float32),
      shift.reshape(C, 1).astype(jnp.float32))


def _bn_scale_shift(ch_sum, ch_ssq, count, gamma, beta, eps=_BN_EPS):
    mean = ch_sum[:, 0] / count
    var = jnp.maximum(ch_ssq[:, 0] / count - mean * mean, 0.0)
    inv = jax.lax.rsqrt(var + jnp.float32(eps))
    scale = gamma * inv
    shift = beta - mean * scale
    return scale, shift


# ----------------------------- conv glue (plain JAX, bf16) ----------------------
# Internal activation layout is channel-major: (C, N, H, W), bf16.

def _im2col_T(xp, k, stride):
    """xp: (C, N, Hp, Wp) already padded -> (k*k*C, N*Ho*Wo); K ordered (ki, kj, c)."""
    C, N, Hp, Wp = xp.shape
    Ho = (Hp - k) // stride + 1
    Wo = (Wp - k) // stride + 1
    rows = []
    for ki in range(k):
        for kj in range(k):
            sl = xp[:, :, ki:ki + stride * (Ho - 1) + 1:stride,
                          kj:kj + stride * (Wo - 1) + 1:stride]
            rows.append(sl.reshape(C, N * Ho * Wo))
    return jnp.concatenate(rows, axis=0), (N, Ho, Wo)


def _conv_core(xp, w_oihw, bias, bn, neg_slope, k, stride):
    """xp: padded (Cin, N, Hp, Wp) bf16 -> (Cout, N, Ho, Wo) bf16."""
    cout, cin = w_oihw.shape[0], w_oihw.shape[1]
    patches_T, (N, Ho, Wo) = _im2col_T(xp, k, stride)
    P = N * Ho * Wo
    K = k * k * cin
    w_T = jnp.transpose(w_oihw, (0, 2, 3, 1)).reshape(cout, K).astype(jnp.bfloat16)
    b = bias if bias is not None else jnp.zeros((cout,), jnp.float32)
    if bn is None:
        g = jnp.ones((cout,), jnp.float32)
        be = jnp.zeros((cout,), jnp.float32)
        use_bn = False
    else:
        g, be = bn['g'], bn['b']
        use_bn = True

    if _fused_fits(1, K, cout, P):
        y = fused_conv_layer(patches_T[None], w_T[None], b, g, be,
                             neg_slope=neg_slope, use_bn=use_bn, count=P)[0]
        return y.reshape(cout, N, Ho, Wo)

    # Tiled two-pass fallback (only for very large resolutions).
    if not use_bn:
        y_pad, _ = pallas_conv_gemm(patches_T, w_T, b, neg_slope=neg_slope, apply_act=True)
    else:
        y_pad, tile_p, s, q = pallas_conv_gemm(patches_T, w_T, b,
                                               apply_act=False, with_stats=True)
        scale, shift = _bn_scale_shift(s, q, float(P), g, be)
        y_pad = pallas_scale_shift_act(y_pad, scale, shift, tile_p, neg_slope=neg_slope)
    return y_pad[:, :P].reshape(cout, N, Ho, Wo)


def conv_unit(x, conv_p, bn_p, neg_slope, k, stride, refl_pad):
    """ReflectionPad2d(refl_pad) + Conv2d(k, stride, pad=0) [+ BatchNorm] + (Leaky)ReLU."""
    xp = jnp.pad(x, ((0, 0), (0, 0), (refl_pad, refl_pad), (refl_pad, refl_pad)),
                 mode='reflect')
    return _conv_core(xp, conv_p['w'], conv_p['b'], bn_p, neg_slope, k, stride)


def conv_transpose_unit(x, conv_p, bn_p, neg_slope, k=4, stride=2, padding=1):
    """ConvTranspose2d(k=4, s=2, p=1) via sub-pixel decomposition; the 4 phase GEMMs are batched
    into ONE fused pallas_call with BN stats pooled over all phases inside the kernel."""
    assert k == 4 and stride == 2 and padding == 1
    w = conv_p['w']                                               # (Cin, Cout, 4, 4) torch layout
    w_eq = jnp.flip(jnp.transpose(w, (1, 0, 2, 3)), axis=(2, 3))  # (Cout, Cin, 4, 4)
    cin, N, H, W = x.shape
    cout = w_eq.shape[0]
    b = conv_p['b'] if conv_p['b'] is not None else jnp.zeros((cout,), jnp.float32)
    if bn_p is None:
        g = jnp.ones((cout,), jnp.float32)
        be = jnp.zeros((cout,), jnp.float32)
        use_bn = False
    else:
        g, be = bn_p['g'], bn_p['b']
        use_bn = True

    K = 4 * cin
    P = N * H * W
    count = 4 * P                                                 # = N * (2H) * (2W)

    phase_patches, phase_w = [], []
    for rh in (0, 1):
        for rw in (0, 1):
            # output row 2m+rh uses input rows {m-1, m} (rh=0) or {m, m+1} (rh=1)
            pad_h = (1, 0) if rh == 0 else (0, 1)
            pad_w = (1, 0) if rw == 0 else (0, 1)
            w_sub = w_eq[:, :, rh::2, rw::2]                      # (Cout, Cin, 2, 2)
            xp = jnp.pad(x, ((0, 0), (0, 0), pad_h, pad_w))
            patches_T, (_, Ho, Wo) = _im2col_T(xp, 2, 1)          # Ho == H, Wo == W
            phase_patches.append(patches_T)
            phase_w.append(jnp.transpose(w_sub, (0, 2, 3, 1)).reshape(cout, K))
    patches_F = jnp.stack(phase_patches, axis=0).astype(jnp.bfloat16)   # (4, K, P)
    w_F = jnp.stack(phase_w, axis=0).astype(jnp.bfloat16)               # (4, Cout, K)

    if _fused_fits(4, K, cout, P):
        out = fused_conv_layer(patches_F, w_F, b, g, be,
                               neg_slope=neg_slope, use_bn=use_bn, count=count)  # (4,Cout,P) bf16
        imgs = out.reshape(4, cout, N, H, W)
    else:
        # Tiled fallback: 4 calls, BN stats pooled in JAX, then scale-shift per phase.
        ys, tps = [], []
        tot_s = tot_q = None
        for f in range(4):
            if not use_bn:
                y_pad, tp = pallas_conv_gemm(phase_patches[f], w_F[f], b,
                                             neg_slope=neg_slope, apply_act=True)
                ys.append(y_pad[:, :P])
            else:
                y_pad, tp, s, q = pallas_conv_gemm(phase_patches[f], w_F[f], b,
                                                   apply_act=False, with_stats=True)
                ys.append(y_pad)
                tot_s = s if tot_s is None else tot_s + s
                tot_q = q if tot_q is None else tot_q + q
            tps.append(tp)
        if use_bn:
            scale, shift = _bn_scale_shift(tot_s, tot_q, float(count), g, be)
            ys = [pallas_scale_shift_act(y, scale, shift, tp, neg_slope=neg_slope)[:, :P]
                  for y, tp in zip(ys, tps)]
        imgs = jnp.stack(ys, axis=0).reshape(4, cout, N, H, W)

    # interleave phases: output[2h+rh, 2w+rw] = imgs[2*rh+rw][h, w]  (bf16, tiny pass)
    # TODO(synk): write each phase directly into a strided slab via the out index_map instead.
    z = imgs.reshape(2, 2, cout, N, H, W)
    z = jnp.transpose(z, (2, 3, 4, 0, 5, 1))                      # (Cout, N, H, rh, W, rw)
    return z.reshape(cout, N, 2 * H, 2 * W)


# ----------------------------- parameter construction --------------------------

class ParamGen:
    def __init__(self, key):
        self.key = key

    def _next(self):
        self.key, sub = jax.random.split(self.key)
        return sub

    def conv(self, cin, cout, k, bias):
        w = 0.1 * jax.random.normal(self._next(), (cout, cin, k, k), jnp.float32)
        b = 0.1 * jax.random.normal(self._next(), (cout,), jnp.float32) if bias else None
        return {'w': w, 'b': b}

    def convT(self, cin, cout, k, bias):
        w = 0.1 * jax.random.normal(self._next(), (cin, cout, k, k), jnp.float32)
        b = 0.1 * jax.random.normal(self._next(), (cout,), jnp.float32) if bias else None
        return {'w': w, 'b': b}

    def bn(self, c):
        g = 1.0 + 0.1 * jax.random.normal(self._next(), (c,), jnp.float32)
        b = 0.1 * jax.random.normal(self._next(), (c,), jnp.float32)
        return {'g': g, 'b': b}


def build_down_block(pg, cin, cout, middle, use_norm):
    use_bias = not use_norm
    return {
        'conv1': pg.conv(cin, middle, 3, bias=use_bias),
        'bn1': pg.bn(middle) if use_norm else None,
        'conv2': pg.conv(middle, cout, 4, bias=use_bias),
        'bn2': pg.bn(cout) if use_norm else None,
    }


def build_up_block(pg, cin, cout, use_norm):
    use_bias = not use_norm
    return {
        'convt': pg.convT(cin, cout, 4, bias=use_bias),
        'bnt': pg.bn(cout) if use_norm else None,
        'conv': pg.conv(cout, cout, 3, bias=use_bias),
        'bnc': pg.bn(cout) if use_norm else None,
    }


def build_downsampling_net(pg, per_layer_out_ch, in_channels):
    if not per_layer_out_ch:
        return []
    blocks = [build_down_block(pg, in_channels, per_layer_out_ch[0],
                               per_layer_out_ch[0], use_norm=True)]
    for i in range(len(per_layer_out_ch) - 1):
        blocks.append(build_down_block(pg, per_layer_out_ch[i], per_layer_out_ch[i + 1],
                                       per_layer_out_ch[i], use_norm=True))
    return blocks


def build_unet_blocks(pg, nf0, num_down, max_channels):
    blocks = []  # ordered outermost -> innermost
    for i in range(num_down):
        if i == num_down - 1:                       # innermost: no norm
            outer = min(2 ** (num_down - 1) * nf0, max_channels)
            inner = outer
            use_norm = False
            up_in = inner
        else:
            outer = min(2 ** i * nf0, max_channels)
            inner = min(2 ** (i + 1) * nf0, max_channels)
            use_norm = True
            up_in = 2 * inner
        blocks.append({
            'down': build_down_block(pg, outer, inner, outer, use_norm),
            'up': build_up_block(pg, up_in, outer, use_norm),
        })
    return blocks


def build_unet(pg, in_channels, out_channels, nf0, num_down, max_channels):
    return {
        'in_conv': pg.conv(in_channels, nf0, 3, bias=False),
        'in_bn': pg.bn(nf0),
        'blocks': build_unet_blocks(pg, nf0, num_down, max_channels),
        'out_conv': pg.conv(2 * nf0, out_channels, 3, bias=False),
        'out_bn': pg.bn(out_channels),
    }


def num_divisible_by_2(n):
    c = 0
    while n % 2 == 0 and n > 1:
        n //= 2
        c += 1
    return c


def build_feature_extractor(key, nf0, out_channels, input_resolution, output_sidelength):
    pg = ParamGen(key)
    num_down_unet = num_divisible_by_2(output_sidelength)
    num_downsampling = num_divisible_by_2(input_resolution) - num_down_unet
    ds_channels = [nf0 * 2 ** i for i in range(num_downsampling)]
    unet_nf0 = nf0 * 2 ** (num_downsampling - 1) if num_downsampling > 0 else nf0
    unet_in = unet_nf0 if num_downsampling > 0 else 3
    return {
        'downsampling': build_downsampling_net(pg, ds_channels, 3),
        'unet': build_unet(pg, unet_in, out_channels, unet_nf0, num_down_unet, 8 * nf0),
    }


# ----------------------------- forward passes ----------------------------------

def down_block_fwd(x, p):
    x = conv_unit(x, p['conv1'], p['bn1'], 0.2, k=3, stride=1, refl_pad=1)
    x = conv_unit(x, p['conv2'], p['bn2'], 0.2, k=4, stride=2, refl_pad=1)
    return x


def up_block_fwd(x, p):
    x = conv_transpose_unit(x, p['convt'], p['bnt'], 0.0)
    x = conv_unit(x, p['conv'], p['bnc'], 0.0, k=3, stride=1, refl_pad=1)  # Conv2dSame(3)
    return x


def unet_block_fwd(x, blocks, idx):
    p = blocks[idx]
    y = down_block_fwd(x, p['down'])
    if idx + 1 < len(blocks):
        y = unet_block_fwd(y, blocks, idx + 1)
    y = up_block_fwd(y, p['up'])
    return jnp.concatenate([x, y], axis=0)   # channel concat (dim=1 in NCHW == axis 0 here)


def unet_fwd(x, p):
    x = conv_unit(x, p['in_conv'], p['in_bn'], 0.2, k=3, stride=1, refl_pad=1)
    x = unet_block_fwd(x, p['blocks'], 0)
    x = conv_unit(x, p['out_conv'], p['out_bn'], 0.0, k=3, stride=1, refl_pad=1)
    return x


def feature_extractor_fwd(x_nchw, params):
    # Public layout is NCHW like the PyTorch module; internally channel-major (C, N, H, W) bf16
    # so every Pallas GEMM writes a lane-dense (C, P) slab with no per-layer transposes.
    x = jnp.transpose(x_nchw, (1, 0, 2, 3)).astype(jnp.bfloat16)
    for blk in params['downsampling']:
        x = down_block_fwd(x, blk)
    x = unet_fwd(x, params['unet'])
    return jnp.transpose(x, (1, 0, 2, 3)).astype(jnp.float32)


# ----------------------------- main ---------------------------------------------

if __name__ == "__main__":
    NF0, OUT_CH, IN_RES, OUT_SIDE = 4, 4, 16, 4
    key = jax.random.PRNGKey(0)
    k_in, k_par = jax.random.split(key)

    x = jax.random.normal(k_in, (2, 3, IN_RES, IN_RES), jnp.float32)   # NCHW like PyTorch
    params = build_feature_extractor(k_par, NF0, OUT_CH, IN_RES, OUT_SIDE)

    fwd = jax.jit(lambda inp: feature_extractor_fwd(inp, params))
    y = fwd(x)
    jax.block_until_ready(y)

    assert y.shape == (2, OUT_CH, OUT_SIDE, OUT_SIDE), y.shape
    assert bool(jnp.all(jnp.isfinite(y)))
    print("KERNEL_OK")
</pallas_src>

<mosaic_0001>
module attributes {stable_mosaic.version = 11 : i64} {
  func.func @_fused_conv_bn_act_kernel(%arg0: i32, %arg1: memref<1x4x27xbf16, #tpu.memory_space<vmem>>, %arg2: memref<1x27x512xbf16, #tpu.memory_space<vmem>>, %arg3: memref<4x1xf32, #tpu.memory_space<vmem>>, %arg4: memref<4x1xf32, #tpu.memory_space<vmem>>, %arg5: memref<4x1xf32, #tpu.memory_space<vmem>>, %arg6: memref<1x4x512xbf16, #tpu.memory_space<vmem>>) attributes {dimension_semantics = [#tpu.dimension_semantics<arbitrary>], iteration_bounds = array<i64: 1>, scalar_prefetch = 0 : i64, scratch_operands = 0 : i64, tpu.core_type = #tpu.core_type<tc>, window_params = [{pipeline_mode = #tpu.pipeline_mode<synchronous>, transform_indices = @transform_0, window_bounds = array<i64: 1, 4, 27>}, {pipeline_mode = #tpu.pipeline_mode<synchronous>, transform_indices = @transform_1, window_bounds = array<i64: 1, 27, 512>}, {pipeline_mode = #tpu.pipeline_mode<synchronous>, transform_indices = @transform_2, window_bounds = array<i64: 4, 1>}, {pipeline_mode = #tpu.pipeline_mode<synchronous>, transform_indices = @transform_3, window_bounds = array<i64: 4, 1>}, {pipeline_mode = #tpu.pipeline_mode<synchronous>, transform_indices = @transform_4, window_bounds = array<i64: 4, 1>}, {pipeline_mode = #tpu.pipeline_mode<synchronous>, transform_indices = @transform_5, window_bounds = array<i64: 1, 4, 512>}]} {
    %c0 = arith.constant 0 : index
    %c0_0 = arith.constant 0 : index
    %0 = vector.load %arg3[%c0, %c0_0] : memref<4x1xf32, #tpu.memory_space<vmem>>, vector<4x1xf32>
    %c0_1 = arith.constant 0 : index
    %c0_2 = arith.constant 0 : index
    %c0_3 = arith.constant 0 : index
    %1 = vector.load %arg1[%c0_1, %c0_2, %c0_3] : memref<1x4x27xbf16, #tpu.memory_space<vmem>>, vector<1x4x27xbf16>
    %2 = vector.shape_cast %1 : vector<1x4x27xbf16> to vector<4x27xbf16>
    %c0_4 = arith.constant 0 : index
    %c0_5 = arith.constant 0 : index
    %c0_6 = arith.constant 0 : index
    %3 = vector.load %arg2[%c0_4, %c0_5, %c0_6] : memref<1x27x512xbf16, #tpu.memory_space<vmem>>, vector<1x27x512xbf16>
    %4 = vector.shape_cast %3 : vector<1x27x512xbf16> to vector<27x512xbf16>
    %cst = arith.constant dense<0.000000e+00> : vector<4x512xf32>
    %5 = tpu.matmul %2, %4, %cst {dimension_numbers = #tpu.dot_dimension_numbers<[1], [0], [0], [1], [0, 0, 1, 1], [], []>} : vector<4x27xbf16>, vector<27x512xbf16>, vector<4x512xf32> -> vector<4x512xf32>
    %6 = vector.broadcast %0 : vector<4x1xf32> to vector<4x512xf32>
    %7 = arith.addf %5, %6 : vector<4x512xf32>
    %cst_7 = arith.constant dense<0.000000e+00> : vector<4xf32>
    %8 = vector.multi_reduction <add>, %7, %cst_7 [1] : vector<4x512xf32> to vector<4xf32>
    %9 = vector.shape_cast %8 : vector<4xf32> to vector<4x1xf32>
    %10 = arith.mulf %7, %7 : vector<4x512xf32>
    %cst_8 = arith.constant dense<0.000000e+00> : vector<4xf32>
    %11 = vector.multi_reduction <add>, %10, %cst_8 [1] : vector<4x512xf32> to vector<4xf32>
    %12 = vector.shape_cast %11 : vector<4xf32> to vector<4x1xf32>
    %cst_9 = arith.constant 0.001953125 : f32
    %13 = vector.broadcast %cst_9 : f32 to vector<4x1xf32>
    %14 = arith.mulf %9, %13 : vector<4x1xf32>
    %cst_10 = arith.constant 0.001953125 : f32
    %15 = vector.broadcast %cst_10 : f32 to vector<4x1xf32>
    %16 = arith.mulf %12, %15 : vector<4x1xf32>
    %17 = arith.mulf %14, %14 : vector<4x1xf32>
    %18 = arith.subf %16, %17 : vector<4x1xf32>
    %cst_11 = arith.constant 0.000000e+00 : f32
    %19 = vector.broadcast %cst_11 : f32 to vector<4x1xf32>
    %20 = arith.maximumf %18, %19 : vector<4x1xf32>
    %c0_12 = arith.constant 0 : index
    %c0_13 = arith.constant 0 : index
    %21 = vector.load %arg4[%c0_12, %c0_13] : memref<4x1xf32, #tpu.memory_space<vmem>>, vector<4x1xf32>
    %cst_14 = arith.constant 9.99999974E-6 : f32
    %22 = vector.broadcast %cst_14 : f32 to vector<4x1xf32>
    %23 = arith.addf %20, %22 : vector<4x1xf32>
    %24 = math.rsqrt %23 : vector<4x1xf32>
    %25 = arith.mulf %21, %24 : vector<4x1xf32>
    %c0_15 = arith.constant 0 : index
    %c0_16 = arith.constant 0 : index
    %26 = vector.load %arg5[%c0_15, %c0_16] : memref<4x1xf32, #tpu.memory_space<vmem>>, vector<4x1xf32>
    %27 = arith.mulf %14, %25 : vector<4x1xf32>
    %28 = arith.subf %26, %27 : vector<4x1xf32>
    %29 = vector.broadcast %25 : vector<4x1xf32> to vector<4x512xf32>
    %30 = arith.mulf %7, %29 : vector<4x512xf32>
    %31 = vector.broadcast %28 : vector<4x1xf32> to vector<4x512xf32>
    %32 = arith.addf %30, %31 : vector<4x512xf32>
    %cst_17 = arith.constant 0.000000e+00 : f32
    %33 = vector.broadcast %cst_17 : f32 to vector<4x512xf32>
    %34 = arith.cmpf oge, %32, %33 : vector<4x512xf32>
    %cst_18 = arith.constant 2.000000e-01 : f32
    %35 = vector.broadcast %cst_18 : f32 to vector<4x512xf32>
    %36 = arith.mulf %35, %32 : vector<4x512xf32>
    %37 = arith.select %34, %32, %36 : vector<4x512xi1>, vector<4x512xf32>
    %38 = arith.truncf %37 : vector<4x512xf32> to vector<4x512xbf16>
    %c0_19 = arith.constant 0 : index
    %c0_20 = arith.constant 0 : index
    %c0_21 = arith.constant 0 : index
    %39 = vector.load %arg6[%c0_19, %c0_20, %c0_21] : memref<1x4x512xbf16, #tpu.memory_space<vmem>>, vector<1x4x512xbf16>
    %40 = vector.shape_cast %39 : vector<1x4x512xbf16> to vector<4x512xbf16>
    %41 = vector.shape_cast %38 : vector<4x512xbf16> to vector<1x4x512xbf16>
    tpu.vector_store %arg6[%c0_19, %c0_20, %c0_21], %41 {strides = array<i32>} : memref<1x4x512xbf16, #tpu.memory_space<vmem>>, vector<1x4x512xbf16>,
    return
  }
  func.func @transform_0(%arg0: i32) -> (i32, i32, i32) {
    %c0_i32 = arith.constant 0 : i32
    %c0_i32_0 = arith.constant 0 : i32
    %c0_i32_1 = arith.constant 0 : i32
    %c0_i32_2 = arith.constant 0 : i32
    return %c0_i32, %c0_i32_0, %c0_i32_1 : i32, i32, i32
  }
  func.func @transform_1(%arg0: i32) -> (i32, i32, i32) {
    %c0_i32 = arith.constant 0 : i32
    %c0_i32_0 = arith.constant 0 : i32
    %c0_i32_1 = arith.constant 0 : i32
    %c0_i32_2 = arith.constant 0 : i32
    return %c0_i32, %c0_i32_0, %c0_i32_1 : i32, i32, i32
  }
  func.func @transform_2(%arg0: i32) -> (i32, i32) {
    %c0_i32 = arith.constant 0 : i32
    %c0_i32_0 = arith.constant 0 : i32
    %c0_i32_1 = arith.constant 0 : i32
    return %c0_i32, %c0_i32_0 : i32, i32
  }
  func.func @transform_3(%arg0: i32) -> (i32, i32) {
    %c0_i32 = arith.constant 0 : i32
    %c0_i32_0 = arith.constant 0 : i32
    %c0_i32_1 = arith.constant 0 : i32
    return %c0_i32, %c0_i32_0 : i32, i32
  }
  func.func @transform_4(%arg0: i32) -> (i32, i32) {
    %c0_i32 = arith.constant 0 : i32
    %c0_i32_0 = arith.constant 0 : i32
    %c0_i32_1 = arith.constant 0 : i32
    return %c0_i32, %c0_i32_0 : i32, i32
  }
  func.func @transform_5(%arg0: i32) -> (i32, i32, i32) {
    %c0_i32 = arith.constant 0 : i32
    %c0_i32_0 = arith.constant 0 : i32
    %c0_i32_1 = arith.constant 0 : i32
    %c0_i32_2 = arith.constant 0 : i32
    return %c0_i32, %c0_i32_0, %c0_i32_1 : i32, i32, i32
  }
}

module attributes {stable_mosaic.version = 11 : i64} {
  func.func @_fused_conv_bn_act_kernel(%arg0: i32, %arg1: memref<1x4x64xbf16, #tpu.memory_space<vmem>>, %arg2: memref<1x64x128xbf16, #tpu.memory_space<vmem>>, %arg3: memref<4x1xf32, #tpu.memory_space<vmem>>, %arg4: memref<4x1xf32, #tpu.memory_space<vmem>>, %arg5: memref<4x1xf32, #tpu.memory_space<vmem>>, %arg6: memref<1x4x128xbf16, #tpu.memory_space<vmem>>) attributes {dimension_semantics = [#tpu.dimension_semantics<arbitrary>], iteration_bounds = array<i64: 1>, scalar_prefetch = 0 : i64, scratch_operands = 0 : i64, tpu.core_type = #tpu.core_type<tc>, window_params = [{pipeline_mode = #tpu.pipeline_mode<synchronous>, transform_indices = @transform_0, window_bounds = array<i64: 1, 4, 64>}, {pipeline_mode = #tpu.pipeline_mode<synchronous>, transform_indices = @transform_1, window_bounds = array<i64: 1, 64, 128>}, {pipeline_mode = #tpu.pipeline_mode<synchronous>, transform_indices = @transform_2, window_bounds = array<i64: 4, 1>}, {pipeline_mode = #tpu.pipeline_mode<synchronous>, transform_indices = @transform_3, window_bounds = array<i64: 4, 1>}, {pipeline_mode = #tpu.pipeline_mode<synchronous>, transform_indices = @transform_4, window_bounds = array<i64: 4, 1>}, {pipeline_mode = #tpu.pipeline_mode<synchronous>, transform_indices = @transform_5, window_bounds = array<i64: 1, 4, 128>}]} {
    %c0 = arith.constant 0 : index
    %c0_0 = arith.constant 0 : index
    %0 = vector.load %arg3[%c0, %c0_0] : memref<4x1xf32, #tpu.memory_space<vmem>>, vector<4x1xf32>
    %c0_1 = arith.constant 0 : index
    %c0_2 = arith.constant 0 : index
    %c0_3 = arith.constant 0 : index
    %1 = vector.load %arg1[%c0_1, %c0_2, %c0_3] : memref<1x4x64xbf16, #tpu.memory_space<vmem>>, vector<1x4x64xbf16>
    %2 = vector.shape_cast %1 : vector<1x4x64xbf16> to vector<4x64xbf16>
    %c0_4 = arith.constant 0 : index
    %c0_5 = arith.constant 0 : index
    %c0_6 = arith.constant 0 : index
    %3 = vector.load %arg2[%c0_4, %c0_5, %c0_6] : memref<1x64x128xbf16, #tpu.memory_space<vmem>>, vector<1x64x128xbf16>
    %4 = vector.shape_cast %3 : vector<1x64x128xbf16> to vector<64x128xbf16>
    %cst = arith.constant dense<0.000000e+00> : vector<4x128xf32>
    %5 = tpu.matmul %2, %4, %cst {dimension_numbers = #tpu.dot_dimension_numbers<[1], [0], [0], [1], [0, 0, 1, 1], [], []>} : vector<4x64xbf16>, vector<64x128xbf16>, vector<4x128xf32> -> vector<4x128xf32>
    %6 = vector.broadcast %0 : vector<4x1xf32> to vector<4x128xf32>
    %7 = arith.addf %5, %6 : vector<4x128xf32>
    %cst_7 = arith.constant dense<0.000000e+00> : vector<4xf32>
    %8 = vector.multi_reduction <add>, %7, %cst_7 [1] : vector<4x128xf32> to vector<4xf32>
    %9 = vector.shape_cast %8 : vector<4xf32> to vector<4x1xf32>
    %10 = arith.mulf %7, %7 : vector<4x128xf32>
    %cst_8 = arith.constant dense<0.000000e+00> : vector<4xf32>
    %11 = vector.multi_reduction <add>, %10, %cst_8 [1] : vector<4x128xf32> to vector<4xf32>
    %12 = vector.shape_cast %11 : vector<4xf32> to vector<4x1xf32>
    %cst_9 = arith.constant 7.812500e-03 : f32
    %13 = vector.broadcast %cst_9 : f32 to vector<4x1xf32>
    %14 = arith.mulf %9, %13 : vector<4x1xf32>
    %cst_10 = arith.constant 7.812500e-03 : f32
    %15 = vector.broadcast %cst_10 : f32 to vector<4x1xf32>
    %16 = arith.mulf %12, %15 : vector<4x1xf32>
    %17 = arith.mulf %14, %14 : vector<4x1xf32>
    %18 = arith.subf %16, %17 : vector<4x1xf32>
    %cst_11 = arith.constant 0.000000e+00 : f32
    %19 = vector.broadcast %cst_11 : f32 to vector<4x1xf32>
    %20 = arith.maximumf %18, %19 : vector<4x1xf32>
    %c0_12 = arith.constant 0 : index
    %c0_13 = arith.constant 0 : index
    %21 = vector.load %arg4[%c0_12, %c0_13] : memref<4x1xf32, #tpu.memory_space<vmem>>, vector<4x1xf32>
    %cst_14 = arith.constant 9.99999974E-6 : f32
    %22 = vector.broadcast %cst_14 : f32 to vector<4x1xf32>
    %23 = arith.addf %20, %22 : vector<4x1xf32>
    %24 = math.rsqrt %23 : vector<4x1xf32>
    %25 = arith.mulf %21, %24 : vector<4x1xf32>
    %c0_15 = arith.constant 0 : index
    %c0_16 = arith.constant 0 : index
    %26 = vector.load %arg5[%c0_15, %c0_16] : memref<4x1xf32, #tpu.memory_space<vmem>>, vector<4x1xf32>
    %27 = arith.mulf %14, %25 : vector<4x1xf32>
    %28 = arith.subf %26, %27 : vector<4x1xf32>
    %29 = vector.broadcast %25 : vector<4x1xf32> to vector<4x128xf32>
    %30 = arith.mulf %7, %29 : vector<4x128xf32>
    %31 = vector.broadcast %28 : vector<4x1xf32> to vector<4x128xf32>
    %32 = arith.addf %30, %31 : vector<4x128xf32>
    %cst_17 = arith.constant 0.000000e+00 : f32
    %33 = vector.broadcast %cst_17 : f32 to vector<4x128xf32>
    %34 = arith.cmpf oge, %32, %33 : vector<4x128xf32>
    %cst_18 = arith.constant 2.000000e-01 : f32
    %35 = vector.broadcast %cst_18 : f32 to vector<4x128xf32>
    %36 = arith.mulf %35, %32 : vector<4x128xf32>
    %37 = arith.select %34, %32, %36 : vector<4x128xi1>, vector<4x128xf32>
    %38 = arith.truncf %37 : vector<4x128xf32> to vector<4x128xbf16>
    %c0_19 = arith.constant 0 : index
    %c0_20 = arith.constant 0 : index
    %c0_21 = arith.constant 0 : index
    %39 = vector.load %arg6[%c0_19, %c0_20, %c0_21] : memref<1x4x128xbf16, #tpu.memory_space<vmem>>, vector<1x4x128xbf16>
    %40 = vector.shape_cast %39 : vector<1x4x128xbf16> to vector<4x128xbf16>
    %41 = vector.shape_cast %38 : vector<4x128xbf16> to vector<1x4x128xbf16>
    tpu.vector_store %arg6[%c0_19, %c0_20, %c0_21], %41 {strides = array<i32>} : memref<1x4x128xbf16, #tpu.memory_space<vmem>>, vector<1x4x128xbf16>,
    return
  }
  func.func @transform_0(%arg0: i32) -> (i32, i32, i32) {
    %c0_i32 = arith.constant 0 : i32
    %c0_i32_0 = arith.constant 0 : i32
    %c0_i32_1 = arith.constant 0 : i32
    %c0_i32_2 = arith.constant 0 : i32
    return %c0_i32, %c0_i32_0, %c0_i32_1 : i32, i32, i32
  }
  func.func @transform_1(%arg0: i32) -> (i32, i32, i32) {
    %c0_i32 = arith.constant 0 : i32
    %c0_i32_0 = arith.constant 0 : i32
    %c0_i32_1 = arith.constant 0 : i32
    %c0_i32_2 = arith.constant 0 : i32
    return %c0_i32, %c0_i32_0, %c0_i32_1 : i32, i32, i32
  }
  func.func @transform_2(%arg0: i32) -> (i32, i32) {
    %c0_i32 = arith.constant 0 : i32
    %c0_i32_0 = arith.constant 0 : i32
    %c0_i32_1 = arith.constant 0 : i32
    return %c0_i32, %c0_i32_0 : i32, i32
  }
  func.func @transform_3(%arg0: i32) -> (i32, i32) {
    %c0_i32 = arith.constant 0 : i32
    %c0_i32_0 = arith.constant 0 : i32
    %c0_i32_1 = arith.constant 0 : i32
    return %c0_i32, %c0_i32_0 : i32, i32
  }
  func.func @transform_4(%arg0: i32) -> (i32, i32) {
    %c0_i32 = arith.constant 0 : i32
    %c0_i32_0 = arith.constant 0 : i32
    %c0_i32_1 = arith.constant 0 : i32
    return %c0_i32, %c0_i32_0 : i32, i32
  }
  func.func @transform_5(%arg0: i32) -> (i32, i32, i32) {
    %c0_i32 = arith.constant 0 : i32
    %c0_i32_0 = arith.constant 0 : i32
    %c0_i32_1 = arith.constant 0 : i32
    %c0_i32_2 = arith.constant 0 : i32
    return %c0_i32, %c0_i32_0, %c0_i32_1 : i32, i32, i32
  }
}

module attributes {stable_mosaic.version = 11 : i64} {
  func.func @_fused_conv_bn_act_kernel(%arg0: i32, %arg1: memref<1x4x36xbf16, #tpu.memory_space<vmem>>, %arg2: memref<1x36x128xbf16, #tpu.memory_space<vmem>>, %arg3: memref<4x1xf32, #tpu.memory_space<vmem>>, %arg4: memref<4x1xf32, #tpu.memory_space<vmem>>, %arg5: memref<4x1xf32, #tpu.memory_space<vmem>>, %arg6: memref<1x4x128xbf16, #tpu.memory_space<vmem>>) attributes {dimension_semantics = [#tpu.dimension_semantics<arbitrary>], iteration_bounds = array<i64: 1>, scalar_prefetch = 0 : i64, scratch_operands = 0 : i64, tpu.core_type = #tpu.core_type<tc>, window_params = [{pipeline_mode = #tpu.pipeline_mode<synchronous>, transform_indices = @transform_0, window_bounds = array<i64: 1, 4, 36>}, {pipeline_mode = #tpu.pipeline_mode<synchronous>, transform_indices = @transform_1, window_bounds = array<i64: 1, 36, 128>}, {pipeline_mode = #tpu.pipeline_mode<synchronous>, transform_indices = @transform_2, window_bounds = array<i64: 4, 1>}, {pipeline_mode = #tpu.pipeline_mode<synchronous>, transform_indices = @transform_3, window_bounds = array<i64: 4, 1>}, {pipeline_mode = #tpu.pipeline_mode<synchronous>, transform_indices = @transform_4, window_bounds = array<i64: 4, 1>}, {pipeline_mode = #tpu.pipeline_mode<synchronous>, transform_indices = @transform_5, window_bounds = array<i64: 1, 4, 128>}]} {
    %c0 = arith.constant 0 : index
    %c0_0 = arith.constant 0 : index
    %0 = vector.load %arg3[%c0, %c0_0] : memref<4x1xf32, #tpu.memory_space<vmem>>, vector<4x1xf32>
    %c0_1 = arith.constant 0 : index
    %c0_2 = arith.constant 0 : index
    %c0_3 = arith.constant 0 : index
    %1 = vector.load %arg1[%c0_1, %c0_2, %c0_3] : memref<1x4x36xbf16, #tpu.memory_space<vmem>>, vector<1x4x36xbf16>
    %2 = vector.shape_cast %1 : vector<1x4x36xbf16> to vector<4x36xbf16>
    %c0_4 = arith.constant 0 : index
    %c0_5 = arith.constant 0 : index
    %c0_6 = arith.constant 0 : index
    %3 = vector.load %arg2[%c0_4, %c0_5, %c0_6] : memref<1x36x128xbf16, #tpu.memory_space<vmem>>, vector<1x36x128xbf16>
    %4 = vector.shape_cast %3 : vector<1x36x128xbf16> to vector<36x128xbf16>
    %cst = arith.constant dense<0.000000e+00> : vector<4x128xf32>
    %5 = tpu.matmul %2, %4, %cst {dimension_numbers = #tpu.dot_dimension_numbers<[1], [0], [0], [1], [0, 0, 1, 1], [], []>} : vector<4x36xbf16>, vector<36x128xbf16>, vector<4x128xf32> -> vector<4x128xf32>
    %6 = vector.broadcast %0 : vector<4x1xf32> to vector<4x128xf32>
    %7 = arith.addf %5, %6 : vector<4x128xf32>
    %cst_7 = arith.constant dense<0.000000e+00> : vector<4xf32>
    %8 = vector.multi_reduction <add>, %7, %cst_7 [1] : vector<4x128xf32> to vector<4xf32>
    %9 = vector.shape_cast %8 : vector<4xf32> to vector<4x1xf32>
    %10 = arith.mulf %7, %7 : vector<4x128xf32>
    %cst_8 = arith.constant dense<0.000000e+00> : vector<4xf32>
    %11 = vector.multi_reduction <add>, %10, %cst_8 [1] : vector<4x128xf32> to vector<4xf32>
    %12 = vector.shape_cast %11 : vector<4xf32> to vector<4x1xf32>
    %cst_9 = arith.constant 7.812500e-03 : f32
    %13 = vector.broadcast %cst_9 : f32 to vector<4x1xf32>
    %14 = arith.mulf %9, %13 : vector<4x1xf32>
    %cst_10 = arith.constant 7.812500e-03 : f32
    %15 = vector.broadcast %cst_10 : f32 to vector<4x1xf32>
    %16 = arith.mulf %12, %15 : vector<4x1xf32>
    %17 = arith.mulf %14, %14 : vector<4x1xf32>
    %18 = arith.subf %16, %17 : vector<4x1xf32>
    %cst_11 = arith.constant 0.000000e+00 : f32
    %19 = vector.broadcast %cst_11 : f32 to vector<4x1xf32>
    %20 = arith.maximumf %18, %19 : vector<4x1xf32>
    %c0_12 = arith.constant 0 : index
    %c0_13 = arith.constant 0 : index
    %21 = vector.load %arg4[%c0_12, %c0_13] : memref<4x1xf32, #tpu.memory_space<vmem>>, vector<4x1xf32>
    %cst_14 = arith.constant 9.99999974E-6 : f32
    %22 = vector.broadcast %cst_14 : f32 to vector<4x1xf32>
    %23 = arith.addf %20, %22 : vector<4x1xf32>
    %24 = math.rsqrt %23 : vector<4x1xf32>
    %25 = arith.mulf %21, %24 : vector<4x1xf32>
    %c0_15 = arith.constant 0 : index
    %c0_16 = arith.constant 0 : index
    %26 = vector.load %arg5[%c0_15, %c0_16] : memref<4x1xf32, #tpu.memory_space<vmem>>, vector<4x1xf32>
    %27 = arith.mulf %14, %25 : vector<4x1xf32>
    %28 = arith.subf %26, %27 : vector<4x1xf32>
    %29 = vector.broadcast %25 : vector<4x1xf32> to vector<4x128xf32>
    %30 = arith.mulf %7, %29 : vector<4x128xf32>
    %31 = vector.broadcast %28 : vector<4x1xf32> to vector<4x128xf32>
    %32 = arith.addf %30, %31 : vector<4x128xf32>
    %cst_17 = arith.constant 0.000000e+00 : f32
    %33 = vector.broadcast %cst_17 : f32 to vector<4x128xf32>
    %34 = arith.cmpf oge, %32, %33 : vector<4x128xf32>
    %cst_18 = arith.constant 2.000000e-01 : f32
    %35 = vector.broadcast %cst_18 : f32 to vector<4x128xf32>
    %36 = arith.mulf %35, %32 : vector<4x128xf32>
    %37 = arith.select %34, %32, %36 : vector<4x128xi1>, vector<4x128xf32>
    %38 = arith.truncf %37 : vector<4x128xf32> to vector<4x128xbf16>
    %c0_19 = arith.constant 0 : index
    %c0_20 = arith.constant 0 : index
    %c0_21 = arith.constant 0 : index
    %39 = vector.load %arg6[%c0_19, %c0_20, %c0_21] : memref<1x4x128xbf16, #tpu.memory_space<vmem>>, vector<1x4x128xbf16>
    %40 = vector.shape_cast %39 : vector<1x4x128xbf16> to vector<4x128xbf16>
    %41 = vector.shape_cast %38 : vector<4x128xbf16> to vector<1x4x128xbf16>
    tpu.vector_store %arg6[%c0_19, %c0_20, %c0_21], %41 {strides = array<i32>} : memref<1x4x128xbf16, #tpu.memory_space<vmem>>, vector<1x4x128xbf16>,
    return
  }
  func.func @transform_0(%arg0: i32) -> (i32, i32, i32) {
    %c0_i32 = arith.constant 0 : i32
    %c0_i32_0 = arith.constant 0 : i32
    %c0_i32_1 = arith.constant 0 : i32
    %c0_i32_2 = arith.constant 0 : i32
    return %c0_i32, %c0_i32_0, %c0_i32_1 : i32, i32, i32
  }
  func.func @transform_1(%arg0: i32) -> (i32, i32, i32) {
    %c0_i32 = arith.constant 0 : i32
    %c0_i32_0 = arith.constant 0 : i32
    %c0_i32_1 = arith.constant 0 : i32
    %c0_i32_2 = arith.constant 0 : i32
    return %c0_i32, %c0_i32_0, %c0_i32_1 : i32, i32, i32
  }
  func.func @transform_2(%arg0: i32) -> (i32, i32) {
    %c0_i32 = arith.constant 0 : i32
    %c0_i32_0 = arith.constant 0 : i32
    %c0_i32_1 = arith.constant 0 : i32
    return %c0_i32, %c0_i32_0 : i32, i32
  }
  func.func @transform_3(%arg0: i32) -> (i32, i32) {
    %c0_i32 = arith.constant 0 : i32
    %c0_i32_0 = arith.constant 0 : i32
    %c0_i32_1 = arith.constant 0 : i32
    return %c0_i32, %c0_i32_0 : i32, i32
  }
  func.func @transform_4(%arg0: i32) -> (i32, i32) {
    %c0_i32 = arith.constant 0 : i32
    %c0_i32_0 = arith.constant 0 : i32
    %c0_i32_1 = arith.constant 0 : i32
    return %c0_i32, %c0_i32_0 : i32, i32
  }
  func.func @transform_5(%arg0: i32) -> (i32, i32, i32) {
    %c0_i32 = arith.constant 0 : i32
    %c0_i32_0 = arith.constant 0 : i32
    %c0_i32_1 = arith.constant 0 : i32
    %c0_i32_2 = arith.constant 0 : i32
    return %c0_i32, %c0_i32_0, %c0_i32_1 : i32, i32, i32
  }
}

module attributes {stable_mosaic.version = 11 : i64} {
  func.func @_fused_conv_bn_act_kernel(%arg0: i32, %arg1: memref<1x8x64xbf16, #tpu.memory_space<vmem>>, %arg2: memref<1x64x32xbf16, #tpu.memory_space<vmem>>, %arg3: memref<8x1xf32, #tpu.memory_space<vmem>>, %arg4: memref<8x1xf32, #tpu.memory_space<vmem>>, %arg5: memref<8x1xf32, #tpu.memory_space<vmem>>, %arg6: memref<1x8x32xbf16, #tpu.memory_space<vmem>>) attributes {dimension_semantics = [#tpu.dimension_semantics<arbitrary>], iteration_bounds = array<i64: 1>, scalar_prefetch = 0 : i64, scratch_operands = 0 : i64, tpu.core_type = #tpu.core_type<tc>, window_params = [{pipeline_mode = #tpu.pipeline_mode<synchronous>, transform_indices = @transform_0, window_bounds = array<i64: 1, 8, 64>}, {pipeline_mode = #tpu.pipeline_mode<synchronous>, transform_indices = @transform_1, window_bounds = array<i64: 1, 64, 32>}, {pipeline_mode = #tpu.pipeline_mode<synchronous>, transform_indices = @transform_2, window_bounds = array<i64: 8, 1>}, {pipeline_mode = #tpu.pipeline_mode<synchronous>, transform_indices = @transform_3, window_bounds = array<i64: 8, 1>}, {pipeline_mode = #tpu.pipeline_mode<synchronous>, transform_indices = @transform_4, window_bounds = array<i64: 8, 1>}, {pipeline_mode = #tpu.pipeline_mode<synchronous>, transform_indices = @transform_5, window_bounds = array<i64: 1, 8, 32>}]} {
    %c0 = arith.constant 0 : index
    %c0_0 = arith.constant 0 : index
    %0 = vector.load %arg3[%c0, %c0_0] : memref<8x1xf32, #tpu.memory_space<vmem>>, vector<8x1xf32>
    %c0_1 = arith.constant 0 : index
    %c0_2 = arith.constant 0 : index
    %c0_3 = arith.constant 0 : index
    %1 = vector.load %arg1[%c0_1, %c0_2, %c0_3] : memref<1x8x64xbf16, #tpu.memory_space<vmem>>, vector<1x8x64xbf16>
    %2 = vector.shape_cast %1 : vector<1x8x64xbf16> to vector<8x64xbf16>
    %c0_4 = arith.constant 0 : index
    %c0_5 = arith.constant 0 : index
    %c0_6 = arith.constant 0 : index
    %3 = vector.load %arg2[%c0_4, %c0_5, %c0_6] : memref<1x64x32xbf16, #tpu.memory_space<vmem>>, vector<1x64x32xbf16>
    %4 = vector.shape_cast %3 : vector<1x64x32xbf16> to vector<64x32xbf16>
    %cst = arith.constant dense<0.000000e+00> : vector<8x32xf32>
    %5 = tpu.matmul %2, %4, %cst {dimension_numbers = #tpu.dot_dimension_numbers<[1], [0], [0], [1], [0, 0, 1, 1], [], []>} : vector<8x64xbf16>, vector<64x32xbf16>, vector<8x32xf32> -> vector<8x32xf32>
    %6 = vector.broadcast %0 : vector<8x1xf32> to vector<8x32xf32>
    %7 = arith.addf %5, %6 : vector<8x32xf32>
    %cst_7 = arith.constant dense<0.000000e+00> : vector<8xf32>
    %8 = vector.multi_reduction <add>, %7, %cst_7 [1] : vector<8x32xf32> to vector<8xf32>
    %9 = vector.shape_cast %8 : vector<8xf32> to vector<8x1xf32>
    %10 = arith.mulf %7, %7 : vector<8x32xf32>
    %cst_8 = arith.constant dense<0.000000e+00> : vector<8xf32>
    %11 = vector.multi_reduction <add>, %10, %cst_8 [1] : vector<8x32xf32> to vector<8xf32>
    %12 = vector.shape_cast %11 : vector<8xf32> to vector<8x1xf32>
    %cst_9 = arith.constant 3.125000e-02 : f32
    %13 = vector.broadcast %cst_9 : f32 to vector<8x1xf32>
    %14 = arith.mulf %9, %13 : vector<8x1xf32>
    %cst_10 = arith.constant 3.125000e-02 : f32
    %15 = vector.broadcast %cst_10 : f32 to vector<8x1xf32>
    %16 = arith.mulf %12, %15 : vector<8x1xf32>
    %17 = arith.mulf %14, %14 : vector<8x1xf32>
    %18 = arith.subf %16, %17 : vector<8x1xf32>
    %cst_11 = arith.constant 0.000000e+00 : f32
    %19 = vector.broadcast %cst_11 : f32 to vector<8x1xf32>
    %20 = arith.maximumf %18, %19 : vector<8x1xf32>
    %c0_12 = arith.constant 0 : index
    %c0_13 = arith.constant 0 : index
    %21 = vector.load %arg4[%c0_12, %c0_13] : memref<8x1xf32, #tpu.memory_space<vmem>>, vector<8x1xf32>
    %cst_14 = arith.constant 9.99999974E-6 : f32
    %22 = vector.broadcast %cst_14 : f32 to vector<8x1xf32>
    %23 = arith.addf %20, %22 : vector<8x1xf32>
    %24 = math.rsqrt %23 : vector<8x1xf32>
    %25 = arith.mulf %21, %24 : vector<8x1xf32>
    %c0_15 = arith.constant 0 : index
    %c0_16 = arith.constant 0 : index
    %26 = vector.load %arg5[%c0_15, %c0_16] : memref<8x1xf32, #tpu.memory_space<vmem>>, vector<8x1xf32>
    %27 = arith.mulf %14, %25 : vector<8x1xf32>
    %28 = arith.subf %26, %27 : vector<8x1xf32>
    %29 = vector.broadcast %25 : vector<8x1xf32> to vector<8x32xf32>
    %30 = arith.mulf %7, %29 : vector<8x32xf32>
    %31 = vector.broadcast %28 : vector<8x1xf32> to vector<8x32xf32>
    %32 = arith.addf %30, %31 : vector<8x32xf32>
    %cst_17 = arith.constant 0.000000e+00 : f32
    %33 = vector.broadcast %cst_17 : f32 to vector<8x32xf32>
    %34 = arith.cmpf oge, %32, %33 : vector<8x32xf32>
    %cst_18 = arith.constant 2.000000e-01 : f32
    %35 = vector.broadcast %cst_18 : f32 to vector<8x32xf32>
    %36 = arith.mulf %35, %32 : vector<8x32xf32>
    %37 = arith.select %34, %32, %36 : vector<8x32xi1>, vector<8x32xf32>
    %38 = arith.truncf %37 : vector<8x32xf32> to vector<8x32xbf16>
    %c0_19 = arith.constant 0 : index
    %c0_20 = arith.constant 0 : index
    %c0_21 = arith.constant 0 : index
    %39 = vector.load %arg6[%c0_19, %c0_20, %c0_21] : memref<1x8x32xbf16, #tpu.memory_space<vmem>>, vector<1x8x32xbf16>
    %40 = vector.shape_cast %39 : vector<1x8x32xbf16> to vector<8x32xbf16>
    %41 = vector.shape_cast %38 : vector<8x32xbf16> to vector<1x8x32xbf16>
    tpu.vector_store %arg6[%c0_19, %c0_20, %c0_21], %41 {strides = array<i32>} : memref<1x8x32xbf16, #tpu.memory_space<vmem>>, vector<1x8x32xbf16>,
    return
  }
  func.func @transform_0(%arg0: i32) -> (i32, i32, i32) {
    %c0_i32 = arith.constant 0 : i32
    %c0_i32_0 = arith.constant 0 : i32
    %c0_i32_1 = arith.constant 0 : i32
    %c0_i32_2 = arith.constant 0 : i32
    return %c0_i32, %c0_i32_0, %c0_i32_1 : i32, i32, i32
  }
  func.func @transform_1(%arg0: i32) -> (i32, i32, i32) {
    %c0_i32 = arith.constant 0 : i32
    %c0_i32_0 = arith.constant 0 : i32
    %c0_i32_1 = arith.constant 0 : i32
    %c0_i32_2 = arith.constant 0 : i32
    return %c0_i32, %c0_i32_0, %c0_i32_1 : i32, i32, i32
  }
  func.func @transform_2(%arg0: i32) -> (i32, i32) {
    %c0_i32 = arith.constant 0 : i32
    %c0_i32_0 = arith.constant 0 : i32
    %c0_i32_1 = arith.constant 0 : i32
    return %c0_i32, %c0_i32_0 : i32, i32
  }
  func.func @transform_3(%arg0: i32) -> (i32, i32) {
    %c0_i32 = arith.constant 0 : i32
    %c0_i32_0 = arith.constant 0 : i32
    %c0_i32_1 = arith.constant 0 : i32
    return %c0_i32, %c0_i32_0 : i32, i32
  }
  func.func @transform_4(%arg0: i32) -> (i32, i32) {
    %c0_i32 = arith.constant 0 : i32
    %c0_i32_0 = arith.constant 0 : i32
    %c0_i32_1 = arith.constant 0 : i32
    return %c0_i32, %c0_i32_0 : i32, i32
  }
  func.func @transform_5(%arg0: i32) -> (i32, i32, i32) {
    %c0_i32 = arith.constant 0 : i32
    %c0_i32_0 = arith.constant 0 : i32
    %c0_i32_1 = arith.constant 0 : i32
    %c0_i32_2 = arith.constant 0 : i32
    return %c0_i32, %c0_i32_0, %c0_i32_1 : i32, i32, i32
  }
}

module attributes {stable_mosaic.version = 11 : i64} {
  func.func @_fused_conv_bn_act_kernel(%arg0: i32, %arg1: memref<1x8x72xbf16, #tpu.memory_space<vmem>>, %arg2: memref<1x72x32xbf16, #tpu.memory_space<vmem>>, %arg3: memref<8x1xf32, #tpu.memory_space<vmem>>, %arg4: memref<8x1xf32, #tpu.memory_space<vmem>>, %arg5: memref<8x1xf32, #tpu.memory_space<vmem>>, %arg6: memref<1x8x32xbf16, #tpu.memory_space<vmem>>) attributes {dimension_semantics = [#tpu.dimension_semantics<arbitrary>], iteration_bounds = array<i64: 1>, scalar_prefetch = 0 : i64, scratch_operands = 0 : i64, tpu.core_type = #tpu.core_type<tc>, window_params = [{pipeline_mode = #tpu.pipeline_mode<synchronous>, transform_indices = @transform_0, window_bounds = array<i64: 1, 8, 72>}, {pipeline_mode = #tpu.pipeline_mode<synchronous>, transform_indices = @transform_1, window_bounds = array<i64: 1, 72, 32>}, {pipeline_mode = #tpu.pipeline_mode<synchronous>, transform_indices = @transform_2, window_bounds = array<i64: 8, 1>}, {pipeline_mode = #tpu.pipeline_mode<synchronous>, transform_indices = @transform_3, window_bounds = array<i64: 8, 1>}, {pipeline_mode = #tpu.pipeline_mode<synchronous>, transform_indices = @transform_4, window_bounds = array<i64: 8, 1>}, {pipeline_mode = #tpu.pipeline_mode<synchronous>, transform_indices = @transform_5, window_bounds = array<i64: 1, 8, 32>}]} {
    %c0 = arith.constant 0 : index
    %c0_0 = arith.constant 0 : index
    %0 = vector.load %arg3[%c0, %c0_0] : memref<8x1xf32, #tpu.memory_space<vmem>>, vector<8x1xf32>
    %c0_1 = arith.constant 0 : index
    %c0_2 = arith.constant 0 : index
    %c0_3 = arith.constant 0 : index
    %1 = vector.load %arg1[%c0_1, %c0_2, %c0_3] : memref<1x8x72xbf16, #tpu.memory_space<vmem>>, vector<1x8x72xbf16>
    %2 = vector.shape_cast %1 : vector<1x8x72xbf16> to vector<8x72xbf16>
    %c0_4 = arith.constant 0 : index
    %c0_5 = arith.constant 0 : index
    %c0_6 = arith.constant 0 : index
    %3 = vector.load %arg2[%c0_4, %c0_5, %c0_6] : memref<1x72x32xbf16, #tpu.memory_space<vmem>>, vector<1x72x32xbf16>
    %4 = vector.shape_cast %3 : vector<1x72x32xbf16> to vector<72x32xbf16>
    %cst = arith.constant dense<0.000000e+00> : vector<8x32xf32>
    %5 = tpu.matmul %2, %4, %cst {dimension_numbers = #tpu.dot_dimension_numbers<[1], [0], [0], [1], [0, 0, 1, 1], [], []>} : vector<8x72xbf16>, vector<72x32xbf16>, vector<8x32xf32> -> vector<8x32xf32>
    %6 = vector.broadcast %0 : vector<8x1xf32> to vector<8x32xf32>
    %7 = arith.addf %5, %6 : vector<8x32xf32>
    %cst_7 = arith.constant dense<0.000000e+00> : vector<8xf32>
    %8 = vector.multi_reduction <add>, %7, %cst_7 [1] : vector<8x32xf32> to vector<8xf32>
    %9 = vector.shape_cast %8 : vector<8xf32> to vector<8x1xf32>
    %10 = arith.mulf %7, %7 : vector<8x32xf32>
    %cst_8 = arith.constant dense<0.000000e+00> : vector<8xf32>
    %11 = vector.multi_reduction <add>, %10, %cst_8 [1] : vector<8x32xf32> to vector<8xf32>
    %12 = vector.shape_cast %11 : vector<8xf32> to vector<8x1xf32>
    %cst_9 = arith.constant 3.125000e-02 : f32
    %13 = vector.broadcast %cst_9 : f32 to vector<8x1xf32>
    %14 = arith.mulf %9, %13 : vector<8x1xf32>
    %cst_10 = arith.constant 3.125000e-02 : f32
    %15 = vector.broadcast %cst_10 : f32 to vector<8x1xf32>
    %16 = arith.mulf %12, %15 : vector<8x1xf32>
    %17 = arith.mulf %14, %14 : vector<8x1xf32>
    %18 = arith.subf %16, %17 : vector<8x1xf32>
    %cst_11 = arith.constant 0.000000e+00 : f32
    %19 = vector.broadcast %cst_11 : f32 to vector<8x1xf32>
    %20 = arith.maximumf %18, %19 : vector<8x1xf32>
    %c0_12 = arith.constant 0 : index
    %c0_13 = arith.constant 0 : index
    %21 = vector.load %arg4[%c0_12, %c0_13] : memref<8x1xf32, #tpu.memory_space<vmem>>, vector<8x1xf32>
    %cst_14 = arith.constant 9.99999974E-6 : f32
    %22 = vector.broadcast %cst_14 : f32 to vector<8x1xf32>
    %23 = arith.addf %20, %22 : vector<8x1xf32>
    %24 = math.rsqrt %23 : vector<8x1xf32>
    %25 = arith.mulf %21, %24 : vector<8x1xf32>
    %c0_15 = arith.constant 0 : index
    %c0_16 = arith.constant 0 : index
    %26 = vector.load %arg5[%c0_15, %c0_16] : memref<8x1xf32, #tpu.memory_space<vmem>>, vector<8x1xf32>
    %27 = arith.mulf %14, %25 : vector<8x1xf32>
    %28 = arith.subf %26, %27 : vector<8x1xf32>
    %29 = vector.broadcast %25 : vector<8x1xf32> to vector<8x32xf32>
    %30 = arith.mulf %7, %29 : vector<8x32xf32>
    %31 = vector.broadcast %28 : vector<8x1xf32> to vector<8x32xf32>
    %32 = arith.addf %30, %31 : vector<8x32xf32>
    %cst_17 = arith.constant 0.000000e+00 : f32
    %33 = vector.broadcast %cst_17 : f32 to vector<8x32xf32>
    %34 = arith.cmpf oge, %32, %33 : vector<8x32xf32>
    %cst_18 = arith.constant 2.000000e-01 : f32
    %35 = vector.broadcast %cst_18 : f32 to vector<8x32xf32>
    %36 = arith.mulf %35, %32 : vector<8x32xf32>
    %37 = arith.select %34, %32, %36 : vector<8x32xi1>, vector<8x32xf32>
    %38 = arith.truncf %37 : vector<8x32xf32> to vector<8x32xbf16>
    %c0_19 = arith.constant 0 : index
    %c0_20 = arith.constant 0 : index
    %c0_21 = arith.constant 0 : index
    %39 = vector.load %arg6[%c0_19, %c0_20, %c0_21] : memref<1x8x32xbf16, #tpu.memory_space<vmem>>, vector<1x8x32xbf16>
    %40 = vector.shape_cast %39 : vector<1x8x32xbf16> to vector<8x32xbf16>
    %41 = vector.shape_cast %38 : vector<8x32xbf16> to vector<1x8x32xbf16>
    tpu.vector_store %arg6[%c0_19, %c0_20, %c0_21], %41 {strides = array<i32>} : memref<1x8x32xbf16, #tpu.memory_space<vmem>>, vector<1x8x32xbf16>,
    return
  }
  func.func @transform_0(%arg0: i32) -> (i32, i32, i32) {
    %c0_i32 = arith.constant 0 : i32
    %c0_i32_0 = arith.constant 0 : i32
    %c0_i32_1 = arith.constant 0 : i32
    %c0_i32_2 = arith.constant 0 : i32
    return %c0_i32, %c0_i32_0, %c0_i32_1 : i32, i32, i32
  }
  func.func @transform_1(%arg0: i32) -> (i32, i32, i32) {
    %c0_i32 = arith.constant 0 : i32
    %c0_i32_0 = arith.constant 0 : i32
    %c0_i32_1 = arith.constant 0 : i32
    %c0_i32_2 = arith.constant 0 : i32
    return %c0_i32, %c0_i32_0, %c0_i32_1 : i32, i32, i32
  }
  func.func @transform_2(%arg0: i32) -> (i32, i32) {
    %c0_i32 = arith.constant 0 : i32
    %c0_i32_0 = arith.constant 0 : i32
    %c0_i32_1 = arith.constant 0 : i32
    return %c0_i32, %c0_i32_0 : i32, i32
  }
  func.func @transform_3(%arg0: i32) -> (i32, i32) {
    %c0_i32 = arith.constant 0 : i32
    %c0_i32_0 = arith.constant 0 : i32
    %c0_i32_1 = arith.constant 0 : i32
    return %c0_i32, %c0_i32_0 : i32, i32
  }
  func.func @transform_4(%arg0: i32) -> (i32, i32) {
    %c0_i32 = arith.constant 0 : i32
    %c0_i32_0 = arith.constant 0 : i32
    %c0_i32_1 = arith.constant 0 : i32
    return %c0_i32, %c0_i32_0 : i32, i32
  }
  func.func @transform_5(%arg0: i32) -> (i32, i32, i32) {
    %c0_i32 = arith.constant 0 : i32
    %c0_i32_0 = arith.constant 0 : i32
    %c0_i32_1 = arith.constant 0 : i32
    %c0_i32_2 = arith.constant 0 : i32
    return %c0_i32, %c0_i32_0, %c0_i32_1 : i32, i32, i32
  }
}

module attributes {stable_mosaic.version = 11 : i64} {
  func.func @_fused_conv_bn_act_kernel(%arg0: i32, %arg1: memref<1x16x128xbf16, #tpu.memory_space<vmem>>, %arg2: memref<1x128x8xbf16, #tpu.memory_space<vmem>>, %arg3: memref<16x1xf32, #tpu.memory_space<vmem>>, %arg4: memref<16x1xf32, #tpu.memory_space<vmem>>, %arg5: memref<16x1xf32, #tpu.memory_space<vmem>>, %arg6: memref<1x16x8xbf16, #tpu.memory_space<vmem>>) attributes {dimension_semantics = [#tpu.dimension_semantics<arbitrary>], iteration_bounds = array<i64: 1>, scalar_prefetch = 0 : i64, scratch_operands = 0 : i64, tpu.core_type = #tpu.core_type<tc>, window_params = [{pipeline_mode = #tpu.pipeline_mode<synchronous>, transform_indices = @transform_0, window_bounds = array<i64: 1, 16, 128>}, {pipeline_mode = #tpu.pipeline_mode<synchronous>, transform_indices = @transform_1, window_bounds = array<i64: 1, 128, 8>}, {pipeline_mode = #tpu.pipeline_mode<synchronous>, transform_indices = @transform_2, window_bounds = array<i64: 16, 1>}, {pipeline_mode = #tpu.pipeline_mode<synchronous>, transform_indices = @transform_3, window_bounds = array<i64: 16, 1>}, {pipeline_mode = #tpu.pipeline_mode<synchronous>, transform_indices = @transform_4, window_bounds = array<i64: 16, 1>}, {pipeline_mode = #tpu.pipeline_mode<synchronous>, transform_indices = @transform_5, window_bounds = array<i64: 1, 16, 8>}]} {
    %c0 = arith.constant 0 : index
    %c0_0 = arith.constant 0 : index
    %0 = vector.load %arg3[%c0, %c0_0] : memref<16x1xf32, #tpu.memory_space<vmem>>, vector<16x1xf32>
    %c0_1 = arith.constant 0 : index
    %c0_2 = arith.constant 0 : index
    %c0_3 = arith.constant 0 : index
    %1 = vector.load %arg1[%c0_1, %c0_2, %c0_3] : memref<1x16x128xbf16, #tpu.memory_space<vmem>>, vector<1x16x128xbf16>
    %2 = vector.shape_cast %1 : vector<1x16x128xbf16> to vector<16x128xbf16>
    %c0_4 = arith.constant 0 : index
    %c0_5 = arith.constant 0 : index
    %c0_6 = arith.constant 0 : index
    %3 = vector.load %arg2[%c0_4, %c0_5, %c0_6] : memref<1x128x8xbf16, #tpu.memory_space<vmem>>, vector<1x128x8xbf16>
    %4 = vector.shape_cast %3 : vector<1x128x8xbf16> to vector<128x8xbf16>
    %cst = arith.constant dense<0.000000e+00> : vector<16x8xf32>
    %5 = tpu.matmul %2, %4, %cst {dimension_numbers = #tpu.dot_dimension_numbers<[1], [0], [0], [1], [0, 0, 1, 1], [], []>} : vector<16x128xbf16>, vector<128x8xbf16>, vector<16x8xf32> -> vector<16x8xf32>
    %6 = vector.broadcast %0 : vector<16x1xf32> to vector<16x8xf32>
    %7 = arith.addf %5, %6 : vector<16x8xf32>
    %cst_7 = arith.constant dense<0.000000e+00> : vector<16xf32>
    %8 = vector.multi_reduction <add>, %7, %cst_7 [1] : vector<16x8xf32> to vector<16xf32>
    %9 = vector.shape_cast %8 : vector<16xf32> to vector<16x1xf32>
    %10 = arith.mulf %7, %7 : vector<16x8xf32>
    %cst_8 = arith.constant dense<0.000000e+00> : vector<16xf32>
    %11 = vector.multi_reduction <add>, %10, %cst_8 [1] : vector<16x8xf32> to vector<16xf32>
    %12 = vector.shape_cast %11 : vector<16xf32> to vector<16x1xf32>
    %cst_9 = arith.constant 1.250000e-01 : f32
    %13 = vector.broadcast %cst_9 : f32 to vector<16x1xf32>
    %14 = arith.mulf %9, %13 : vector<16x1xf32>
    %cst_10 = arith.constant 1.250000e-01 : f32
    %15 = vector.broadcast %cst_10 : f32 to vector<16x1xf32>
    %16 = arith.mulf %12, %15 : vector<16x1xf32>
    %17 = arith.mulf %14, %14 : vector<16x1xf32>
    %18 = arith.subf %16, %17 : vector<16x1xf32>
    %cst_11 = arith.constant 0.000000e+00 : f32
    %19 = vector.broadcast %cst_11 : f32 to vector<16x1xf32>
    %20 = arith.maximumf %18, %19 : vector<16x1xf32>
    %c0_12 = arith.constant 0 : index
    %c0_13 = arith.constant 0 : index
    %21 = vector.load %arg4[%c0_12, %c0_13] : memref<16x1xf32, #tpu.memory_space<vmem>>, vector<16x1xf32>
    %cst_14 = arith.constant 9.99999974E-6 : f32
    %22 = vector.broadcast %cst_14 : f32 to vector<16x1xf32>
    %23 = arith.addf %20, %22 : vector<16x1xf32>
    %24 = math.rsqrt %23 : vector<16x1xf32>
    %25 = arith.mulf %21, %24 : vector<16x1xf32>
    %c0_15 = arith.constant 0 : index
    %c0_16 = arith.constant 0 : index
    %26 = vector.load %arg5[%c0_15, %c0_16] : memref<16x1xf32, #tpu.memory_space<vmem>>, vector<16x1xf32>
    %27 = arith.mulf %14, %25 : vector<16x1xf32>
    %28 = arith.subf %26, %27 : vector<16x1xf32>
    %29 = vector.broadcast %25 : vector<16x1xf32> to vector<16x8xf32>
    %30 = arith.mulf %7, %29 : vector<16x8xf32>
    %31 = vector.broadcast %28 : vector<16x1xf32> to vector<16x8xf32>
    %32 = arith.addf %30, %31 : vector<16x8xf32>
    %cst_17 = arith.constant 0.000000e+00 : f32
    %33 = vector.broadcast %cst_17 : f32 to vector<16x8xf32>
    %34 = arith.cmpf oge, %32, %33 : vector<16x8xf32>
    %cst_18 = arith.constant 2.000000e-01 : f32
    %35 = vector.broadcast %cst_18 : f32 to vector<16x8xf32>
    %36 = arith.mulf %35, %32 : vector<16x8xf32>
    %37 = arith.select %34, %32, %36 : vector<16x8xi1>, vector<16x8xf32>
    %38 = arith.truncf %37 : vector<16x8xf32> to vector<16x8xbf16>
    %c0_19 = arith.constant 0 : index
    %c0_20 = arith.constant 0 : index
    %c0_21 = arith.constant 0 : index
    %39 = vector.load %arg6[%c0_19, %c0_20, %c0_21] : memref<1x16x8xbf16, #tpu.memory_space<vmem>>, vector<1x16x8xbf16>
    %40 = vector.shape_cast %39 : vector<1x16x8xbf16> to vector<16x8xbf16>
    %41 = vector.shape_cast %38 : vector<16x8xbf16> to vector<1x16x8xbf16>
    tpu.vector_store %arg6[%c0_19, %c0_20, %c0_21], %41 {strides = array<i32>} : memref<1x16x8xbf16, #tpu.memory_space<vmem>>, vector<1x16x8xbf16>,
    return
  }
  func.func @transform_0(%arg0: i32) -> (i32, i32, i32) {
    %c0_i32 = arith.constant 0 : i32
    %c0_i32_0 = arith.constant 0 : i32
    %c0_i32_1 = arith.constant 0 : i32
    %c0_i32_2 = arith.constant 0 : i32
    return %c0_i32, %c0_i32_0, %c0_i32_1 : i32, i32, i32
  }
  func.func @transform_1(%arg0: i32) -> (i32, i32, i32) {
    %c0_i32 = arith.constant 0 : i32
    %c0_i32_0 = arith.constant 0 : i32
    %c0_i32_1 = arith.constant 0 : i32
    %c0_i32_2 = arith.constant 0 : i32
    return %c0_i32, %c0_i32_0, %c0_i32_1 : i32, i32, i32
  }
  func.func @transform_2(%arg0: i32) -> (i32, i32) {
    %c0_i32 = arith.constant 0 : i32
    %c0_i32_0 = arith.constant 0 : i32
    %c0_i32_1 = arith.constant 0 : i32
    return %c0_i32, %c0_i32_0 : i32, i32
  }
  func.func @transform_3(%arg0: i32) -> (i32, i32) {
    %c0_i32 = arith.constant 0 : i32
    %c0_i32_0 = arith.constant 0 : i32
    %c0_i32_1 = arith.constant 0 : i32
    return %c0_i32, %c0_i32_0 : i32, i32
  }
  func.func @transform_4(%arg0: i32) -> (i32, i32) {
    %c0_i32 = arith.constant 0 : i32
    %c0_i32_0 = arith.constant 0 : i32
    %c0_i32_1 = arith.constant 0 : i32
    return %c0_i32, %c0_i32_0 : i32, i32
  }
  func.func @transform_5(%arg0: i32) -> (i32, i32, i32) {
    %c0_i32 = arith.constant 0 : i32
    %c0_i32_0 = arith.constant 0 : i32
    %c0_i32_1 = arith.constant 0 : i32
    %c0_i32_2 = arith.constant 0 : i32
    return %c0_i32, %c0_i32_0, %c0_i32_1 : i32, i32, i32
  }
}

module attributes {stable_mosaic.version = 11 : i64} {
  func.func @_fused_conv_bn_act_kernel(%arg0: i32, %arg1: memref<1x16x144xbf16, #tpu.memory_space<vmem>>, %arg2: memref<1x144x8xbf16, #tpu.memory_space<vmem>>, %arg3: memref<16x1xf32, #tpu.memory_space<vmem>>, %arg4: memref<16x1xf32, #tpu.memory_space<vmem>>, %arg5: memref<16x1xf32, #tpu.memory_space<vmem>>, %arg6: memref<1x16x8xbf16, #tpu.memory_space<vmem>>) attributes {dimension_semantics = [#tpu.dimension_semantics<arbitrary>], iteration_bounds = array<i64: 1>, scalar_prefetch = 0 : i64, scratch_operands = 0 : i64, tpu.core_type = #tpu.core_type<tc>, window_params = [{pipeline_mode = #tpu.pipeline_mode<synchronous>, transform_indices = @transform_0, window_bounds = array<i64: 1, 16, 144>}, {pipeline_mode = #tpu.pipeline_mode<synchronous>, transform_indices = @transform_1, window_bounds = array<i64: 1, 144, 8>}, {pipeline_mode = #tpu.pipeline_mode<synchronous>, transform_indices = @transform_2, window_bounds = array<i64: 16, 1>}, {pipeline_mode = #tpu.pipeline_mode<synchronous>, transform_indices = @transform_3, window_bounds = array<i64: 16, 1>}, {pipeline_mode = #tpu.pipeline_mode<synchronous>, transform_indices = @transform_4, window_bounds = array<i64: 16, 1>}, {pipeline_mode = #tpu.pipeline_mode<synchronous>, transform_indices = @transform_5, window_bounds = array<i64: 1, 16, 8>}]} {
    %c0 = arith.constant 0 : index
    %c0_0 = arith.constant 0 : index
    %0 = vector.load %arg3[%c0, %c0_0] : memref<16x1xf32, #tpu.memory_space<vmem>>, vector<16x1xf32>
    %c0_1 = arith.constant 0 : index
    %c0_2 = arith.constant 0 : index
    %c0_3 = arith.constant 0 : index
    %1 = vector.load %arg1[%c0_1, %c0_2, %c0_3] : memref<1x16x144xbf16, #tpu.memory_space<vmem>>, vector<1x16x144xbf16>
    %2 = vector.shape_cast %1 : vector<1x16x144xbf16> to vector<16x144xbf16>
    %c0_4 = arith.constant 0 : index
    %c0_5 = arith.constant 0 : index
    %c0_6 = arith.constant 0 : index
    %3 = vector.load %arg2[%c0_4, %c0_5, %c0_6] : memref<1x144x8xbf16, #tpu.memory_space<vmem>>, vector<1x144x8xbf16>
    %4 = vector.shape_cast %3 : vector<1x144x8xbf16> to vector<144x8xbf16>
    %cst = arith.constant dense<0.000000e+00> : vector<16x8xf32>
    %5 = tpu.matmul %2, %4, %cst {dimension_numbers = #tpu.dot_dimension_numbers<[1], [0], [0], [1], [0, 0, 1, 1], [], []>} : vector<16x144xbf16>, vector<144x8xbf16>, vector<16x8xf32> -> vector<16x8xf32>
    %6 = vector.broadcast %0 : vector<16x1xf32> to vector<16x8xf32>
    %7 = arith.addf %5, %6 : vector<16x8xf32>
    %cst_7 = arith.constant 0.000000e+00 : f32
    %8 = vector.broadcast %cst_7 : f32 to vector<16x8xf32>
    %9 = arith.cmpf oge, %7, %8 : vector<16x8xf32>
    %cst_8 = arith.constant 2.000000e-01 : f32
    %10 = vector.broadcast %cst_8 : f32 to vector<16x8xf32>
    %11 = arith.mulf %10, %7 : vector<16x8xf32>
    %12 = arith.select %9, %7, %11 : vector<16x8xi1>, vector<16x8xf32>
    %13 = arith.truncf %12 : vector<16x8xf32> to vector<16x8xbf16>
    %c0_9 = arith.constant 0 : index
    %c0_10 = arith.constant 0 : index
    %c0_11 = arith.constant 0 : index
    %14 = vector.load %arg6[%c0_9, %c0_10, %c0_11] : memref<1x16x8xbf16, #tpu.memory_space<vmem>>, vector<1x16x8xbf16>
    %15 = vector.shape_cast %14 : vector<1x16x8xbf16> to vector<16x8xbf16>
    %16 = vector.shape_cast %13 : vector<16x8xbf16> to vector<1x16x8xbf16>
    tpu.vector_store %arg6[%c0_9, %c0_10, %c0_11], %16 {strides = array<i32>} : memref<1x16x8xbf16, #tpu.memory_space<vmem>>, vector<1x16x8xbf16>,
    return
  }
  func.func @transform_0(%arg0: i32) -> (i32, i32, i32) {
    %c0_i32 = arith.constant 0 : i32
    %c0_i32_0 = arith.constant 0 : i32
    %c0_i32_1 = arith.constant 0 : i32
    %c0_i32_2 = arith.constant 0 : i32
    return %c0_i32, %c0_i32_0, %c0_i32_1 : i32, i32, i32
  }
  func.func @transform_1(%arg0: i32) -> (i32, i32, i32) {
    %c0_i32 = arith.constant 0 : i32
    %c0_i32_0 = arith.constant 0 : i32
    %c0_i32_1 = arith.constant 0 : i32
    %c0_i32_2 = arith.constant 0 : i32
    return %c0_i32, %c0_i32_0, %c0_i32_1 : i32, i32, i32
  }
  func.func @transform_2(%arg0: i32) -> (i32, i32) {
    %c0_i32 = arith.constant 0 : i32
    %c0_i32_0 = arith.constant 0 : i32
    %c0_i32_1 = arith.constant 0 : i32
    return %c0_i32, %c0_i32_0 : i32, i32
  }
  func.func @transform_3(%arg0: i32) -> (i32, i32) {
    %c0_i32 = arith.constant 0 : i32
    %c0_i32_0 = arith.constant 0 : i32
    %c0_i32_1 = arith.constant 0 : i32
    return %c0_i32, %c0_i32_0 : i32, i32
  }
  func.func @transform_4(%arg0: i32) -> (i32, i32) {
    %c0_i32 = arith.constant 0 : i32
    %c0_i32_0 = arith.constant 0 : i32
    %c0_i32_1 = arith.constant 0 : i32
    return %c0_i32, %c0_i32_0 : i32, i32
  }
  func.func @transform_5(%arg0: i32) -> (i32, i32, i32) {
    %c0_i32 = arith.constant 0 : i32
    %c0_i32_0 = arith.constant 0 : i32
    %c0_i32_1 = arith.constant 0 : i32
    %c0_i32_2 = arith.constant 0 : i32
    return %c0_i32, %c0_i32_0, %c0_i32_1 : i32, i32, i32
  }
}

module attributes {stable_mosaic.version = 11 : i64} {
  func.func @_fused_conv_bn_act_kernel(%arg0: i32, %arg1: memref<1x16x256xbf16, #tpu.memory_space<vmem>>, %arg2: memref<1x256x2xbf16, #tpu.memory_space<vmem>>, %arg3: memref<16x1xf32, #tpu.memory_space<vmem>>, %arg4: memref<16x1xf32, #tpu.memory_space<vmem>>, %arg5: memref<16x1xf32, #tpu.memory_space<vmem>>, %arg6: memref<1x16x2xbf16, #tpu.memory_space<vmem>>) attributes {dimension_semantics = [#tpu.dimension_semantics<arbitrary>], iteration_bounds = array<i64: 1>, scalar_prefetch = 0 : i64, scratch_operands = 0 : i64, tpu.core_type = #tpu.core_type<tc>, window_params = [{pipeline_mode = #tpu.pipeline_mode<synchronous>, transform_indices = @transform_0, window_bounds = array<i64: 1, 16, 256>}, {pipeline_mode = #tpu.pipeline_mode<synchronous>, transform_indices = @transform_1, window_bounds = array<i64: 1, 256, 2>}, {pipeline_mode = #tpu.pipeline_mode<synchronous>, transform_indices = @transform_2, window_bounds = array<i64: 16, 1>}, {pipeline_mode = #tpu.pipeline_mode<synchronous>, transform_indices = @transform_3, window_bounds = array<i64: 16, 1>}, {pipeline_mode = #tpu.pipeline_mode<synchronous>, transform_indices = @transform_4, window_bounds = array<i64: 16, 1>}, {pipeline_mode = #tpu.pipeline_mode<synchronous>, transform_indices = @transform_5, window_bounds = array<i64: 1, 16, 2>}]} {
    %c0 = arith.constant 0 : index
    %c0_0 = arith.constant 0 : index
    %0 = vector.load %arg3[%c0, %c0_0] : memref<16x1xf32, #tpu.memory_space<vmem>>, vector<16x1xf32>
    %c0_1 = arith.constant 0 : index
    %c0_2 = arith.constant 0 : index
    %c0_3 = arith.constant 0 : index
    %1 = vector.load %arg1[%c0_1, %c0_2, %c0_3] : memref<1x16x256xbf16, #tpu.memory_space<vmem>>, vector<1x16x256xbf16>
    %2 = vector.shape_cast %1 : vector<1x16x256xbf16> to vector<16x256xbf16>
    %c0_4 = arith.constant 0 : index
    %c0_5 = arith.constant 0 : index
    %c0_6 = arith.constant 0 : index
    %3 = vector.load %arg2[%c0_4, %c0_5, %c0_6] : memref<1x256x2xbf16, #tpu.memory_space<vmem>>, vector<1x256x2xbf16>
    %4 = vector.shape_cast %3 : vector<1x256x2xbf16> to vector<256x2xbf16>
    %cst = arith.constant dense<0.000000e+00> : vector<16x2xf32>
    %5 = tpu.matmul %2, %4, %cst {dimension_numbers = #tpu.dot_dimension_numbers<[1], [0], [0], [1], [0, 0, 1, 1], [], []>} : vector<16x256xbf16>, vector<256x2xbf16>, vector<16x2xf32> -> vector<16x2xf32>
    %6 = vector.broadcast %0 : vector<16x1xf32> to vector<16x2xf32>
    %7 = arith.addf %5, %6 : vector<16x2xf32>
    %cst_7 = arith.constant 0.000000e+00 : f32
    %8 = vector.broadcast %cst_7 : f32 to vector<16x2xf32>
    %9 = arith.cmpf oge, %7, %8 : vector<16x2xf32>
    %cst_8 = arith.constant 2.000000e-01 : f32
    %10 = vector.broadcast %cst_8 : f32 to vector<16x2xf32>
    %11 = arith.mulf %10, %7 : vector<16x2xf32>
    %12 = arith.select %9, %7, %11 : vector<16x2xi1>, vector<16x2xf32>
    %13 = arith.truncf %12 : vector<16x2xf32> to vector<16x2xbf16>
    %c0_9 = arith.constant 0 : index
    %c0_10 = arith.constant 0 : index
    %c0_11 = arith.constant 0 : index
    %14 = vector.load %arg6[%c0_9, %c0_10, %c0_11] : memref<1x16x2xbf16, #tpu.memory_space<vmem>>, vector<1x16x2xbf16>
    %15 = vector.shape_cast %14 : vector<1x16x2xbf16> to vector<16x2xbf16>
    %16 = vector.shape_cast %13 : vector<16x2xbf16> to vector<1x16x2xbf16>
    tpu.vector_store %arg6[%c0_9, %c0_10, %c0_11], %16 {strides = array<i32>} : memref<1x16x2xbf16, #tpu.memory_space<vmem>>, vector<1x16x2xbf16>,
    return
  }
  func.func @transform_0(%arg0: i32) -> (i32, i32, i32) {
    %c0_i32 = arith.constant 0 : i32
    %c0_i32_0 = arith.constant 0 : i32
    %c0_i32_1 = arith.constant 0 : i32
    %c0_i32_2 = arith.constant 0 : i32
    return %c0_i32, %c0_i32_0, %c0_i32_1 : i32, i32, i32
  }
  func.func @transform_1(%arg0: i32) -> (i32, i32, i32) {
    %c0_i32 = arith.constant 0 : i32
    %c0_i32_0 = arith.constant 0 : i32
    %c0_i32_1 = arith.constant 0 : i32
    %c0_i32_2 = arith.constant 0 : i32
    return %c0_i32, %c0_i32_0, %c0_i32_1 : i32, i32, i32
  }
  func.func @transform_2(%arg0: i32) -> (i32, i32) {
    %c0_i32 = arith.constant 0 : i32
    %c0_i32_0 = arith.constant 0 : i32
    %c0_i32_1 = arith.constant 0 : i32
    return %c0_i32, %c0_i32_0 : i32, i32
  }
  func.func @transform_3(%arg0: i32) -> (i32, i32) {
    %c0_i32 = arith.constant 0 : i32
    %c0_i32_0 = arith.constant 0 : i32
    %c0_i32_1 = arith.constant 0 : i32
    return %c0_i32, %c0_i32_0 : i32, i32
  }
  func.func @transform_4(%arg0: i32) -> (i32, i32) {
    %c0_i32 = arith.constant 0 : i32
    %c0_i32_0 = arith.constant 0 : i32
    %c0_i32_1 = arith.constant 0 : i32
    return %c0_i32, %c0_i32_0 : i32, i32
  }
  func.func @transform_5(%arg0: i32) -> (i32, i32, i32) {
    %c0_i32 = arith.constant 0 : i32
    %c0_i32_0 = arith.constant 0 : i32
    %c0_i32_1 = arith.constant 0 : i32
    %c0_i32_2 = arith.constant 0 : i32
    return %c0_i32, %c0_i32_0, %c0_i32_1 : i32, i32, i32
  }
}

module attributes {stable_mosaic.version = 11 : i64} {
  func.func @_fused_conv_bn_act_kernel(%arg0: i32, %arg1: memref<4x16x64xbf16, #tpu.memory_space<vmem>>, %arg2: memref<4x64x2xbf16, #tpu.memory_space<vmem>>, %arg3: memref<16x1xf32, #tpu.memory_space<vmem>>, %arg4: memref<16x1xf32, #tpu.memory_space<vmem>>, %arg5: memref<16x1xf32, #tpu.memory_space<vmem>>, %arg6: memref<4x16x2xbf16, #tpu.memory_space<vmem>>) attributes {dimension_semantics = [#tpu.dimension_semantics<arbitrary>], iteration_bounds = array<i64: 1>, scalar_prefetch = 0 : i64, scratch_operands = 0 : i64, tpu.core_type = #tpu.core_type<tc>, window_params = [{pipeline_mode = #tpu.pipeline_mode<synchronous>, transform_indices = @transform_0, window_bounds = array<i64: 4, 16, 64>}, {pipeline_mode = #tpu.pipeline_mode<synchronous>, transform_indices = @transform_1, window_bounds = array<i64: 4, 64, 2>}, {pipeline_mode = #tpu.pipeline_mode<synchronous>, transform_indices = @transform_2, window_bounds = array<i64: 16, 1>}, {pipeline_mode = #tpu.pipeline_mode<synchronous>, transform_indices = @transform_3, window_bounds = array<i64: 16, 1>}, {pipeline_mode = #tpu.pipeline_mode<synchronous>, transform_indices = @transform_4, window_bounds = array<i64: 16, 1>}, {pipeline_mode = #tpu.pipeline_mode<synchronous>, transform_indices = @transform_5, window_bounds = array<i64: 4, 16, 2>}]} {
    %c0 = arith.constant 0 : index
    %c0_0 = arith.constant 0 : index
    %0 = vector.load %arg3[%c0, %c0_0] : memref<16x1xf32, #tpu.memory_space<vmem>>, vector<16x1xf32>
    %c0_1 = arith.constant 0 : index
    %c0_2 = arith.constant 0 : index
    %c0_3 = arith.constant 0 : index
    %1 = vector.load %arg1[%c0_1, %c0_2, %c0_3] : memref<4x16x64xbf16, #tpu.memory_space<vmem>>, vector<1x16x64xbf16>
    %2 = vector.shape_cast %1 : vector<1x16x64xbf16> to vector<16x64xbf16>
    %c0_4 = arith.constant 0 : index
    %c0_5 = arith.constant 0 : index
    %c0_6 = arith.constant 0 : index
    %3 = vector.load %arg2[%c0_4, %c0_5, %c0_6] : memref<4x64x2xbf16, #tpu.memory_space<vmem>>, vector<1x64x2xbf16>
    %4 = vector.shape_cast %3 : vector<1x64x2xbf16> to vector<64x2xbf16>
    %cst = arith.constant dense<0.000000e+00> : vector<16x2xf32>
    %5 = tpu.matmul %2, %4, %cst {dimension_numbers = #tpu.dot_dimension_numbers<[1], [0], [0], [1], [0, 0, 1, 1], [], []>} : vector<16x64xbf16>, vector<64x2xbf16>, vector<16x2xf32> -> vector<16x2xf32>
    %6 = vector.broadcast %0 : vector<16x1xf32> to vector<16x2xf32>
    %7 = arith.addf %5, %6 : vector<16x2xf32>
    %c1 = arith.constant 1 : index
    %c0_7 = arith.constant 0 : index
    %c0_8 = arith.constant 0 : index
    %8 = vector.load %arg1[%c1, %c0_7, %c0_8] : memref<4x16x64xbf16, #tpu.memory_space<vmem>>, vector<1x16x64xbf16>
    %9 = vector.shape_cast %8 : vector<1x16x64xbf16> to vector<16x64xbf16>
    %c1_9 = arith.constant 1 : index
    %c0_10 = arith.constant 0 : index
    %c0_11 = arith.constant 0 : index
    %10 = vector.load %arg2[%c1_9, %c0_10, %c0_11] : memref<4x64x2xbf16, #tpu.memory_space<vmem>>, vector<1x64x2xbf16>
    %11 = vector.shape_cast %10 : vector<1x64x2xbf16> to vector<64x2xbf16>
    %cst_12 = arith.constant dense<0.000000e+00> : vector<16x2xf32>
    %12 = tpu.matmul %9, %11, %cst_12 {dimension_numbers = #tpu.dot_dimension_numbers<[1], [0], [0], [1], [0, 0, 1, 1], [], []>} : vector<16x64xbf16>, vector<64x2xbf16>, vector<16x2xf32> -> vector<16x2xf32>
    %13 = vector.broadcast %0 : vector<16x1xf32> to vector<16x2xf32>
    %14 = arith.addf %12, %13 : vector<16x2xf32>
    %c2 = arith.constant 2 : index
    %c0_13 = arith.constant 0 : index
    %c0_14 = arith.constant 0 : index
    %15 = vector.load %arg1[%c2, %c0_13, %c0_14] : memref<4x16x64xbf16, #tpu.memory_space<vmem>>, vector<1x16x64xbf16>
    %16 = vector.shape_cast %15 : vector<1x16x64xbf16> to vector<16x64xbf16>
    %c2_15 = arith.constant 2 : index
    %c0_16 = arith.constant 0 : index
    %c0_17 = arith.constant 0 : index
    %17 = vector.load %arg2[%c2_15, %c0_16, %c0_17] : memref<4x64x2xbf16, #tpu.memory_space<vmem>>, vector<1x64x2xbf16>
    %18 = vector.shape_cast %17 : vector<1x64x2xbf16> to vector<64x2xbf16>
    %cst_18 = arith.constant dense<0.000000e+00> : vector<16x2xf32>
    %19 = tpu.matmul %16, %18, %cst_18 {dimension_numbers = #tpu.dot_dimension_numbers<[1], [0], [0], [1], [0, 0, 1, 1], [], []>} : vector<16x64xbf16>, vector<64x2xbf16>, vector<16x2xf32> -> vector<16x2xf32>
    %20 = vector.broadcast %0 : vector<16x1xf32> to vector<16x2xf32>
    %21 = arith.addf %19, %20 : vector<16x2xf32>
    %c3 = arith.constant 3 : index
    %c0_19 = arith.constant 0 : index
    %c0_20 = arith.constant 0 : index
    %22 = vector.load %arg1[%c3, %c0_19, %c0_20] : memref<4x16x64xbf16, #tpu.memory_space<vmem>>, vector<1x16x64xbf16>
    %23 = vector.shape_cast %22 : vector<1x16x64xbf16> to vector<16x64xbf16>
    %c3_21 = arith.constant 3 : index
    %c0_22 = arith.constant 0 : index
    %c0_23 = arith.constant 0 : index
    %24 = vector.load %arg2[%c3_21, %c0_22, %c0_23] : memref<4x64x2xbf16, #tpu.memory_space<vmem>>, vector<1x64x2xbf16>
    %25 = vector.shape_cast %24 : vector<1x64x2xbf16> to vector<64x2xbf16>
    %cst_24 = arith.constant dense<0.000000e+00> : vector<16x2xf32>
    %26 = tpu.matmul %23, %25, %cst_24 {dimension_numbers = #tpu.dot_dimension_numbers<[1], [0], [0], [1], [0, 0, 1, 1], [], []>} : vector<16x64xbf16>, vector<64x2xbf16>, vector<16x2xf32> -> vector<16x2xf32>
    %27 = vector.broadcast %0 : vector<16x1xf32> to vector<16x2xf32>
    %28 = arith.addf %26, %27 : vector<16x2xf32>
    %cst_25 = arith.constant 0.000000e+00 : f32
    %29 = vector.broadcast %cst_25 : f32 to vector<16x2xf32>
    %30 = arith.cmpf oge, %7, %29 : vector<16x2xf32>
    %cst_26 = arith.constant 0.000000e+00 : f32
    %31 = vector.broadcast %cst_26 : f32 to vector<16x2xf32>
    %32 = arith.mulf %31, %7 : vector<16x2xf32>
    %33 = arith.select %30, %7, %32 : vector<16x2xi1>, vector<16x2xf32>
    %34 = arith.truncf %33 : vector<16x2xf32> to vector<16x2xbf16>
    %c0_27 = arith.constant 0 : index
    %c0_28 = arith.constant 0 : index
    %c0_29 = arith.constant 0 : index
    %35 = vector.load %arg6[%c0_27, %c0_28, %c0_29] : memref<4x16x2xbf16, #tpu.memory_space<vmem>>, vector<1x16x2xbf16>
    %36 = vector.shape_cast %35 : vector<1x16x2xbf16> to vector<16x2xbf16>
    %37 = vector.shape_cast %34 : vector<16x2xbf16> to vector<1x16x2xbf16>
    tpu.vector_store %arg6[%c0_27, %c0_28, %c0_29], %37 {strides = array<i32>} : memref<4x16x2xbf16, #tpu.memory_space<vmem>>, vector<1x16x2xbf16>,
    %cst_30 = arith.constant 0.000000e+00 : f32
    %38 = vector.broadcast %cst_30 : f32 to vector<16x2xf32>
    %39 = arith.cmpf oge, %14, %38 : vector<16x2xf32>
    %cst_31 = arith.constant 0.000000e+00 : f32
    %40 = vector.broadcast %cst_31 : f32 to vector<16x2xf32>
    %41 = arith.mulf %40, %14 : vector<16x2xf32>
    %42 = arith.select %39, %14, %41 : vector<16x2xi1>, vector<16x2xf32>
    %43 = arith.truncf %42 : vector<16x2xf32> to vector<16x2xbf16>
    %c1_32 = arith.constant 1 : index
    %c0_33 = arith.constant 0 : index
    %c0_34 = arith.constant 0 : index
    %44 = vector.load %arg6[%c1_32, %c0_33, %c0_34] : memref<4x16x2xbf16, #tpu.memory_space<vmem>>, vector<1x16x2xbf16>
    %45 = vector.shape_cast %44 : vector<1x16x2xbf16> to vector<16x2xbf16>
    %46 = vector.shape_cast %43 : vector<16x2xbf16> to vector<1x16x2xbf16>
    tpu.vector_store %arg6[%c1_32, %c0_33, %c0_34], %46 {strides = array<i32>} : memref<4x16x2xbf16, #tpu.memory_space<vmem>>, vector<1x16x2xbf16>,
    %cst_35 = arith.constant 0.000000e+00 : f32
    %47 = vector.broadcast %cst_35 : f32 to vector<16x2xf32>
    %48 = arith.cmpf oge, %21, %47 : vector<16x2xf32>
    %cst_36 = arith.constant 0.000000e+00 : f32
    %49 = vector.broadcast %cst_36 : f32 to vector<16x2xf32>
    %50 = arith.mulf %49, %21 : vector<16x2xf32>
    %51 = arith.select %48, %21, %50 : vector<16x2xi1>, vector<16x2xf32>
    %52 = arith.truncf %51 : vector<16x2xf32> to vector<16x2xbf16>
    %c2_37 = arith.constant 2 : index
    %c0_38 = arith.constant 0 : index
    %c0_39 = arith.constant 0 : index
    %53 = vector.load %arg6[%c2_37, %c0_38, %c0_39] : memref<4x16x2xbf16, #tpu.memory_space<vmem>>, vector<1x16x2xbf16>
    %54 = vector.shape_cast %53 : vector<1x16x2xbf16> to vector<16x2xbf16>
    %55 = vector.shape_cast %52 : vector<16x2xbf16> to vector<1x16x2xbf16>
    tpu.vector_store %arg6[%c2_37, %c0_38, %c0_39], %55 {strides = array<i32>} : memref<4x16x2xbf16, #tpu.memory_space<vmem>>, vector<1x16x2xbf16>,
    %cst_40 = arith.constant 0.000000e+00 : f32
    %56 = vector.broadcast %cst_40 : f32 to vector<16x2xf32>
    %57 = arith.cmpf oge, %28, %56 : vector<16x2xf32>
    %cst_41 = arith.constant 0.000000e+00 : f32
    %58 = vector.broadcast %cst_41 : f32 to vector<16x2xf32>
    %59 = arith.mulf %58, %28 : vector<16x2xf32>
    %60 = arith.select %57, %28, %59 : vector<16x2xi1>, vector<16x2xf32>
    %61 = arith.truncf %60 : vector<16x2xf32> to vector<16x2xbf16>
    %c3_42 = arith.constant 3 : index
    %c0_43 = arith.constant 0 : index
    %c0_44 = arith.constant 0 : index
    %62 = vector.load %arg6[%c3_42, %c0_43, %c0_44] : memref<4x16x2xbf16, #tpu.memory_space<vmem>>, vector<1x16x2xbf16>
    %63 = vector.shape_cast %62 : vector<1x16x2xbf16> to vector<16x2xbf16>
    %64 = vector.shape_cast %61 : vector<16x2xbf16> to vector<1x16x2xbf16>
    tpu.vector_store %arg6[%c3_42, %c0_43, %c0_44], %64 {strides = array<i32>} : memref<4x16x2xbf16, #tpu.memory_space<vmem>>, vector<1x16x2xbf16>,
    return
  }
  func.func @transform_0(%arg0: i32) -> (i32, i32, i32) {
    %c0_i32 = arith.constant 0 : i32
    %c0_i32_0 = arith.constant 0 : i32
    %c0_i32_1 = arith.constant 0 : i32
    %c0_i32_2 = arith.constant 0 : i32
    return %c0_i32, %c0_i32_0, %c0_i32_1 : i32, i32, i32
  }
  func.func @transform_1(%arg0: i32) -> (i32, i32, i32) {
    %c0_i32 = arith.constant 0 : i32
    %c0_i32_0 = arith.constant 0 : i32
    %c0_i32_1 = arith.constant 0 : i32
    %c0_i32_2 = arith.constant 0 : i32
    return %c0_i32, %c0_i32_0, %c0_i32_1 : i32, i32, i32
  }
  func.func @transform_2(%arg0: i32) -> (i32, i32) {
    %c0_i32 = arith.constant 0 : i32
    %c0_i32_0 = arith.constant 0 : i32
    %c0_i32_1 = arith.constant 0 : i32
    return %c0_i32, %c0_i32_0 : i32, i32
  }
  func.func @transform_3(%arg0: i32) -> (i32, i32) {
    %c0_i32 = arith.constant 0 : i32
    %c0_i32_0 = arith.constant 0 : i32
    %c0_i32_1 = arith.constant 0 : i32
    return %c0_i32, %c0_i32_0 : i32, i32
  }
  func.func @transform_4(%arg0: i32) -> (i32, i32) {
    %c0_i32 = arith.constant 0 : i32
    %c0_i32_0 = arith.constant 0 : i32
    %c0_i32_1 = arith.constant 0 : i32
    return %c0_i32, %c0_i32_0 : i32, i32
  }
  func.func @transform_5(%arg0: i32) -> (i32, i32, i32) {
    %c0_i32 = arith.constant 0 : i32
    %c0_i32_0 = arith.constant 0 : i32
    %c0_i32_1 = arith.constant 0 : i32
    %c0_i32_2 = arith.constant 0 : i32
    return %c0_i32, %c0_i32_0, %c0_i32_1 : i32, i32, i32
  }
}

module attributes {stable_mosaic.version = 11 : i64} {
  func.func @_fused_conv_bn_act_kernel(%arg0: i32, %arg1: memref<1x16x144xbf16, #tpu.memory_space<vmem>>, %arg2: memref<1x144x8xbf16, #tpu.memory_space<vmem>>, %arg3: memref<16x1xf32, #tpu.memory_space<vmem>>, %arg4: memref<16x1xf32, #tpu.memory_space<vmem>>, %arg5: memref<16x1xf32, #tpu.memory_space<vmem>>, %arg6: memref<1x16x8xbf16, #tpu.memory_space<vmem>>) attributes {dimension_semantics = [#tpu.dimension_semantics<arbitrary>], iteration_bounds = array<i64: 1>, scalar_prefetch = 0 : i64, scratch_operands = 0 : i64, tpu.core_type = #tpu.core_type<tc>, window_params = [{pipeline_mode = #tpu.pipeline_mode<synchronous>, transform_indices = @transform_0, window_bounds = array<i64: 1, 16, 144>}, {pipeline_mode = #tpu.pipeline_mode<synchronous>, transform_indices = @transform_1, window_bounds = array<i64: 1, 144, 8>}, {pipeline_mode = #tpu.pipeline_mode<synchronous>, transform_indices = @transform_2, window_bounds = array<i64: 16, 1>}, {pipeline_mode = #tpu.pipeline_mode<synchronous>, transform_indices = @transform_3, window_bounds = array<i64: 16, 1>}, {pipeline_mode = #tpu.pipeline_mode<synchronous>, transform_indices = @transform_4, window_bounds = array<i64: 16, 1>}, {pipeline_mode = #tpu.pipeline_mode<synchronous>, transform_indices = @transform_5, window_bounds = array<i64: 1, 16, 8>}]} {
    %c0 = arith.constant 0 : index
    %c0_0 = arith.constant 0 : index
    %0 = vector.load %arg3[%c0, %c0_0] : memref<16x1xf32, #tpu.memory_space<vmem>>, vector<16x1xf32>
    %c0_1 = arith.constant 0 : index
    %c0_2 = arith.constant 0 : index
    %c0_3 = arith.constant 0 : index
    %1 = vector.load %arg1[%c0_1, %c0_2, %c0_3] : memref<1x16x144xbf16, #tpu.memory_space<vmem>>, vector<1x16x144xbf16>
    %2 = vector.shape_cast %1 : vector<1x16x144xbf16> to vector<16x144xbf16>
    %c0_4 = arith.constant 0 : index
    %c0_5 = arith.constant 0 : index
    %c0_6 = arith.constant 0 : index
    %3 = vector.load %arg2[%c0_4, %c0_5, %c0_6] : memref<1x144x8xbf16, #tpu.memory_space<vmem>>, vector<1x144x8xbf16>
    %4 = vector.shape_cast %3 : vector<1x144x8xbf16> to vector<144x8xbf16>
    %cst = arith.constant dense<0.000000e+00> : vector<16x8xf32>
    %5 = tpu.matmul %2, %4, %cst {dimension_numbers = #tpu.dot_dimension_numbers<[1], [0], [0], [1], [0, 0, 1, 1], [], []>} : vector<16x144xbf16>, vector<144x8xbf16>, vector<16x8xf32> -> vector<16x8xf32>
    %6 = vector.broadcast %0 : vector<16x1xf32> to vector<16x8xf32>
    %7 = arith.addf %5, %6 : vector<16x8xf32>
    %cst_7 = arith.constant 0.000000e+00 : f32
    %8 = vector.broadcast %cst_7 : f32 to vector<16x8xf32>
    %9 = arith.cmpf oge, %7, %8 : vector<16x8xf32>
    %cst_8 = arith.constant 0.000000e+00 : f32
    %10 = vector.broadcast %cst_8 : f32 to vector<16x8xf32>
    %11 = arith.mulf %10, %7 : vector<16x8xf32>
    %12 = arith.select %9, %7, %11 : vector<16x8xi1>, vector<16x8xf32>
    %13 = arith.truncf %12 : vector<16x8xf32> to vector<16x8xbf16>
    %c0_9 = arith.constant 0 : index
    %c0_10 = arith.constant 0 : index
    %c0_11 = arith.constant 0 : index
    %14 = vector.load %arg6[%c0_9, %c0_10, %c0_11] : memref<1x16x8xbf16, #tpu.memory_space<vmem>>, vector<1x16x8xbf16>
    %15 = vector.shape_cast %14 : vector<1x16x8xbf16> to vector<16x8xbf16>
    %16 = vector.shape_cast %13 : vector<16x8xbf16> to vector<1x16x8xbf16>
    tpu.vector_store %arg6[%c0_9, %c0_10, %c0_11], %16 {strides = array<i32>} : memref<1x16x8xbf16, #tpu.memory_space<vmem>>, vector<1x16x8xbf16>,
    return
  }
  func.func @transform_0(%arg0: i32) -> (i32, i32, i32) {
    %c0_i32 = arith.constant 0 : i32
    %c0_i32_0 = arith.constant 0 : i32
    %c0_i32_1 = arith.constant 0 : i32
    %c0_i32_2 = arith.constant 0 : i32
    return %c0_i32, %c0_i32_0, %c0_i32_1 : i32, i32, i32
  }
  func.func @transform_1(%arg0: i32) -> (i32, i32, i32) {
    %c0_i32 = arith.constant 0 : i32
    %c0_i32_0 = arith.constant 0 : i32
    %c0_i32_1 = arith.constant 0 : i32
    %c0_i32_2 = arith.constant 0 : i32
    return %c0_i32, %c0_i32_0, %c0_i32_1 : i32, i32, i32
  }
  func.func @transform_2(%arg0: i32) -> (i32, i32) {
    %c0_i32 = arith.constant 0 : i32
    %c0_i32_0 = arith.constant 0 : i32
    %c0_i32_1 = arith.constant 0 : i32
    return %c0_i32, %c0_i32_0 : i32, i32
  }
  func.func @transform_3(%arg0: i32) -> (i32, i32) {
    %c0_i32 = arith.constant 0 : i32
    %c0_i32_0 = arith.constant 0 : i32
    %c0_i32_1 = arith.constant 0 : i32
    return %c0_i32, %c0_i32_0 : i32, i32
  }
  func.func @transform_4(%arg0: i32) -> (i32, i32) {
    %c0_i32 = arith.constant 0 : i32
    %c0_i32_0 = arith.constant 0 : i32
    %c0_i32_1 = arith.constant 0 : i32
    return %c0_i32, %c0_i32_0 : i32, i32
  }
  func.func @transform_5(%arg0: i32) -> (i32, i32, i32) {
    %c0_i32 = arith.constant 0 : i32
    %c0_i32_0 = arith.constant 0 : i32
    %c0_i32_1 = arith.constant 0 : i32
    %c0_i32_2 = arith.constant 0 : i32
    return %c0_i32, %c0_i32_0, %c0_i32_1 : i32, i32, i32
  }
}

module attributes {stable_mosaic.version = 11 : i64} {
  func.func @_fused_conv_bn_act_kernel(%arg0: i32, %arg1: memref<4x8x128xbf16, #tpu.memory_space<vmem>>, %arg2: memref<4x128x8xbf16, #tpu.memory_space<vmem>>, %arg3: memref<8x1xf32, #tpu.memory_space<vmem>>, %arg4: memref<8x1xf32, #tpu.memory_space<vmem>>, %arg5: memref<8x1xf32, #tpu.memory_space<vmem>>, %arg6: memref<4x8x8xbf16, #tpu.memory_space<vmem>>) attributes {dimension_semantics = [#tpu.dimension_semantics<arbitrary>], iteration_bounds = array<i64: 1>, scalar_prefetch = 0 : i64, scratch_operands = 0 : i64, tpu.core_type = #tpu.core_type<tc>, window_params = [{pipeline_mode = #tpu.pipeline_mode<synchronous>, transform_indices = @transform_0, window_bounds = array<i64: 4, 8, 128>}, {pipeline_mode = #tpu.pipeline_mode<synchronous>, transform_indices = @transform_1, window_bounds = array<i64: 4, 128, 8>}, {pipeline_mode = #tpu.pipeline_mode<synchronous>, transform_indices = @transform_2, window_bounds = array<i64: 8, 1>}, {pipeline_mode = #tpu.pipeline_mode<synchronous>, transform_indices = @transform_3, window_bounds = array<i64: 8, 1>}, {pipeline_mode = #tpu.pipeline_mode<synchronous>, transform_indices = @transform_4, window_bounds = array<i64: 8, 1>}, {pipeline_mode = #tpu.pipeline_mode<synchronous>, transform_indices = @transform_5, window_bounds = array<i64: 4, 8, 8>}]} {
    %c0 = arith.constant 0 : index
    %c0_0 = arith.constant 0 : index
    %0 = vector.load %arg3[%c0, %c0_0] : memref<8x1xf32, #tpu.memory_space<vmem>>, vector<8x1xf32>
    %c0_1 = arith.constant 0 : index
    %c0_2 = arith.constant 0 : index
    %c0_3 = arith.constant 0 : index
    %1 = vector.load %arg1[%c0_1, %c0_2, %c0_3] : memref<4x8x128xbf16, #tpu.memory_space<vmem>>, vector<1x8x128xbf16>
    %2 = vector.shape_cast %1 : vector<1x8x128xbf16> to vector<8x128xbf16>
    %c0_4 = arith.constant 0 : index
    %c0_5 = arith.constant 0 : index
    %c0_6 = arith.constant 0 : index
    %3 = vector.load %arg2[%c0_4, %c0_5, %c0_6] : memref<4x128x8xbf16, #tpu.memory_space<vmem>>, vector<1x128x8xbf16>
    %4 = vector.shape_cast %3 : vector<1x128x8xbf16> to vector<128x8xbf16>
    %cst = arith.constant dense<0.000000e+00> : vector<8x8xf32>
    %5 = tpu.matmul %2, %4, %cst {dimension_numbers = #tpu.dot_dimension_numbers<[1], [0], [0], [1], [0, 0, 1, 1], [], []>} : vector<8x128xbf16>, vector<128x8xbf16>, vector<8x8xf32> -> vector<8x8xf32>
    %6 = vector.broadcast %0 : vector<8x1xf32> to vector<8x8xf32>
    %7 = arith.addf %5, %6 : vector<8x8xf32>
    %c1 = arith.constant 1 : index
    %c0_7 = arith.constant 0 : index
    %c0_8 = arith.constant 0 : index
    %8 = vector.load %arg1[%c1, %c0_7, %c0_8] : memref<4x8x128xbf16, #tpu.memory_space<vmem>>, vector<1x8x128xbf16>
    %9 = vector.shape_cast %8 : vector<1x8x128xbf16> to vector<8x128xbf16>
    %c1_9 = arith.constant 1 : index
    %c0_10 = arith.constant 0 : index
    %c0_11 = arith.constant 0 : index
    %10 = vector.load %arg2[%c1_9, %c0_10, %c0_11] : memref<4x128x8xbf16, #tpu.memory_space<vmem>>, vector<1x128x8xbf16>
    %11 = vector.shape_cast %10 : vector<1x128x8xbf16> to vector<128x8xbf16>
    %cst_12 = arith.constant dense<0.000000e+00> : vector<8x8xf32>
    %12 = tpu.matmul %9, %11, %cst_12 {dimension_numbers = #tpu.dot_dimension_numbers<[1], [0], [0], [1], [0, 0, 1, 1], [], []>} : vector<8x128xbf16>, vector<128x8xbf16>, vector<8x8xf32> -> vector<8x8xf32>
    %13 = vector.broadcast %0 : vector<8x1xf32> to vector<8x8xf32>
    %14 = arith.addf %12, %13 : vector<8x8xf32>
    %c2 = arith.constant 2 : index
    %c0_13 = arith.constant 0 : index
    %c0_14 = arith.constant 0 : index
    %15 = vector.load %arg1[%c2, %c0_13, %c0_14] : memref<4x8x128xbf16, #tpu.memory_space<vmem>>, vector<1x8x128xbf16>
    %16 = vector.shape_cast %15 : vector<1x8x128xbf16> to vector<8x128xbf16>
    %c2_15 = arith.constant 2 : index
    %c0_16 = arith.constant 0 : index
    %c0_17 = arith.constant 0 : index
    %17 = vector.load %arg2[%c2_15, %c0_16, %c0_17] : memref<4x128x8xbf16, #tpu.memory_space<vmem>>, vector<1x128x8xbf16>
    %18 = vector.shape_cast %17 : vector<1x128x8xbf16> to vector<128x8xbf16>
    %cst_18 = arith.constant dense<0.000000e+00> : vector<8x8xf32>
    %19 = tpu.matmul %16, %18, %cst_18 {dimension_numbers = #tpu.dot_dimension_numbers<[1], [0], [0], [1], [0, 0, 1, 1], [], []>} : vector<8x128xbf16>, vector<128x8xbf16>, vector<8x8xf32> -> vector<8x8xf32>
    %20 = vector.broadcast %0 : vector<8x1xf32> to vector<8x8xf32>
    %21 = arith.addf %19, %20 : vector<8x8xf32>
    %c3 = arith.constant 3 : index
    %c0_19 = arith.constant 0 : index
    %c0_20 = arith.constant 0 : index
    %22 = vector.load %arg1[%c3, %c0_19, %c0_20] : memref<4x8x128xbf16, #tpu.memory_space<vmem>>, vector<1x8x128xbf16>
    %23 = vector.shape_cast %22 : vector<1x8x128xbf16> to vector<8x128xbf16>
    %c3_21 = arith.constant 3 : index
    %c0_22 = arith.constant 0 : index
    %c0_23 = arith.constant 0 : index
    %24 = vector.load %arg2[%c3_21, %c0_22, %c0_23] : memref<4x128x8xbf16, #tpu.memory_space<vmem>>, vector<1x128x8xbf16>
    %25 = vector.shape_cast %24 : vector<1x128x8xbf16> to vector<128x8xbf16>
    %cst_24 = arith.constant dense<0.000000e+00> : vector<8x8xf32>
    %26 = tpu.matmul %23, %25, %cst_24 {dimension_numbers = #tpu.dot_dimension_numbers<[1], [0], [0], [1], [0, 0, 1, 1], [], []>} : vector<8x128xbf16>, vector<128x8xbf16>, vector<8x8xf32> -> vector<8x8xf32>
    %27 = vector.broadcast %0 : vector<8x1xf32> to vector<8x8xf32>
    %28 = arith.addf %26, %27 : vector<8x8xf32>
    %cst_25 = arith.constant dense<0.000000e+00> : vector<8xf32>
    %29 = vector.multi_reduction <add>, %7, %cst_25 [1] : vector<8x8xf32> to vector<8xf32>
    %30 = vector.shape_cast %29 : vector<8xf32> to vector<8x1xf32>
    %31 = arith.mulf %7, %7 : vector<8x8xf32>
    %cst_26 = arith.constant dense<0.000000e+00> : vector<8xf32>
    %32 = vector.multi_reduction <add>, %31, %cst_26 [1] : vector<8x8xf32> to vector<8xf32>
    %33 = vector.shape_cast %32 : vector<8xf32> to vector<8x1xf32>
    %cst_27 = arith.constant dense<0.000000e+00> : vector<8xf32>
    %34 = vector.multi_reduction <add>, %14, %cst_27 [1] : vector<8x8xf32> to vector<8xf32>
    %35 = vector.shape_cast %34 : vector<8xf32> to vector<8x1xf32>
    %36 = arith.addf %30, %35 : vector<8x1xf32>
    %37 = arith.mulf %14, %14 : vector<8x8xf32>
    %cst_28 = arith.constant dense<0.000000e+00> : vector<8xf32>
    %38 = vector.multi_reduction <add>, %37, %cst_28 [1] : vector<8x8xf32> to vector<8xf32>
    %39 = vector.shape_cast %38 : vector<8xf32> to vector<8x1xf32>
    %40 = arith.addf %33, %39 : vector<8x1xf32>
    %cst_29 = arith.constant dense<0.000000e+00> : vector<8xf32>
    %41 = vector.multi_reduction <add>, %21, %cst_29 [1] : vector<8x8xf32> to vector<8xf32>
    %42 = vector.shape_cast %41 : vector<8xf32> to vector<8x1xf32>
    %43 = arith.addf %36, %42 : vector<8x1xf32>
    %44 = arith.mulf %21, %21 : vector<8x8xf32>
    %cst_30 = arith.constant dense<0.000000e+00> : vector<8xf32>
    %45 = vector.multi_reduction <add>, %44, %cst_30 [1] : vector<8x8xf32> to vector<8xf32>
    %46 = vector.shape_cast %45 : vector<8xf32> to vector<8x1xf32>
    %47 = arith.addf %40, %46 : vector<8x1xf32>
    %cst_31 = arith.constant dense<0.000000e+00> : vector<8xf32>
    %48 = vector.multi_reduction <add>, %28, %cst_31 [1] : vector<8x8xf32> to vector<8xf32>
    %49 = vector.shape_cast %48 : vector<8xf32> to vector<8x1xf32>
    %50 = arith.addf %43, %49 : vector<8x1xf32>
    %51 = arith.mulf %28, %28 : vector<8x8xf32>
    %cst_32 = arith.constant dense<0.000000e+00> : vector<8xf32>
    %52 = vector.multi_reduction <add>, %51, %cst_32 [1] : vector<8x8xf32> to vector<8xf32>
    %53 = vector.shape_cast %52 : vector<8xf32> to vector<8x1xf32>
    %54 = arith.addf %47, %53 : vector<8x1xf32>
    %cst_33 = arith.constant 3.125000e-02 : f32
    %55 = vector.broadcast %cst_33 : f32 to vector<8x1xf32>
    %56 = arith.mulf %50, %55 : vector<8x1xf32>
    %cst_34 = arith.constant 3.125000e-02 : f32
    %57 = vector.broadcast %cst_34 : f32 to vector<8x1xf32>
    %58 = arith.mulf %54, %57 : vector<8x1xf32>
    %59 = arith.mulf %56, %56 : vector<8x1xf32>
    %60 = arith.subf %58, %59 : vector<8x1xf32>
    %cst_35 = arith.constant 0.000000e+00 : f32
    %61 = vector.broadcast %cst_35 : f32 to vector<8x1xf32>
    %62 = arith.maximumf %60, %61 : vector<8x1xf32>
    %c0_36 = arith.constant 0 : index
    %c0_37 = arith.constant 0 : index
    %63 = vector.load %arg4[%c0_36, %c0_37] : memref<8x1xf32, #tpu.memory_space<vmem>>, vector<8x1xf32>
    %cst_38 = arith.constant 9.99999974E-6 : f32
    %64 = vector.broadcast %cst_38 : f32 to vector<8x1xf32>
    %65 = arith.addf %62, %64 : vector<8x1xf32>
    %66 = math.rsqrt %65 : vector<8x1xf32>
    %67 = arith.mulf %63, %66 : vector<8x1xf32>
    %c0_39 = arith.constant 0 : index
    %c0_40 = arith.constant 0 : index
    %68 = vector.load %arg5[%c0_39, %c0_40] : memref<8x1xf32, #tpu.memory_space<vmem>>, vector<8x1xf32>
    %69 = arith.mulf %56, %67 : vector<8x1xf32>
    %70 = arith.subf %68, %69 : vector<8x1xf32>
    %71 = vector.broadcast %67 : vector<8x1xf32> to vector<8x8xf32>
    %72 = arith.mulf %7, %71 : vector<8x8xf32>
    %73 = vector.broadcast %70 : vector<8x1xf32> to vector<8x8xf32>
    %74 = arith.addf %72, %73 : vector<8x8xf32>
    %75 = vector.broadcast %67 : vector<8x1xf32> to vector<8x8xf32>
    %76 = arith.mulf %14, %75 : vector<8x8xf32>
    %77 = vector.broadcast %70 : vector<8x1xf32> to vector<8x8xf32>
    %78 = arith.addf %76, %77 : vector<8x8xf32>
    %79 = vector.broadcast %67 : vector<8x1xf32> to vector<8x8xf32>
    %80 = arith.mulf %21, %79 : vector<8x8xf32>
    %81 = vector.broadcast %70 : vector<8x1xf32> to vector<8x8xf32>
    %82 = arith.addf %80, %81 : vector<8x8xf32>
    %83 = vector.broadcast %67 : vector<8x1xf32> to vector<8x8xf32>
    %84 = arith.mulf %28, %83 : vector<8x8xf32>
    %85 = vector.broadcast %70 : vector<8x1xf32> to vector<8x8xf32>
    %86 = arith.addf %84, %85 : vector<8x8xf32>
    %cst_41 = arith.constant 0.000000e+00 : f32
    %87 = vector.broadcast %cst_41 : f32 to vector<8x8xf32>
    %88 = arith.cmpf oge, %74, %87 : vector<8x8xf32>
    %cst_42 = arith.constant 0.000000e+00 : f32
    %89 = vector.broadcast %cst_42 : f32 to vector<8x8xf32>
    %90 = arith.mulf %89, %74 : vector<8x8xf32>
    %91 = arith.select %88, %74, %90 : vector<8x8xi1>, vector<8x8xf32>
    %92 = arith.truncf %91 : vector<8x8xf32> to vector<8x8xbf16>
    %c0_43 = arith.constant 0 : index
    %c0_44 = arith.constant 0 : index
    %c0_45 = arith.constant 0 : index
    %93 = vector.load %arg6[%c0_43, %c0_44, %c0_45] : memref<4x8x8xbf16, #tpu.memory_space<vmem>>, vector<1x8x8xbf16>
    %94 = vector.shape_cast %93 : vector<1x8x8xbf16> to vector<8x8xbf16>
    %95 = vector.shape_cast %92 : vector<8x8xbf16> to vector<1x8x8xbf16>
    tpu.vector_store %arg6[%c0_43, %c0_44, %c0_45], %95 {strides = array<i32>} : memref<4x8x8xbf16, #tpu.memory_space<vmem>>, vector<1x8x8xbf16>,
    %cst_46 = arith.constant 0.000000e+00 : f32
    %96 = vector.broadcast %cst_46 : f32 to vector<8x8xf32>
    %97 = arith.cmpf oge, %78, %96 : vector<8x8xf32>
    %cst_47 = arith.constant 0.000000e+00 : f32
    %98 = vector.broadcast %cst_47 : f32 to vector<8x8xf32>
    %99 = arith.mulf %98, %78 : vector<8x8xf32>
    %100 = arith.select %97, %78, %99 : vector<8x8xi1>, vector<8x8xf32>
    %101 = arith.truncf %100 : vector<8x8xf32> to vector<8x8xbf16>
    %c1_48 = arith.constant 1 : index
    %c0_49 = arith.constant 0 : index
    %c0_50 = arith.constant 0 : index
    %102 = vector.load %arg6[%c1_48, %c0_49, %c0_50] : memref<4x8x8xbf16, #tpu.memory_space<vmem>>, vector<1x8x8xbf16>
    %103 = vector.shape_cast %102 : vector<1x8x8xbf16> to vector<8x8xbf16>
    %104 = vector.shape_cast %101 : vector<8x8xbf16> to vector<1x8x8xbf16>
    tpu.vector_store %arg6[%c1_48, %c0_49, %c0_50], %104 {strides = array<i32>} : memref<4x8x8xbf16, #tpu.memory_space<vmem>>, vector<1x8x8xbf16>,
    %cst_51 = arith.constant 0.000000e+00 : f32
    %105 = vector.broadcast %cst_51 : f32 to vector<8x8xf32>
    %106 = arith.cmpf oge, %82, %105 : vector<8x8xf32>
    %cst_52 = arith.constant 0.000000e+00 : f32
    %107 = vector.broadcast %cst_52 : f32 to vector<8x8xf32>
    %108 = arith.mulf %107, %82 : vector<8x8xf32>
    %109 = arith.select %106, %82, %108 : vector<8x8xi1>, vector<8x8xf32>
    %110 = arith.truncf %109 : vector<8x8xf32> to vector<8x8xbf16>
    %c2_53 = arith.constant 2 : index
    %c0_54 = arith.constant 0 : index
    %c0_55 = arith.constant 0 : index
    %111 = vector.load %arg6[%c2_53, %c0_54, %c0_55] : memref<4x8x8xbf16, #tpu.memory_space<vmem>>, vector<1x8x8xbf16>
    %112 = vector.shape_cast %111 : vector<1x8x8xbf16> to vector<8x8xbf16>
    %113 = vector.shape_cast %110 : vector<8x8xbf16> to vector<1x8x8xbf16>
    tpu.vector_store %arg6[%c2_53, %c0_54, %c0_55], %113 {strides = array<i32>} : memref<4x8x8xbf16, #tpu.memory_space<vmem>>, vector<1x8x8xbf16>,
    %cst_56 = arith.constant 0.000000e+00 : f32
    %114 = vector.broadcast %cst_56 : f32 to vector<8x8xf32>
    %115 = arith.cmpf oge, %86, %114 : vector<8x8xf32>
    %cst_57 = arith.constant 0.000000e+00 : f32
    %116 = vector.broadcast %cst_57 : f32 to vector<8x8xf32>
    %117 = arith.mulf %116, %86 : vector<8x8xf32>
    %118 = arith.select %115, %86, %117 : vector<8x8xi1>, vector<8x8xf32>
    %119 = arith.truncf %118 : vector<8x8xf32> to vector<8x8xbf16>
    %c3_58 = arith.constant 3 : index
    %c0_59 = arith.constant 0 : index
    %c0_60 = arith.constant 0 : index
    %120 = vector.load %arg6[%c3_58, %c0_59, %c0_60] : memref<4x8x8xbf16, #tpu.memory_space<vmem>>, vector<1x8x8xbf16>
    %121 = vector.shape_cast %120 : vector<1x8x8xbf16> to vector<8x8xbf16>
    %122 = vector.shape_cast %119 : vector<8x8xbf16> to vector<1x8x8xbf16>
    tpu.vector_store %arg6[%c3_58, %c0_59, %c0_60], %122 {strides = array<i32>} : memref<4x8x8xbf16, #tpu.memory_space<vmem>>, vector<1x8x8xbf16>,
    return
  }
  func.func @transform_0(%arg0: i32) -> (i32, i32, i32) {
    %c0_i32 = arith.constant 0 : i32
    %c0_i32_0 = arith.constant 0 : i32
    %c0_i32_1 = arith.constant 0 : i32
    %c0_i32_2 = arith.constant 0 : i32
    return %c0_i32, %c0_i32_0, %c0_i32_1 : i32, i32, i32
  }
  func.func @transform_1(%arg0: i32) -> (i32, i32, i32) {
    %c0_i32 = arith.constant 0 : i32
    %c0_i32_0 = arith.constant 0 : i32
    %c0_i32_1 = arith.constant 0 : i32
    %c0_i32_2 = arith.constant 0 : i32
    return %c0_i32, %c0_i32_0, %c0_i32_1 : i32, i32, i32
  }
  func.func @transform_2(%arg0: i32) -> (i32, i32) {
    %c0_i32 = arith.constant 0 : i32
    %c0_i32_0 = arith.constant 0 : i32
    %c0_i32_1 = arith.constant 0 : i32
    return %c0_i32, %c0_i32_0 : i32, i32
  }
  func.func @transform_3(%arg0: i32) -> (i32, i32) {
    %c0_i32 = arith.constant 0 : i32
    %c0_i32_0 = arith.constant 0 : i32
    %c0_i32_1 = arith.constant 0 : i32
    return %c0_i32, %c0_i32_0 : i32, i32
  }
  func.func @transform_4(%arg0: i32) -> (i32, i32) {
    %c0_i32 = arith.constant 0 : i32
    %c0_i32_0 = arith.constant 0 : i32
    %c0_i32_1 = arith.constant 0 : i32
    return %c0_i32, %c0_i32_0 : i32, i32
  }
  func.func @transform_5(%arg0: i32) -> (i32, i32, i32) {
    %c0_i32 = arith.constant 0 : i32
    %c0_i32_0 = arith.constant 0 : i32
    %c0_i32_1 = arith.constant 0 : i32
    %c0_i32_2 = arith.constant 0 : i32
    return %c0_i32, %c0_i32_0, %c0_i32_1 : i32, i32, i32
  }
}

module attributes {stable_mosaic.version = 11 : i64} {
  func.func @_fused_conv_bn_act_kernel(%arg0: i32, %arg1: memref<1x8x72xbf16, #tpu.memory_space<vmem>>, %arg2: memref<1x72x32xbf16, #tpu.memory_space<vmem>>, %arg3: memref<8x1xf32, #tpu.memory_space<vmem>>, %arg4: memref<8x1xf32, #tpu.memory_space<vmem>>, %arg5: memref<8x1xf32, #tpu.memory_space<vmem>>, %arg6: memref<1x8x32xbf16, #tpu.memory_space<vmem>>) attributes {dimension_semantics = [#tpu.dimension_semantics<arbitrary>], iteration_bounds = array<i64: 1>, scalar_prefetch = 0 : i64, scratch_operands = 0 : i64, tpu.core_type = #tpu.core_type<tc>, window_params = [{pipeline_mode = #tpu.pipeline_mode<synchronous>, transform_indices = @transform_0, window_bounds = array<i64: 1, 8, 72>}, {pipeline_mode = #tpu.pipeline_mode<synchronous>, transform_indices = @transform_1, window_bounds = array<i64: 1, 72, 32>}, {pipeline_mode = #tpu.pipeline_mode<synchronous>, transform_indices = @transform_2, window_bounds = array<i64: 8, 1>}, {pipeline_mode = #tpu.pipeline_mode<synchronous>, transform_indices = @transform_3, window_bounds = array<i64: 8, 1>}, {pipeline_mode = #tpu.pipeline_mode<synchronous>, transform_indices = @transform_4, window_bounds = array<i64: 8, 1>}, {pipeline_mode = #tpu.pipeline_mode<synchronous>, transform_indices = @transform_5, window_bounds = array<i64: 1, 8, 32>}]} {
    %c0 = arith.constant 0 : index
    %c0_0 = arith.constant 0 : index
    %0 = vector.load %arg3[%c0, %c0_0] : memref<8x1xf32, #tpu.memory_space<vmem>>, vector<8x1xf32>
    %c0_1 = arith.constant 0 : index
    %c0_2 = arith.constant 0 : index
    %c0_3 = arith.constant 0 : index
    %1 = vector.load %arg1[%c0_1, %c0_2, %c0_3] : memref<1x8x72xbf16, #tpu.memory_space<vmem>>, vector<1x8x72xbf16>
    %2 = vector.shape_cast %1 : vector<1x8x72xbf16> to vector<8x72xbf16>
    %c0_4 = arith.constant 0 : index
    %c0_5 = arith.constant 0 : index
    %c0_6 = arith.constant 0 : index
    %3 = vector.load %arg2[%c0_4, %c0_5, %c0_6] : memref<1x72x32xbf16, #tpu.memory_space<vmem>>, vector<1x72x32xbf16>
    %4 = vector.shape_cast %3 : vector<1x72x32xbf16> to vector<72x32xbf16>
    %cst = arith.constant dense<0.000000e+00> : vector<8x32xf32>
    %5 = tpu.matmul %2, %4, %cst {dimension_numbers = #tpu.dot_dimension_numbers<[1], [0], [0], [1], [0, 0, 1, 1], [], []>} : vector<8x72xbf16>, vector<72x32xbf16>, vector<8x32xf32> -> vector<8x32xf32>
    %6 = vector.broadcast %0 : vector<8x1xf32> to vector<8x32xf32>
    %7 = arith.addf %5, %6 : vector<8x32xf32>
    %cst_7 = arith.constant dense<0.000000e+00> : vector<8xf32>
    %8 = vector.multi_reduction <add>, %7, %cst_7 [1] : vector<8x32xf32> to vector<8xf32>
    %9 = vector.shape_cast %8 : vector<8xf32> to vector<8x1xf32>
    %10 = arith.mulf %7, %7 : vector<8x32xf32>
    %cst_8 = arith.constant dense<0.000000e+00> : vector<8xf32>
    %11 = vector.multi_reduction <add>, %10, %cst_8 [1] : vector<8x32xf32> to vector<8xf32>
    %12 = vector.shape_cast %11 : vector<8xf32> to vector<8x1xf32>
    %cst_9 = arith.constant 3.125000e-02 : f32
    %13 = vector.broadcast %cst_9 : f32 to vector<8x1xf32>
    %14 = arith.mulf %9, %13 : vector<8x1xf32>
    %cst_10 = arith.constant 3.125000e-02 : f32
    %15 = vector.broadcast %cst_10 : f32 to vector<8x1xf32>
    %16 = arith.mulf %12, %15 : vector<8x1xf32>
    %17 = arith.mulf %14, %14 : vector<8x1xf32>
    %18 = arith.subf %16, %17 : vector<8x1xf32>
    %cst_11 = arith.constant 0.000000e+00 : f32
    %19 = vector.broadcast %cst_11 : f32 to vector<8x1xf32>
    %20 = arith.maximumf %18, %19 : vector<8x1xf32>
    %c0_12 = arith.constant 0 : index
    %c0_13 = arith.constant 0 : index
    %21 = vector.load %arg4[%c0_12, %c0_13] : memref<8x1xf32, #tpu.memory_space<vmem>>, vector<8x1xf32>
    %cst_14 = arith.constant 9.99999974E-6 : f32
    %22 = vector.broadcast %cst_14 : f32 to vector<8x1xf32>
    %23 = arith.addf %20, %22 : vector<8x1xf32>
    %24 = math.rsqrt %23 : vector<8x1xf32>
    %25 = arith.mulf %21, %24 : vector<8x1xf32>
    %c0_15 = arith.constant 0 : index
    %c0_16 = arith.constant 0 : index
    %26 = vector.load %arg5[%c0_15, %c0_16] : memref<8x1xf32, #tpu.memory_space<vmem>>, vector<8x1xf32>
    %27 = arith.mulf %14, %25 : vector<8x1xf32>
    %28 = arith.subf %26, %27 : vector<8x1xf32>
    %29 = vector.broadcast %25 : vector<8x1xf32> to vector<8x32xf32>
    %30 = arith.mulf %7, %29 : vector<8x32xf32>
    %31 = vector.broadcast %28 : vector<8x1xf32> to vector<8x32xf32>
    %32 = arith.addf %30, %31 : vector<8x32xf32>
    %cst_17 = arith.constant 0.000000e+00 : f32
    %33 = vector.broadcast %cst_17 : f32 to vector<8x32xf32>
    %34 = arith.cmpf oge, %32, %33 : vector<8x32xf32>
    %cst_18 = arith.constant 0.000000e+00 : f32
    %35 = vector.broadcast %cst_18 : f32 to vector<8x32xf32>
    %36 = arith.mulf %35, %32 : vector<8x32xf32>
    %37 = arith.select %34, %32, %36 : vector<8x32xi1>, vector<8x32xf32>
    %38 = arith.truncf %37 : vector<8x32xf32> to vector<8x32xbf16>
    %c0_19 = arith.constant 0 : index
    %c0_20 = arith.constant 0 : index
    %c0_21 = arith.constant 0 : index
    %39 = vector.load %arg6[%c0_19, %c0_20, %c0_21] : memref<1x8x32xbf16, #tpu.memory_space<vmem>>, vector<1x8x32xbf16>
    %40 = vector.shape_cast %39 : vector<1x8x32xbf16> to vector<8x32xbf16>
    %41 = vector.shape_cast %38 : vector<8x32xbf16> to vector<1x8x32xbf16>
    tpu.vector_store %arg6[%c0_19, %c0_20, %c0_21], %41 {strides = array<i32>} : memref<1x8x32xbf16, #tpu.memory_space<vmem>>, vector<1x8x32xbf16>,
    return
  }
  func.func @transform_0(%arg0: i32) -> (i32, i32, i32) {
    %c0_i32 = arith.constant 0 : i32
    %c0_i32_0 = arith.constant 0 : i32
    %c0_i32_1 = arith.constant 0 : i32
    %c0_i32_2 = arith.constant 0 : i32
    return %c0_i32, %c0_i32_0, %c0_i32_1 : i32, i32, i32
  }
  func.func @transform_1(%arg0: i32) -> (i32, i32, i32) {
    %c0_i32 = arith.constant 0 : i32
    %c0_i32_0 = arith.constant 0 : i32
    %c0_i32_1 = arith.constant 0 : i32
    %c0_i32_2 = arith.constant 0 : i32
    return %c0_i32, %c0_i32_0, %c0_i32_1 : i32, i32, i32
  }
  func.func @transform_2(%arg0: i32) -> (i32, i32) {
    %c0_i32 = arith.constant 0 : i32
    %c0_i32_0 = arith.constant 0 : i32
    %c0_i32_1 = arith.constant 0 : i32
    return %c0_i32, %c0_i32_0 : i32, i32
  }
  func.func @transform_3(%arg0: i32) -> (i32, i32) {
    %c0_i32 = arith.constant 0 : i32
    %c0_i32_0 = arith.constant 0 : i32
    %c0_i32_1 = arith.constant 0 : i32
    return %c0_i32, %c0_i32_0 : i32, i32
  }
  func.func @transform_4(%arg0: i32) -> (i32, i32) {
    %c0_i32 = arith.constant 0 : i32
    %c0_i32_0 = arith.constant 0 : i32
    %c0_i32_1 = arith.constant 0 : i32
    return %c0_i32, %c0_i32_0 : i32, i32
  }
  func.func @transform_5(%arg0: i32) -> (i32, i32, i32) {
    %c0_i32 = arith.constant 0 : i32
    %c0_i32_0 = arith.constant 0 : i32
    %c0_i32_1 = arith.constant 0 : i32
    %c0_i32_2 = arith.constant 0 : i32
    return %c0_i32, %c0_i32_0, %c0_i32_1 : i32, i32, i32
  }
}

module attributes {stable_mosaic.version = 11 : i64} {
  func.func @_fused_conv_bn_act_kernel(%arg0: i32, %arg1: memref<1x4x144xbf16, #tpu.memory_space<vmem>>, %arg2: memref<1x144x32xbf16, #tpu.memory_space<vmem>>, %arg3: memref<4x1xf32, #tpu.memory_space<vmem>>, %arg4: memref<4x1xf32, #tpu.memory_space<vmem>>, %arg5: memref<4x1xf32, #tpu.memory_space<vmem>>, %arg6: memref<1x4x32xbf16, #tpu.memory_space<vmem>>) attributes {dimension_semantics = [#tpu.dimension_semantics<arbitrary>], iteration_bounds = array<i64: 1>, scalar_prefetch = 0 : i64, scratch_operands = 0 : i64, tpu.core_type = #tpu.core_type<tc>, window_params = [{pipeline_mode = #tpu.pipeline_mode<synchronous>, transform_indices = @transform_0, window_bounds = array<i64: 1, 4, 144>}, {pipeline_mode = #tpu.pipeline_mode<synchronous>, transform_indices = @transform_1, window_bounds = array<i64: 1, 144, 32>}, {pipeline_mode = #tpu.pipeline_mode<synchronous>, transform_indices = @transform_2, window_bounds = array<i64: 4, 1>}, {pipeline_mode = #tpu.pipeline_mode<synchronous>, transform_indices = @transform_3, window_bounds = array<i64: 4, 1>}, {pipeline_mode = #tpu.pipeline_mode<synchronous>, transform_indices = @transform_4, window_bounds = array<i64: 4, 1>}, {pipeline_mode = #tpu.pipeline_mode<synchronous>, transform_indices = @transform_5, window_bounds = array<i64: 1, 4, 32>}]} {
    %c0 = arith.constant 0 : index
    %c0_0 = arith.constant 0 : index
    %0 = vector.load %arg3[%c0, %c0_0] : memref<4x1xf32, #tpu.memory_space<vmem>>, vector<4x1xf32>
    %c0_1 = arith.constant 0 : index
    %c0_2 = arith.constant 0 : index
    %c0_3 = arith.constant 0 : index
    %1 = vector.load %arg1[%c0_1, %c0_2, %c0_3] : memref<1x4x144xbf16, #tpu.memory_space<vmem>>, vector<1x4x144xbf16>
    %2 = vector.shape_cast %1 : vector<1x4x144xbf16> to vector<4x144xbf16>
    %c0_4 = arith.constant 0 : index
    %c0_5 = arith.constant 0 : index
    %c0_6 = arith.constant 0 : index
    %3 = vector.load %arg2[%c0_4, %c0_5, %c0_6] : memref<1x144x32xbf16, #tpu.memory_space<vmem>>, vector<1x144x32xbf16>
    %4 = vector.shape_cast %3 : vector<1x144x32xbf16> to vector<144x32xbf16>
    %cst = arith.constant dense<0.000000e+00> : vector<4x32xf32>
    %5 = tpu.matmul %2, %4, %cst {dimension_numbers = #tpu.dot_dimension_numbers<[1], [0], [0], [1], [0, 0, 1, 1], [], []>} : vector<4x144xbf16>, vector<144x32xbf16>, vector<4x32xf32> -> vector<4x32xf32>
    %6 = vector.broadcast %0 : vector<4x1xf32> to vector<4x32xf32>
    %7 = arith.addf %5, %6 : vector<4x32xf32>
    %cst_7 = arith.constant dense<0.000000e+00> : vector<4xf32>
    %8 = vector.multi_reduction <add>, %7, %cst_7 [1] : vector<4x32xf32> to vector<4xf32>
    %9 = vector.shape_cast %8 : vector<4xf32> to vector<4x1xf32>
    %10 = arith.mulf %7, %7 : vector<4x32xf32>
    %cst_8 = arith.constant dense<0.000000e+00> : vector<4xf32>
    %11 = vector.multi_reduction <add>, %10, %cst_8 [1] : vector<4x32xf32> to vector<4xf32>
    %12 = vector.shape_cast %11 : vector<4xf32> to vector<4x1xf32>
    %cst_9 = arith.constant 3.125000e-02 : f32
    %13 = vector.broadcast %cst_9 : f32 to vector<4x1xf32>
    %14 = arith.mulf %9, %13 : vector<4x1xf32>
    %cst_10 = arith.constant 3.125000e-02 : f32
    %15 = vector.broadcast %cst_10 : f32 to vector<4x1xf32>
    %16 = arith.mulf %12, %15 : vector<4x1xf32>
    %17 = arith.mulf %14, %14 : vector<4x1xf32>
    %18 = arith.subf %16, %17 : vector<4x1xf32>
    %cst_11 = arith.constant 0.000000e+00 : f32
    %19 = vector.broadcast %cst_11 : f32 to vector<4x1xf32>
    %20 = arith.maximumf %18, %19 : vector<4x1xf32>
    %c0_12 = arith.constant 0 : index
    %c0_13 = arith.constant 0 : index
    %21 = vector.load %arg4[%c0_12, %c0_13] : memref<4x1xf32, #tpu.memory_space<vmem>>, vector<4x1xf32>
    %cst_14 = arith.constant 9.99999974E-6 : f32
    %22 = vector.broadcast %cst_14 : f32 to vector<4x1xf32>
    %23 = arith.addf %20, %22 : vector<4x1xf32>
    %24 = math.rsqrt %23 : vector<4x1xf32>
    %25 = arith.mulf %21, %24 : vector<4x1xf32>
    %c0_15 = arith.constant 0 : index
    %c0_16 = arith.constant 0 : index
    %26 = vector.load %arg5[%c0_15, %c0_16] : memref<4x1xf32, #tpu.memory_space<vmem>>, vector<4x1xf32>
    %27 = arith.mulf %14, %25 : vector<4x1xf32>
    %28 = arith.subf %26, %27 : vector<4x1xf32>
    %29 = vector.broadcast %25 : vector<4x1xf32> to vector<4x32xf32>
    %30 = arith.mulf %7, %29 : vector<4x32xf32>
    %31 = vector.broadcast %28 : vector<4x1xf32> to vector<4x32xf32>
    %32 = arith.addf %30, %31 : vector<4x32xf32>
    %cst_17 = arith.constant 0.000000e+00 : f32
    %33 = vector.broadcast %cst_17 : f32 to vector<4x32xf32>
    %34 = arith.cmpf oge, %32, %33 : vector<4x32xf32>
    %cst_18 = arith.constant 0.000000e+00 : f32
    %35 = vector.broadcast %cst_18 : f32 to vector<4x32xf32>
    %36 = arith.mulf %35, %32 : vector<4x32xf32>
    %37 = arith.select %34, %32, %36 : vector<4x32xi1>, vector<4x32xf32>
    %38 = arith.truncf %37 : vector<4x32xf32> to vector<4x32xbf16>
    %c0_19 = arith.constant 0 : index
    %c0_20 = arith.constant 0 : index
    %c0_21 = arith.constant 0 : index
    %39 = vector.load %arg6[%c0_19, %c0_20, %c0_21] : memref<1x4x32xbf16, #tpu.memory_space<vmem>>, vector<1x4x32xbf16>
    %40 = vector.shape_cast %39 : vector<1x4x32xbf16> to vector<4x32xbf16>
    %41 = vector.shape_cast %38 : vector<4x32xbf16> to vector<1x4x32xbf16>
    tpu.vector_store %arg6[%c0_19, %c0_20, %c0_21], %41 {strides = array<i32>} : memref<1x4x32xbf16, #tpu.memory_space<vmem>>, vector<1x4x32xbf16>,
    return
  }
  func.func @transform_0(%arg0: i32) -> (i32, i32, i32) {
    %c0_i32 = arith.constant 0 : i32
    %c0_i32_0 = arith.constant 0 : i32
    %c0_i32_1 = arith.constant 0 : i32
    %c0_i32_2 = arith.constant 0 : i32
    return %c0_i32, %c0_i32_0, %c0_i32_1 : i32, i32, i32
  }
  func.func @transform_1(%arg0: i32) -> (i32, i32, i32) {
    %c0_i32 = arith.constant 0 : i32
    %c0_i32_0 = arith.constant 0 : i32
    %c0_i32_1 = arith.constant 0 : i32
    %c0_i32_2 = arith.constant 0 : i32
    return %c0_i32, %c0_i32_0, %c0_i32_1 : i32, i32, i32
  }
  func.func @transform_2(%arg0: i32) -> (i32, i32) {
    %c0_i32 = arith.constant 0 : i32
    %c0_i32_0 = arith.constant 0 : i32
    %c0_i32_1 = arith.constant 0 : i32
    return %c0_i32, %c0_i32_0 : i32, i32
  }
  func.func @transform_3(%arg0: i32) -> (i32, i32) {
    %c0_i32 = arith.constant 0 : i32
    %c0_i32_0 = arith.constant 0 : i32
    %c0_i32_1 = arith.constant 0 : i32
    return %c0_i32, %c0_i32_0 : i32, i32
  }
  func.func @transform_4(%arg0: i32) -> (i32, i32) {
    %c0_i32 = arith.constant 0 : i32
    %c0_i32_0 = arith.constant 0 : i32
    %c0_i32_1 = arith.constant 0 : i32
    return %c0_i32, %c0_i32_0 : i32, i32
  }
  func.func @transform_5(%arg0: i32) -> (i32, i32, i32) {
    %c0_i32 = arith.constant 0 : i32
    %c0_i32_0 = arith.constant 0 : i32
    %c0_i32_1 = arith.constant 0 : i32
    %c0_i32_2 = arith.constant 0 : i32
    return %c0_i32, %c0_i32_0, %c0_i32_1 : i32, i32, i32
  }
}

</mosaic_0001>

<llo_original>
// kernel: squeeze.12
$region0: #{squeeze.12}
  %s0 = inlined_call_operand.vmem [shape: bf16[1,4,512], index: 0, kind: input, shape index: {}]
  %s1 = inlined_call_operand.vmem [shape: bf16[4,2,16,16], index: 1, kind: output, shape index: {}]
  $region1: #{squeeze.12} parent=0
    #allocation0 [shape = 'u8[65536]{0}', space=vmem, size = 0x10000, scoped, tag = 'scoped mem for output reshape']
    #allocation1 [shape = 'u8[16384]{0}', space=vmem, size = 0x4000, scoped, tag = 'scoped mem for input reshape']
    %s3 = smul.u32 2, 2
    %s4 = sshll.u32 1, %s3
    %s5 = ssub.s32 %s4, 1
    %s6 = smul.addr 2, 3
    %s7 = scalar_lea.vmem %s0, %s6
    %s8 = sshrl.u32 %s5, 1
    %s9 = sor.u32 %s5, %s8
    %s10 = sand.u32 %s9, 85
    %s11 = sshrl.u32 %s10, 1
    %s12 = sor.u32 %s10, %s11
    %s13 = sand.u32 51, %s12
    %s14 = sshrl.u32 %s13, 2
    %s15 = sor.u32 %s13, %s14
    %s16 = sand.u32 15, %s15
    %v17 = vld [vmem:[%s7] sm:%s16]
    %v18 = vunpack.c.l.bf16 %v17
    %v19 = vunpack.c.h.bf16 %v17
    %s20 = scalar_lea.vmem [#allocation1], 24
    %21 = vst [vmem:[%s20] sm:%s5] %v18
    %s22 = smul.addr 2, 2
    %s23 = scalar_lea.vmem %s0, %s22
    %s24 = sshrl.u32 %s5, 1
    %s25 = sor.u32 %s5, %s24
    %s26 = sand.u32 %s25, 85
    %s27 = sshrl.u32 %s26, 1
    %s28 = sor.u32 %s26, %s27
    %s29 = sand.u32 51, %s28
    %s30 = sshrl.u32 %s29, 2
    %s31 = sor.u32 %s29, %s30
    %s32 = sand.u32 15, %s31
    %v33 = vld [vmem:[%s23] sm:%s32]
    %v34 = vunpack.c.l.bf16 %v33
    %v35 = vunpack.c.h.bf16 %v33
    %s36 = scalar_lea.vmem [#allocation1], 16
    %37 = vst [vmem:[%s36] sm:%s5] %v34
    %s38 = scalar_lea.vmem %s0, 2
    %s39 = sshrl.u32 %s5, 1
    %s40 = sor.u32 %s5, %s39
    %s41 = sand.u32 %s40, 85
    %s42 = sshrl.u32 %s41, 1
    %s43 = sor.u32 %s41, %s42
    %s44 = sand.u32 51, %s43
    %s45 = sshrl.u32 %s44, 2
    %s46 = sor.u32 %s44, %s45
    %s47 = sand.u32 15, %s46
    %v48 = vld [vmem:[%s38] sm:%s47]
    %v49 = vunpack.c.l.bf16 %v48
    %v50 = vunpack.c.h.bf16 %v48
    %s51 = scalar_lea.vmem [#allocation1], 8
    %52 = vst [vmem:[%s51] sm:%s5] %v49
    %s53 = sshrl.u32 %s5, 1
    %s54 = sor.u32 %s5, %s53
    %s55 = sand.u32 %s54, 85
    %s56 = sshrl.u32 %s55, 1
    %s57 = sor.u32 %s55, %s56
    %s58 = sand.u32 51, %s57
    %s59 = sshrl.u32 %s58, 2
    %s60 = sor.u32 %s58, %s59
    %s61 = sand.u32 15, %s60
    %v62 = vld [vmem:[%s0] sm:%s61]
    %v63 = vunpack.c.l.bf16 %v62
    %v64 = vunpack.c.h.bf16 %v62
    %65 = vst [vmem:[#allocation1] sm:%s5] %v63
    %v66 = vld [vmem:[#allocation1] sm:$0xf]
    %vm67 = vcmask 130048
    %68 = vst.msk [vmem:[#allocation0] sm:$0x1] %vm67, %v66
    %s69 = scalar_lea.vmem [#allocation0], 31
    %70 = vst.msk [vmem:[%s69] sm:$0x2] %vm67, %v66
    %s71 = scalar_lea.vmem [#allocation0], 62
    %72 = vst.msk [vmem:[%s71] sm:$0x4] %vm67, %v66
    %s73 = scalar_lea.vmem [#allocation0], 93
    %74 = vst.msk [vmem:[%s73] sm:$0x8] %vm67, %v66
    %s75 = scalar_lea.vmem [#allocation1], 8
    %v76 = vld [vmem:[%s75] sm:$0xf]
    %vm77 = vcmask 130048
    %s78 = scalar_lea.vmem [#allocation0], 8
    %79 = vst.msk [vmem:[%s78] sm:$0x1] %vm77, %v76
    %s80 = scalar_lea.vmem [#allocation0], 39
    %81 = vst.msk [vmem:[%s80] sm:$0x2] %vm77, %v76
    %s82 = scalar_lea.vmem [#allocation0], 70
    %83 = vst.msk [vmem:[%s82] sm:$0x4] %vm77, %v76
    %s84 = scalar_lea.vmem [#allocation0], 101
    %85 = vst.msk [vmem:[%s84] sm:$0x8] %vm77, %v76
    %s86 = scalar_lea.vmem [#allocation1], 16
    %v87 = vld [vmem:[%s86] sm:$0xf]
    %vm88 = vcmask 130048
    %s89 = scalar_lea.vmem [#allocation0], 16
    %90 = vst.msk [vmem:[%s89] sm:$0x1] %vm88, %v87
    %s91 = scalar_lea.vmem [#allocation0], 47
    %92 = vst.msk [vmem:[%s91] sm:$0x2] %vm88, %v87
    %s93 = scalar_lea.vmem [#allocation0], 78
    %94 = vst.msk [vmem:[%s93] sm:$0x4] %vm88, %v87
    %s95 = scalar_lea.vmem [#allocation0], 109
    %96 = vst.msk [vmem:[%s95] sm:$0x8] %vm88, %v87
    %s97 = scalar_lea.vmem [#allocation1], 24
    %v98 = vld [vmem:[%s97] sm:$0xf]
    %vm99 = vcmask 130048
    %s100 = scalar_lea.vmem [#allocation0], 24
    %101 = vst.msk [vmem:[%s100] sm:$0x1] %vm99, %v98
    %s102 = scalar_lea.vmem [#allocation0], 55
    %103 = vst.msk [vmem:[%s102] sm:$0x2] %vm99, %v98
    %s104 = scalar_lea.vmem [#allocation0], 86
    %105 = vst.msk [vmem:[%s104] sm:$0x4] %vm99, %v98
    %s106 = scalar_lea.vmem [#allocation0], 117
    %107 = vst.msk [vmem:[%s106] sm:$0x8] %vm99, %v98
    %v108 = vld [vmem:[#allocation1] ss:$8 sm:$0xf]
    %s109 = scalar_lea.vmem [#allocation1], 4294967265
    %v110 = vld [vmem:[%s109] ss:$8 sm:$0xf0]
    %vm111 = vcmask 1047556
    %v112 = vsel %vm111, %v110, %v108
    %113 = vrot.lane.b32.xlu0 %v112, 112
    %v114 = vpop.permute.xlu0 %113
    %vm115 = vcmask 130048
    %s116 = scalar_lea.vmem [#allocation0], 1
    %117 = vst.msk [vmem:[%s116] ss:$8 sm:$0xf] %vm115, %v114
    %s118 = scalar_lea.vmem [#allocation0], 1
    %119 = vst.msk [vmem:[%s118] ss:$8 sm:$0xf0] %vm115, %v114
    %s120 = scalar_lea.vmem [#allocation1], 2
    %v121 = vld [vmem:[%s120] ss:$8 sm:$0xf]
    %s122 = scalar_lea.vmem [#allocation1], 4294967267
    %v123 = vld [vmem:[%s122] ss:$8 sm:$0xf0]
    %vm124 = vcmask 1047556
    %v125 = vsel %vm124, %v123, %v121
    %126 = vrot.lane.b32.xlu0 %v125, 112
    %v127 = vpop.permute.xlu0 %126
    %vm128 = vcmask 130048
    %s129 = scalar_lea.vmem [#allocation0], 65
    %130 = vst.msk [vmem:[%s129] ss:$8 sm:$0xf] %vm128, %v127
    %s131 = scalar_lea.vmem [#allocation0], 65
    %132 = vst.msk [vmem:[%s131] ss:$8 sm:$0xf0] %vm128, %v127
    %v133 = vld [vmem:[#allocation1] ss:$8 sm:$0xf]
    %s134 = scalar_lea.vmem [#allocation1], 4294967265
    %v135 = vld [vmem:[%s134] ss:$8 sm:$0xf0]
    %vm136 = vcmask 1047556
    %v137 = vsel %vm136, %v135, %v133
    %138 = vrot.lane.b32.xlu0 %v137, 96
    %v139 = vpop.permute.xlu0 %138
    %vm140 = vcmask 130048
    %s141 = scalar_lea.vmem [#allocation0], 2
    %142 = vst.msk [vmem:[%s141] ss:$8 sm:$0xf] %vm140, %v139
    %s143 = scalar_lea.vmem [#allocation0], 2
    %144 = vst.msk [vmem:[%s143] ss:$8 sm:$0xf0] %vm140, %v139
    %s145 = scalar_lea.vmem [#allocation1], 2
    %v146 = vld [vmem:[%s145] ss:$8 sm:$0xf]
    %s147 = scalar_lea.vmem [#allocation1], 4294967267
    %v148 = vld [vmem:[%s147] ss:$8 sm:$0xf0]
    %vm149 = vcmask 1047556
    %v150 = vsel %vm149, %v148, %v146
    %151 = vrot.lane.b32.xlu0 %v150, 96
    %v152 = vpop.permute.xlu0 %151
    %vm153 = vcmask 130048
    %s154 = scalar_lea.vmem [#allocation0], 66
    %155 = vst.msk [vmem:[%s154] ss:$8 sm:$0xf] %vm153, %v152
    %s156 = scalar_lea.vmem [#allocation0], 66
    %157 = vst.msk [vmem:[%s156] ss:$8 sm:$0xf0] %vm153, %v152
    %v158 = vld [vmem:[#allocation1] ss:$8 sm:$0xf]
    %s159 = scalar_lea.vmem [#allocation1], 4294967265
    %v160 = vld [vmem:[%s159] ss:$8 sm:$0xf0]
    %vm161 = vcmask 1047556
    %v162 = vsel %vm161, %v160, %v158
    %163 = vrot.lane.b32.xlu0 %v162, 80
    %v164 = vpop.permute.xlu0 %163
    %vm165 = vcmask 130048
    %s166 = scalar_lea.vmem [#allocation0], 3
    %167 = vst.msk [vmem:[%s166] ss:$8 sm:$0xf] %vm165, %v164
    %s168 = scalar_lea.vmem [#allocation0], 3
    %169 = vst.msk [vmem:[%s168] ss:$8 sm:$0xf0] %vm165, %v164
    %s170 = scalar_lea.vmem [#allocation1], 2
    %v171 = vld [vmem:[%s170] ss:$8 sm:$0xf]
    %s172 = scalar_lea.vmem [#allocation1], 4294967267
    %v173 = vld [vmem:[%s172] ss:$8 sm:$0xf0]
    %vm174 = vcmask 1047556
    %v175 = vsel %vm174, %v173, %v171
    %176 = vrot.lane.b32.xlu0 %v175, 80
    %v177 = vpop.permute.xlu0 %176
    %vm178 = vcmask 130048
    %s179 = scalar_lea.vmem [#allocation0], 67
    %180 = vst.msk [vmem:[%s179] ss:$8 sm:$0xf] %vm178, %v177
    %s181 = scalar_lea.vmem [#allocation0], 67
    %182 = vst.msk [vmem:[%s181] ss:$8 sm:$0xf0] %vm178, %v177
    %v183 = vld [vmem:[#allocation1] ss:$8 sm:$0xf]
    %s184 = scalar_lea.vmem [#allocation1], 4294967265
    %v185 = vld [vmem:[%s184] ss:$8 sm:$0xf0]
    %vm186 = vcmask 1047556
    %v187 = vsel %vm186, %v185, %v183
    %188 = vrot.lane.b32.xlu0 %v187, 64
    %v189 = vpop.permute.xlu0 %188
    %vm190 = vcmask 130048
    %s191 = scalar_lea.vmem [#allocation0], 4
    %192 = vst.msk [vmem:[%s191] ss:$8 sm:$0xf] %vm190, %v189
    %s193 = scalar_lea.vmem [#allocation0], 4
    %194 = vst.msk [vmem:[%s193] ss:$8 sm:$0xf0] %vm190, %v189
    %s195 = scalar_lea.vmem [#allocation1], 2
    %v196 = vld [vmem:[%s195] ss:$8 sm:$0xf]
    %s197 = scalar_lea.vmem [#allocation1], 4294967267
    %v198 = vld [vmem:[%s197] ss:$8 sm:$0xf0]
    %vm199 = vcmask 1047556
    %v200 = vsel %vm199, %v198, %v196
    %201 = vrot.lane.b32.xlu0 %v200, 64
    %v202 = vpop.permute.xlu0 %201
    %vm203 = vcmask 130048
    %s204 = scalar_lea.vmem [#allocation0], 68
    %205 = vst.msk [vmem:[%s204] ss:$8 sm:$0xf] %vm203, %v202
    %s206 = scalar_lea.vmem [#allocation0], 68
    %207 = vst.msk [vmem:[%s206] ss:$8 sm:$0xf0] %vm203, %v202
    %v208 = vld [vmem:[#allocation1] ss:$8 sm:$0xf]
    %s209 = scalar_lea.vmem [#allocation1], 4294967265
    %v210 = vld [vmem:[%s209] ss:$8 sm:$0xf0]
    %vm211 = vcmask 1047556
    %v212 = vsel %vm211, %v210, %v208
    %213 = vrot.lane.b32.xlu0 %v212, 48
    %v214 = vpop.permute.xlu0 %213
    %vm215 = vcmask 130048
    %s216 = scalar_lea.vmem [#allocation0], 5
    %217 = vst.msk [vmem:[%s216] ss:$8 sm:$0xf] %vm215, %v214
    %s218 = scalar_lea.vmem [#allocation0], 5
    %219 = vst.msk [vmem:[%s218] ss:$8 sm:$0xf0] %vm215, %v214
    %s220 = scalar_lea.vmem [#allocation1], 2
    %v221 = vld [vmem:[%s220] ss:$8 sm:$0xf]
    %s222 = scalar_lea.vmem [#allocation1], 4294967267
    %v223 = vld [vmem:[%s222] ss:$8 sm:$0xf0]
    %vm224 = vcmask 1047556
    %v225 = vsel %vm224, %v223, %v221
    %226 = vrot.lane.b32.xlu0 %v225, 48
    %v227 = vpop.permute.xlu0 %226
    %vm228 = vcmask 130048
    %s229 = scalar_lea.vmem [#allocation0], 69
    %230 = vst.msk [vmem:[%s229] ss:$8 sm:$0xf] %vm228, %v227
    %s231 = scalar_lea.vmem [#allocation0], 69
    %232 = vst.msk [vmem:[%s231] ss:$8 sm:$0xf0] %vm228, %v227
    %v233 = vld [vmem:[#allocation1] ss:$8 sm:$0xf]
    %s234 = scalar_lea.vmem [#allocation1], 4294967265
    %v235 = vld [vmem:[%s234] ss:$8 sm:$0xf0]
    %vm236 = vcmask 1047556
    %v237 = vsel %vm236, %v235, %v233
    %238 = vrot.lane.b32.xlu0 %v237, 32
    %v239 = vpop.permute.xlu0 %238
    %vm240 = vcmask 130048
    %s241 = scalar_lea.vmem [#allocation0], 6
    %242 = vst.msk [vmem:[%s241] ss:$8 sm:$0xf] %vm240, %v239
    %s243 = scalar_lea.vmem [#allocation0], 6
    %244 = vst.msk [vmem:[%s243] ss:$8 sm:$0xf0] %vm240, %v239
    %s245 = scalar_lea.vmem [#allocation1], 2
    %v246 = vld [vmem:[%s245] ss:$8 sm:$0xf]
    %s247 = scalar_lea.vmem [#allocation1], 4294967267
    %v248 = vld [vmem:[%s247] ss:$8 sm:$0xf0]
    %vm249 = vcmask 1047556
    %v250 = vsel %vm249, %v248, %v246
    %251 = vrot.lane.b32.xlu0 %v250, 32
    %v252 = vpop.permute.xlu0 %251
    %vm253 = vcmask 130048
    %s254 = scalar_lea.vmem [#allocation0], 70
    %255 = vst.msk [vmem:[%s254] ss:$8 sm:$0xf] %vm253, %v252
    %s256 = scalar_lea.vmem [#allocation0], 70
    %257 = vst.msk [vmem:[%s256] ss:$8 sm:$0xf0] %vm253, %v252
    %v258 = vld [vmem:[#allocation1] ss:$8 sm:$0xf]
    %s259 = scalar_lea.vmem [#allocation1], 4294967265
    %v260 = vld [vmem:[%s259] ss:$8 sm:$0xf0]
    %vm261 = vcmask 1047556
    %v262 = vsel %vm261, %v260, %v258
    %263 = vrot.lane.b32.xlu0 %v262, 16
    %v264 = vpop.permute.xlu0 %263
    %vm265 = vcmask 130048
    %s266 = scalar_lea.vmem [#allocation0], 7
    %267 = vst.msk [vmem:[%s266] ss:$8 sm:$0xf] %vm265, %v264
    %s268 = scalar_lea.vmem [#allocation0], 7
    %269 = vst.msk [vmem:[%s268] ss:$8 sm:$0xf0] %vm265, %v264
    %s270 = scalar_lea.vmem [#allocation1], 2
    %v271 = vld [vmem:[%s270] ss:$8 sm:$0xf]
    %s272 = scalar_lea.vmem [#allocation1], 4294967267
    %v273 = vld [vmem:[%s272] ss:$8 sm:$0xf0]
    %vm274 = vcmask 1047556
    %v275 = vsel %vm274, %v273, %v271
    %276 = vrot.lane.b32.xlu0 %v275, 16
    %v277 = vpop.permute.xlu0 %276
    %vm278 = vcmask 130048
    %s279 = scalar_lea.vmem [#allocation0], 71
    %280 = vst.msk [vmem:[%s279] ss:$8 sm:$0xf] %vm278, %v277
    %s281 = scalar_lea.vmem [#allocation0], 71
    %282 = vst.msk [vmem:[%s281] ss:$8 sm:$0xf0] %vm278, %v277
    %s284 = smul.u32 4, 2
    %s285 = sshll.u32 1, %s284
    %s286 = ssub.s32 %s285, 1
    %s287 = sshrl.u32 %s284, 1
    %v288 = vld [vmem:[#allocation0] sm:%s286]
    %v289 = vpack.c.bf16 0.0, %v288
    %s290 = sshll.u32 1, %s287
    %s291 = ssub.s32 %s290, 1
    %292 = vst [vmem:[%s1] sm:%s291] %v289
    %s293 = scalar_lea.vmem [#allocation0], 8
    %v294 = vld [vmem:[%s293] sm:%s286]
    %v295 = vpack.c.bf16 0.0, %v294
    %s296 = sshll.u32 1, %s287
    %s297 = ssub.s32 %s296, 1
    %s298 = scalar_lea.vmem %s1, 4
    %299 = vst [vmem:[%s298] sm:%s297] %v295
    %s300 = scalar_lea.vmem [#allocation0], 16
    %v301 = vld [vmem:[%s300] sm:%s286]
    %v302 = vpack.c.bf16 0.0, %v301
    %s303 = sshll.u32 1, %s287
    %s304 = ssub.s32 %s303, 1
    %s305 = smul.addr 4, 2
    %s306 = scalar_lea.vmem %s1, %s305
    %307 = vst [vmem:[%s306] sm:%s304] %v302
    %s308 = scalar_lea.vmem [#allocation0], 24
    %v309 = vld [vmem:[%s308] sm:%s286]
    %v310 = vpack.c.bf16 0.0, %v309
    %s311 = sshll.u32 1, %s287
    %s312 = ssub.s32 %s311, 1
    %s313 = smul.addr 4, 3
    %s314 = scalar_lea.vmem %s1, %s313
    %315 = vst [vmem:[%s314] sm:%s312] %v310
    %s316 = scalar_lea.vmem [#allocation0], 32
    %v317 = vld [vmem:[%s316] sm:%s286]
    %v318 = vpack.c.bf16 0.0, %v317
    %s319 = sshll.u32 1, %s287
    %s320 = ssub.s32 %s319, 1
    %s321 = smul.addr 4, 4
    %s322 = scalar_lea.vmem %s1, %s321
    %323 = vst [vmem:[%s322] sm:%s320] %v318
    %s324 = scalar_lea.vmem [#allocation0], 40
    %v325 = vld [vmem:[%s324] sm:%s286]
    %v326 = vpack.c.bf16 0.0, %v325
    %s327 = sshll.u32 1, %s287
    %s328 = ssub.s32 %s327, 1
    %s329 = smul.addr 4, 5
    %s330 = scalar_lea.vmem %s1, %s329
    %331 = vst [vmem:[%s330] sm:%s328] %v326
    %s332 = scalar_lea.vmem [#allocation0], 48
    %v333 = vld [vmem:[%s332] sm:%s286]
    %v334 = vpack.c.bf16 0.0, %v333
    %s335 = sshll.u32 1, %s287
    %s336 = ssub.s32 %s335, 1
    %s337 = smul.addr 4, 6
    %s338 = scalar_lea.vmem %s1, %s337
    %339 = vst [vmem:[%s338] sm:%s336] %v334
    %s340 = scalar_lea.vmem [#allocation0], 56
    %v341 = vld [vmem:[%s340] sm:%s286]
    %v342 = vpack.c.bf16 0.0, %v341
    %s343 = sshll.u32 1, %s287
    %s344 = ssub.s32 %s343, 1
    %s345 = smul.addr 4, 7
    %s346 = scalar_lea.vmem %s1, %s345
    %347 = vst [vmem:[%s346] sm:%s344] %v342
    %s348 = scalar_lea.vmem [#allocation0], 64
    %v349 = vld [vmem:[%s348] sm:%s286]
    %v350 = vpack.c.bf16 0.0, %v349
    %s351 = sshll.u32 1, %s287
    %s352 = ssub.s32 %s351, 1
    %s353 = smul.addr 4, 8
    %s354 = scalar_lea.vmem %s1, %s353
    %355 = vst [vmem:[%s354] sm:%s352] %v350
    %s356 = scalar_lea.vmem [#allocation0], 72
    %v357 = vld [vmem:[%s356] sm:%s286]
    %v358 = vpack.c.bf16 0.0, %v357
    %s359 = sshll.u32 1, %s287
    %s360 = ssub.s32 %s359, 1
    %s361 = smul.addr 4, 9
    %s362 = scalar_lea.vmem %s1, %s361
    %363 = vst [vmem:[%s362] sm:%s360] %v358
    %s364 = scalar_lea.vmem [#allocation0], 80
    %v365 = vld [vmem:[%s364] sm:%s286]
    %v366 = vpack.c.bf16 0.0, %v365
    %s367 = sshll.u32 1, %s287
    %s368 = ssub.s32 %s367, 1
    %s369 = smul.addr 4, 10
    %s370 = scalar_lea.vmem %s1, %s369
    %371 = vst [vmem:[%s370] sm:%s368] %v366
    %s372 = scalar_lea.vmem [#allocation0], 88
    %v373 = vld [vmem:[%s372] sm:%s286]
    %v374 = vpack.c.bf16 0.0, %v373
    %s375 = sshll.u32 1, %s287
    %s376 = ssub.s32 %s375, 1
    %s377 = smul.addr 4, 11
    %s378 = scalar_lea.vmem %s1, %s377
    %379 = vst [vmem:[%s378] sm:%s376] %v374
    %s380 = scalar_lea.vmem [#allocation0], 96
    %v381 = vld [vmem:[%s380] sm:%s286]
    %v382 = vpack.c.bf16 0.0, %v381
    %s383 = sshll.u32 1, %s287
    %s384 = ssub.s32 %s383, 1
    %s385 = smul.addr 4, 12
    %s386 = scalar_lea.vmem %s1, %s385
    %387 = vst [vmem:[%s386] sm:%s384] %v382
    %s388 = scalar_lea.vmem [#allocation0], 104
    %v389 = vld [vmem:[%s388] sm:%s286]
    %v390 = vpack.c.bf16 0.0, %v389
    %s391 = sshll.u32 1, %s287
    %s392 = ssub.s32 %s391, 1
    %s393 = smul.addr 4, 13
    %s394 = scalar_lea.vmem %s1, %s393
    %395 = vst [vmem:[%s394] sm:%s392] %v390
    %s396 = scalar_lea.vmem [#allocation0], 112
    %v397 = vld [vmem:[%s396] sm:%s286]
    %v398 = vpack.c.bf16 0.0, %v397
    %s399 = sshll.u32 1, %s287
    %s400 = ssub.s32 %s399, 1
    %s401 = smul.addr 4, 14
    %s402 = scalar_lea.vmem %s1, %s401
    %403 = vst [vmem:[%s402] sm:%s400] %v398
    %s404 = scalar_lea.vmem [#allocation0], 120
    %v405 = vld [vmem:[%s404] sm:%s286]
    %v406 = vpack.c.bf16 0.0, %v405
    %s407 = sshll.u32 1, %s287
    %s408 = ssub.s32 %s407, 1
    %s409 = smul.addr 4, 15
    %s410 = scalar_lea.vmem %s1, %s409
    %411 = vst [vmem:[%s410] sm:%s408] %v406

// kernel: _lambda_.14
$region0: #{_lambda_.14}
  #allocation0 [shape = 'u32[]', space=smem, size = 0x4, offset = 0x4, fixed_abs, tag = 'smem constant byte address 0x4 - core index']
  #allocation1 [shape = 'u32[144,128]{1,0:T(1,128)}', space=vmem, size = 0x12000, scoped, tag = 'internal scratch']
  %s0 = inlined_call_operand.vmem [shape: bf16[1,4,27], index: 0, kind: input, shape index: {}]
  %s1 = inlined_call_operand.vmem [shape: bf16[1,27,512], index: 1, kind: input, shape index: {}]
  %s2 = inlined_call_operand.vmem [shape: f32[4,1], index: 2, kind: input, shape index: {}]
  %s3 = inlined_call_operand.vmem [shape: f32[4,1], index: 3, kind: input, shape index: {}]
  %s4 = inlined_call_operand.vmem [shape: f32[4,1], index: 4, kind: input, shape index: {}]
  %s5 = inlined_call_operand.vmem [shape: bf16[1,4,512], index: 5, kind: output, shape index: {}]
  %s6 = sld [smem:[#allocation0]]
  $region30: #{_lambda_.14} parent=0
    _
  %s8 = ssub.s32 1, %s6
  %s9 = scalar_select 0, %s8, %s6
  // Predicated region
  $region2: #{_lambda_.14} parent=0 // pred_check
    _
  $region3: #{_lambda_.14} parent=0 // pred_check_branch
    %11 = sbr.rel (0) target = $region5
  $region4: #{_lambda_.14} parent=0 // pred_region
    _
  $region5: #{_lambda_.14} parent=0 // pred_fallthru
    _
  // Predicated region
  $region6: #{_lambda_.14} parent=0 // pred_check
    _
  $region7: #{_lambda_.14} parent=0 // pred_check_branch
    %13 = sbr.rel (0) target = $region9
  $region8: #{_lambda_.14} parent=0 // pred_region
    _
  $region9: #{_lambda_.14} parent=0 // pred_fallthru
    _
  // Predicated region
  $region10: #{_lambda_.14} parent=0 // pred_check
    _
  $region11: #{_lambda_.14} parent=0 // pred_check_branch
    %15 = sbr.rel (0) target = $region13
  $region12: #{_lambda_.14} parent=0 // pred_region
    _
  $region13: #{_lambda_.14} parent=0 // pred_fallthru
    _
  // Predicated region
  $region14: #{_lambda_.14} parent=0 // pred_check
    _
  $region15: #{_lambda_.14} parent=0 // pred_check_branch
    %17 = sbr.rel (0) target = $region17
  $region16: #{_lambda_.14} parent=0 // pred_region
    _
  $region17: #{_lambda_.14} parent=0 // pred_fallthru
    _
  // Predicated region
  $region18: #{_lambda_.14} parent=0 // pred_check
    _
  $region19: #{_lambda_.14} parent=0 // pred_check_branch
    %19 = sbr.rel (0) target = $region21
  $region20: #{_lambda_.14} parent=0 // pred_region
    _
  $region21: #{_lambda_.14} parent=0 // pred_fallthru
    _
  %v21 = vld [vmem:[%s2] sm:$0xf]
  %v22 = vld [vmem:[%s0] sm:$0x3]
  %v23 = vld [vmem:[%s1] sm:$0xff]
  %v24 = vld [vmem:[%s1 + $0x8] sm:$0xff]
  %v25 = vld [vmem:[%s1 + $0x10] sm:$0xff]
  %v26 = vld [vmem:[%s1 + $0x18] sm:$0xff]
  %v27 = vld [vmem:[%s1 + $0x20] sm:$0xff]
  %v28 = vld [vmem:[%s1 + $0x28] sm:$0xff]
  %v29 = vld [vmem:[%s1 + $0x30] sm:$0x33]
  %v30 = vld [vmem:[%s1 + $0x38] sm:$0x33]
  %32 = vset.pattern.permute.xlu0 0
  %33 = vperm.xlu0 %32, %v21
  %v34 = vpop.permute.xlu0 %33
  %v44 = vunpack.c.l.b16 %v23
  %v45 = vunpack.c.h.b16 %v23
  %v46 = vunpack.c.l.b16 %v24
  %v47 = vunpack.c.h.b16 %v24
  %v48 = vunpack.c.l.b16 %v25
  %v49 = vunpack.c.h.b16 %v25
  %v50 = vunpack.c.l.b16 %v26
  %v51 = vunpack.c.h.b16 %v26
  %v52 = vunpack.c.l.b16 %v27
  %v53 = vunpack.c.h.b16 %v27
  %v54 = vunpack.c.l.b16 %v28
  %v55 = vunpack.c.h.b16 %v28
  %v56 = vunpack.c.l.b16 %v29
  %v57 = vunpack.c.h.b16 %v29
  %v58 = vunpack.c.l.b16 %v30
  %v59 = vunpack.c.h.b16 %v30
  %v60 = vpack.c.b16 %v48, %v44
  %v61 = vpack.c.b16 %v49, %v45
  %v62 = vpack.c.b16 %v50, %v46
  %v63 = vpack.c.b16 %v51, %v47
  %v64 = vpack.c.b16 %v56, %v52
  %v65 = vpack.c.b16 %v57, %v53
  %v66 = vpack.c.b16 %v58, %v54
  %v67 = vpack.c.b16 %v59, %v55
  %vm72 = vcmask 220160
  %v74 = vsel %vm72, %v22, 0
  %vm76 = vcmask 1044480
  %vm77 = vcmask 1045504
  %v78 = vsel %vm76, 4294967295, 65535
  %v79 = vsel %vm77, %v78, 0
  %v81 = vand.u32 %v64, %v79
  %v84 = vand.u32 %v65, %v79
  %v87 = vand.u32 %v66, %v79
  %v90 = vand.u32 %v67, %v79
  %92 = vmatprep.subr.bf16.mxu0 0
  %93 = vmatpush1.bf16.msra.mxu0 0
  %94 = vmatprep.subr.bf16.mxu0 0
  %95 = vmatpush1.bf16.msra.mxu0 0
  %96 = vmatprep.subr.bf16.mxu0 0
  %97 = vmatpush1.bf16.msra.mxu0 0
  %98 = vmatprep.subr.bf16.mxu0 0
  %99 = vmatpush1.bf16.msra.mxu0 0
  %100 = vmatprep.subr.bf16.mxu0 0
  %101 = vmatpush1.bf16.msra.mxu0 0
  %102 = vmatprep.subr.bf16.mxu0 0
  %103 = vmatpush1.bf16.msra.mxu0 0
  %104 = vmatprep.subr.bf16.mxu0 %v84
  %105 = vmatpush1.bf16.msra.mxu0 %v81
  %106 = vmatprep.subr.bf16.mxu0 %v61
  %107 = vmatpush1.bf16.msra.mxu0 %v60
  %108 = vmatprep.subr.bf16.mxu0 0
  %109 = vmatpush2.bf16.msra.mxu0 0
  %110 = vmatprep.subr.bf16.mxu0 0
  %111 = vmatpush2.bf16.msra.mxu0 0
  %112 = vmatprep.subr.bf16.mxu0 0
  %113 = vmatpush2.bf16.msra.mxu0 0
  %114 = vmatprep.subr.bf16.mxu0 0
  %115 = vmatpush2.bf16.msra.mxu0 0
  %116 = vmatprep.subr.bf16.mxu0 0
  %117 = vmatpush2.bf16.msra.mxu0 0
  %118 = vmatprep.subr.bf16.mxu0 0
  %119 = vmatpush2.bf16.msra.mxu0 0
  %120 = vmatprep.subr.bf16.mxu0 0
  %121 = vmatpush2.bf16.msra.mxu0 0
  %122 = vmatprep.subr.bf16.mxu0 0
  %123 = vmatpush2.bf16.msra.mxu0 0
  %124 = vmatprep.mubr.bf16.mxu0 0
  %125 = vmatmul.mubr.bf16.gmra.mxu0 %v74
  %v126 = vpop.f32.mrf.mxu0
  %v127 = vadd.f32 %v34, %v126
  %v128 = vpop.f32.mrf.mxu0
  %v129 = vadd.f32 %v34, %v128
  %v130 = vpop.f32.mrf.mxu0
  %v131 = vpop.f32.mrf.mxu0
  %132 = vdwg.mxu0
  %133 = vmatprep.subr.bf16.mxu0 0
  %134 = vmatpush1.bf16.msra.mxu0 0
  %135 = vmatprep.subr.bf16.mxu0 0
  %136 = vmatpush1.bf16.msra.mxu0 0
  %137 = vmatprep.subr.bf16.mxu0 0
  %138 = vmatpush1.bf16.msra.mxu0 0
  %139 = vmatprep.subr.bf16.mxu0 0
  %140 = vmatpush1.bf16.msra.mxu0 0
  %141 = vmatprep.subr.bf16.mxu0 0
  %142 = vmatpush1.bf16.msra.mxu0 0
  %143 = vmatprep.subr.bf16.mxu0 0
  %144 = vmatpush1.bf16.msra.mxu0 0
  %145 = vmatprep.subr.bf16.mxu0 %v90
  %146 = vmatpush1.bf16.msra.mxu0 %v87
  %147 = vmatprep.subr.bf16.mxu0 %v63
  %148 = vmatpush1.bf16.msra.mxu0 %v62
  %149 = vmatprep.subr.bf16.mxu0 0
  %150 = vmatpush2.bf16.msra.mxu0 0
  %151 = vmatprep.subr.bf16.mxu0 0
  %152 = vmatpush2.bf16.msra.mxu0 0
  %153 = vmatprep.subr.bf16.mxu0 0
  %154 = vmatpush2.bf16.msra.mxu0 0
  %155 = vmatprep.subr.bf16.mxu0 0
  %156 = vmatpush2.bf16.msra.mxu0 0
  %157 = vmatprep.subr.bf16.mxu0 0
  %158 = vmatpush2.bf16.msra.mxu0 0
  %159 = vmatprep.subr.bf16.mxu0 0
  %160 = vmatpush2.bf16.msra.mxu0 0
  %161 = vmatprep.subr.bf16.mxu0 0
  %162 = vmatpush2.bf16.msra.mxu0 0
  %163 = vmatprep.subr.bf16.mxu0 0
  %164 = vmatpush2.bf16.msra.mxu0 0
  %165 = vmatprep.mubr.bf16.mxu0 0
  %166 = vmatmul.mubr.bf16.gmra.mxu0 %v74
  %v167 = vpop.f32.mrf.mxu0
  %v168 = vadd.f32 %v34, %v167
  %v169 = vpop.f32.mrf.mxu0
  %v170 = vadd.f32 %v34, %v169
  %v171 = vpop.f32.mrf.mxu0
  %v172 = vpop.f32.mrf.mxu0
  %173 = vdwg.mxu0
  %vm174 = vcmask 1043456
  %v175 = vsel %vm174, %v127, 0.0
  %v176 = vsel %vm174, %v129, 0.0
  %v177 = vadd.f32 %v175, %v176
  %v178 = vsel %vm174, %v168, 0.0
  %v179 = vadd.f32 %v177, %v178
  %v180 = vsel %vm174, %v170, 0.0
  %v181 = vadd.f32 %v179, %v180
  %182 = vadd.xlane.f32.xlu0 %v181
  %v183 = vpop.xlane.xlu0 %182
  %v184 = vmul.f32 %v127, %v127
  %v185 = vmul.f32 %v129, %v129
  %v186 = vmul.f32 %v168, %v168
  %v187 = vmul.f32 %v170, %v170
  %v188 = vsel %vm174, %v184, 0.0
  %v189 = vsel %vm174, %v185, 0.0
  %v190 = vadd.f32 %v188, %v189
  %v191 = vsel %vm174, %v186, 0.0
  %v192 = vadd.f32 %v190, %v191
  %v193 = vsel %vm174, %v187, 0.0
  %v194 = vadd.f32 %v192, %v193
  %195 = vadd.xlane.f32.xlu0 %v194
  %v196 = vpop.xlane.xlu0 %195
  %v197 = vmul.f32 %v183, 0.001953125
  %v198 = vmul.f32 %v196, 0.001953125
  %v199 = vmul.f32 %v197, %v197
  %v200 = vsub.f32 %v198, %v199
  %v201 = vmax.f32 %v200, 0.0
  %v202 = vld [vmem:[%s3] sm:$0xf]
  %v203 = vadd.f32 %v201, 1e-05
  %v204 = vrsqrt.pop %v203
  %v205 = vmul.f32 %v202, %v204
  %v206 = vld [vmem:[%s4] sm:$0xf]
  %v207 = vmul.f32 %v197, %v205
  %v208 = vsub.f32 %v206, %v207
  %210 = vset.pattern.permute.xlu0 0
  %211 = vperm.xlu0 %210, %v205
  %v212 = vpop.permute.xlu0 %211
  %v214 = vmul.f32 %v127, %v212
  %v215 = vmul.f32 %v129, %v212
  %v216 = vmul.f32 %v168, %v212
  %v217 = vmul.f32 %v170, %v212
  %219 = vset.pattern.permute.xlu0 0
  %220 = vperm.xlu0 %219, %v208
  %v221 = vpop.permute.xlu0 %220
  %v223 = vadd.f32 %v214, %v221
  %v224 = vadd.f32 %v215, %v221
  %v225 = vadd.f32 %v216, %v221
  %v226 = vadd.f32 %v217, %v221
  %vm227 = vcmp.ge.f32.partialorder %v223, 0.0
  %vm228 = vcmp.ge.f32.partialorder %v224, 0.0
  %vm229 = vcmp.ge.f32.partialorder %v225, 0.0
  %vm230 = vcmp.ge.f32.partialorder %v226, 0.0
  %v231 = vmul.f32 %v223, 0.2
  %v232 = vmul.f32 %v224, 0.2
  %v233 = vmul.f32 %v225, 0.2
  %v234 = vmul.f32 %v226, 0.2
  %v235 = vsel %vm227, %v223, %v231
  %v236 = vsel %vm228, %v224, %v232
  %v237 = vsel %vm229, %v225, %v233
  %v238 = vsel %vm230, %v226, %v234
  %v239 = vpack.c.bf16 %v235, %v235
  %v240 = vpack.c.bf16 %v236, %v236
  %v241 = vpack.c.bf16 %v237, %v237
  %v242 = vpack.c.bf16 %v238, %v238
  %v247 = vcombine.low %v239, %v240
  %v248 = vcombine.low %v241, %v242
  %v250 = vunpack.c.l.s4 1983009808
  %v251 = vunpack.c.0.s8 %v250
  %v252 = vlaneseq
  %v253 = vshrl.u32 %v252, 7
  %v254 = vsub.s32 %v251, %v253
  %v255 = vrot.slane %v247, %v254
  %v257 = vunpack.c.l.s4 1983009808
  %v258 = vunpack.c.0.s8 %v257
  %v259 = vlaneseq
  %v260 = vshrl.u32 %v259, 7
  %v261 = vsub.s32 %v258, %v260
  %v262 = vrot.slane %v248, %v261
  %v263 = vcombine.low %v255, %v262
  %265 = vst [vmem:[%s5] sm:$0xff] %v263
  // Predicated region
  $region22: #{_lambda_.14} parent=0 // pred_check
    _
  $region23: #{_lambda_.14} parent=0 // pred_check_branch
    %267 = sbr.rel (0) target = $region25
  $region24: #{_lambda_.14} parent=0 // pred_region
    _
  $region25: #{_lambda_.14} parent=0 // pred_fallthru
    _
  // Predicated region
  $region26: #{_lambda_.14} parent=0 // pred_check
    _
  $region27: #{_lambda_.14} parent=0 // pred_check_branch
    %269 = sbr.rel (0) target = $region29
  $region28: #{_lambda_.14} parent=0 // pred_region
    _
  $region29: #{_lambda_.14} parent=0 // pred_fallthru
    _

// kernel: squeeze.13
$region0: #{squeeze.13}
  %s0 = inlined_call_operand.vmem [shape: bf16[1,4,128], index: 0, kind: input, shape index: {}]
  %s1 = inlined_call_operand.vmem [shape: bf16[4,2,8,8], index: 1, kind: output, shape index: {}]
  $region1: #{squeeze.13} parent=0
    #allocation0 [shape = 'u8[32768]{0}', space=vmem, size = 0x8000, scoped, tag = 'scoped mem for output reshape']
    #allocation1 [shape = 'u8[4096]{0}', space=vmem, size = 0x1000, scoped, tag = 'scoped mem for input reshape']
    %s3 = smul.u32 2, 2
    %s4 = sshll.u32 1, %s3
    %s5 = ssub.s32 %s4, 1
    %s6 = sshrl.u32 %s5, 1
    %s7 = sor.u32 %s5, %s6
    %s8 = sand.u32 %s7, 85
    %s9 = sshrl.u32 %s8, 1
    %s10 = sor.u32 %s8, %s9
    %s11 = sand.u32 51, %s10
    %s12 = sshrl.u32 %s11, 2
    %s13 = sor.u32 %s11, %s12
    %s14 = sand.u32 15, %s13
    %v15 = vld [vmem:[%s0] sm:%s14]
    %v16 = vunpack.c.l.bf16 %v15
    %v17 = vunpack.c.h.bf16 %v15
    %18 = vst [vmem:[#allocation1] sm:%s5] %v16
    %v19 = vld [vmem:[#allocation1] sm:$0xf]
    %vm20 = vcmask 64512
    %21 = vst.msk [vmem:[#allocation0] ss:$16 sm:$0x3] %vm20, %v19
    %22 = vst.msk [vmem:[#allocation0] ss:$16 sm:$0xc] %vm20, %v19
    %v23 = vld [vmem:[#allocation1] sm:$0xf]
    %24 = vrot.lane.b32.xlu0 %v23, 120
    %v25 = vpop.permute.xlu0 %24
    %vm26 = vcmask 64512
    %s27 = scalar_lea.vmem [#allocation0], 1
    %28 = vst.msk [vmem:[%s27] ss:$16 sm:$0x3] %vm26, %v25
    %s29 = scalar_lea.vmem [#allocation0], 1
    %30 = vst.msk [vmem:[%s29] ss:$16 sm:$0xc] %vm26, %v25
    %v31 = vld [vmem:[#allocation1] sm:$0xf]
    %32 = vrot.lane.b32.xlu0 %v31, 112
    %v33 = vpop.permute.xlu0 %32
    %vm34 = vcmask 64512
    %s35 = scalar_lea.vmem [#allocation0], 2
    %36 = vst.msk [vmem:[%s35] ss:$16 sm:$0x3] %vm34, %v33
    %s37 = scalar_lea.vmem [#allocation0], 2
    %38 = vst.msk [vmem:[%s37] ss:$16 sm:$0xc] %vm34, %v33
    %v39 = vld [vmem:[#allocation1] sm:$0xf]
    %40 = vrot.lane.b32.xlu0 %v39, 104
    %v41 = vpop.permute.xlu0 %40
    %vm42 = vcmask 64512
    %s43 = scalar_lea.vmem [#allocation0], 3
    %44 = vst.msk [vmem:[%s43] ss:$16 sm:$0x3] %vm42, %v41
    %s45 = scalar_lea.vmem [#allocation0], 3
    %46 = vst.msk [vmem:[%s45] ss:$16 sm:$0xc] %vm42, %v41
    %v47 = vld [vmem:[#allocation1] sm:$0xf]
    %48 = vrot.lane.b32.xlu0 %v47, 96
    %v49 = vpop.permute.xlu0 %48
    %vm50 = vcmask 64512
    %s51 = scalar_lea.vmem [#allocation0], 4
    %52 = vst.msk [vmem:[%s51] ss:$16 sm:$0x3] %vm50, %v49
    %s53 = scalar_lea.vmem [#allocation0], 4
    %54 = vst.msk [vmem:[%s53] ss:$16 sm:$0xc] %vm50, %v49
    %v55 = vld [vmem:[#allocation1] sm:$0xf]
    %56 = vrot.lane.b32.xlu0 %v55, 88
    %v57 = vpop.permute.xlu0 %56
    %vm58 = vcmask 64512
    %s59 = scalar_lea.vmem [#allocation0], 5
    %60 = vst.msk [vmem:[%s59] ss:$16 sm:$0x3] %vm58, %v57
    %s61 = scalar_lea.vmem [#allocation0], 5
    %62 = vst.msk [vmem:[%s61] ss:$16 sm:$0xc] %vm58, %v57
    %v63 = vld [vmem:[#allocation1] sm:$0xf]
    %64 = vrot.lane.b32.xlu0 %v63, 80
    %v65 = vpop.permute.xlu0 %64
    %vm66 = vcmask 64512
    %s67 = scalar_lea.vmem [#allocation0], 6
    %68 = vst.msk [vmem:[%s67] ss:$16 sm:$0x3] %vm66, %v65
    %s69 = scalar_lea.vmem [#allocation0], 6
    %70 = vst.msk [vmem:[%s69] ss:$16 sm:$0xc] %vm66, %v65
    %v71 = vld [vmem:[#allocation1] sm:$0xf]
    %72 = vrot.lane.b32.xlu0 %v71, 72
    %v73 = vpop.permute.xlu0 %72
    %vm74 = vcmask 64512
    %s75 = scalar_lea.vmem [#allocation0], 7
    %76 = vst.msk [vmem:[%s75] ss:$16 sm:$0x3] %vm74, %v73
    %s77 = scalar_lea.vmem [#allocation0], 7
    %78 = vst.msk [vmem:[%s77] ss:$16 sm:$0xc] %vm74, %v73
    %v79 = vld [vmem:[#allocation1] sm:$0xf]
    %80 = vrot.lane.b32.xlu0 %v79, 64
    %v81 = vpop.permute.xlu0 %80
    %vm82 = vcmask 64512
    %s83 = scalar_lea.vmem [#allocation0], 8
    %84 = vst.msk [vmem:[%s83] ss:$16 sm:$0x3] %vm82, %v81
    %s85 = scalar_lea.vmem [#allocation0], 8
    %86 = vst.msk [vmem:[%s85] ss:$16 sm:$0xc] %vm82, %v81
    %v87 = vld [vmem:[#allocation1] sm:$0xf]
    %88 = vrot.lane.b32.xlu0 %v87, 56
    %v89 = vpop.permute.xlu0 %88
    %vm90 = vcmask 64512
    %s91 = scalar_lea.vmem [#allocation0], 9
    %92 = vst.msk [vmem:[%s91] ss:$16 sm:$0x3] %vm90, %v89
    %s93 = scalar_lea.vmem [#allocation0], 9
    %94 = vst.msk [vmem:[%s93] ss:$16 sm:$0xc] %vm90, %v89
    %v95 = vld [vmem:[#allocation1] sm:$0xf]
    %96 = vrot.lane.b32.xlu0 %v95, 48
    %v97 = vpop.permute.xlu0 %96
    %vm98 = vcmask 64512
    %s99 = scalar_lea.vmem [#allocation0], 10
    %100 = vst.msk [vmem:[%s99] ss:$16 sm:$0x3] %vm98, %v97
    %s101 = scalar_lea.vmem [#allocation0], 10
    %102 = vst.msk [vmem:[%s101] ss:$16 sm:$0xc] %vm98, %v97
    %v103 = vld [vmem:[#allocation1] sm:$0xf]
    %104 = vrot.lane.b32.xlu0 %v103, 40
    %v105 = vpop.permute.xlu0 %104
    %vm106 = vcmask 64512
    %s107 = scalar_lea.vmem [#allocation0], 11
    %108 = vst.msk [vmem:[%s107] ss:$16 sm:$0x3] %vm106, %v105
    %s109 = scalar_lea.vmem [#allocation0], 11
    %110 = vst.msk [vmem:[%s109] ss:$16 sm:$0xc] %vm106, %v105
    %v111 = vld [vmem:[#allocation1] sm:$0xf]
    %112 = vrot.lane.b32.xlu0 %v111, 32
    %v113 = vpop.permute.xlu0 %112
    %vm114 = vcmask 64512
    %s115 = scalar_lea.vmem [#allocation0], 12
    %116 = vst.msk [vmem:[%s115] ss:$16 sm:$0x3] %vm114, %v113
    %s117 = scalar_lea.vmem [#allocation0], 12
    %118 = vst.msk [vmem:[%s117] ss:$16 sm:$0xc] %vm114, %v113
    %v119 = vld [vmem:[#allocation1] sm:$0xf]
    %120 = vrot.lane.b32.xlu0 %v119, 24
    %v121 = vpop.permute.xlu0 %120
    %vm122 = vcmask 64512
    %s123 = scalar_lea.vmem [#allocation0], 13
    %124 = vst.msk [vmem:[%s123] ss:$16 sm:$0x3] %vm122, %v121
    %s125 = scalar_lea.vmem [#allocation0], 13
    %126 = vst.msk [vmem:[%s125] ss:$16 sm:$0xc] %vm122, %v121
    %v127 = vld [vmem:[#allocation1] sm:$0xf]
    %128 = vrot.lane.b32.xlu0 %v127, 16
    %v129 = vpop.permute.xlu0 %128
    %vm130 = vcmask 64512
    %s131 = scalar_lea.vmem [#allocation0], 14
    %132 = vst.msk [vmem:[%s131] ss:$16 sm:$0x3] %vm130, %v129
    %s133 = scalar_lea.vmem [#allocation0], 14
    %134 = vst.msk [vmem:[%s133] ss:$16 sm:$0xc] %vm130, %v129
    %v135 = vld [vmem:[#allocation1] sm:$0xf]
    %136 = vrot.lane.b32.xlu0 %v135, 8
    %v137 = vpop.permute.xlu0 %136
    %vm138 = vcmask 64512
    %s139 = scalar_lea.vmem [#allocation0], 15
    %140 = vst.msk [vmem:[%s139] ss:$16 sm:$0x3] %vm138, %v137
    %s141 = scalar_lea.vmem [#allocation0], 15
    %142 = vst.msk [vmem:[%s141] ss:$16 sm:$0xc] %vm138, %v137
    %s144 = smul.u32 4, 2
    %s145 = sshll.u32 1, %s144
    %s146 = ssub.s32 %s145, 1
    %s147 = sshrl.u32 %s144, 1
    %v148 = vld [vmem:[#allocation0] sm:%s146]
    %v149 = vpack.c.bf16 0.0, %v148
    %s150 = sshll.u32 1, %s147
    %s151 = ssub.s32 %s150, 1
    %152 = vst [vmem:[%s1] sm:%s151] %v149
    %s153 = scalar_lea.vmem [#allocation0], 8
    %v154 = vld [vmem:[%s153] sm:%s146]
    %v155 = vpack.c.bf16 0.0, %v154
    %s156 = sshll.u32 1, %s147
    %s157 = ssub.s32 %s156, 1
    %s158 = scalar_lea.vmem %s1, 4
    %159 = vst [vmem:[%s158] sm:%s157] %v155
    %s160 = scalar_lea.vmem [#allocation0], 16
    %v161 = vld [vmem:[%s160] sm:%s146]
    %v162 = vpack.c.bf16 0.0, %v161
    %s163 = sshll.u32 1, %s147
    %s164 = ssub.s32 %s163, 1
    %s165 = smul.addr 4, 2
    %s166 = scalar_lea.vmem %s1, %s165
    %167 = vst [vmem:[%s166] sm:%s164] %v162
    %s168 = scalar_lea.vmem [#allocation0], 24
    %v169 = vld [vmem:[%s168] sm:%s146]
    %v170 = vpack.c.bf16 0.0, %v169
    %s171 = sshll.u32 1, %s147
    %s172 = ssub.s32 %s171, 1
    %s173 = smul.addr 4, 3
    %s174 = scalar_lea.vmem %s1, %s173
    %175 = vst [vmem:[%s174] sm:%s172] %v170
    %s176 = scalar_lea.vmem [#allocation0], 32
    %v177 = vld [vmem:[%s176] sm:%s146]
    %v178 = vpack.c.bf16 0.0, %v177
    %s179 = sshll.u32 1, %s147
    %s180 = ssub.s32 %s179, 1
    %s181 = smul.addr 4, 4
    %s182 = scalar_lea.vmem %s1, %s181
    %183 = vst [vmem:[%s182] sm:%s180] %v178
    %s184 = scalar_lea.vmem [#allocation0], 40
    %v185 = vld [vmem:[%s184] sm:%s146]
    %v186 = vpack.c.bf16 0.0, %v185
    %s187 = sshll.u32 1, %s147
    %s188 = ssub.s32 %s187, 1
    %s189 = smul.addr 4, 5
    %s190 = scalar_lea.vmem %s1, %s189
    %191 = vst [vmem:[%s190] sm:%s188] %v186
    %s192 = scalar_lea.vmem [#allocation0], 48
    %v193 = vld [vmem:[%s192] sm:%s146]
    %v194 = vpack.c.bf16 0.0, %v193
    %s195 = sshll.u32 1, %s147
    %s196 = ssub.s32 %s195, 1
    %s197 = smul.addr 4, 6
    %s198 = scalar_lea.vmem %s1, %s197
    %199 = vst [vmem:[%s198] sm:%s196] %v194
    %s200 = scalar_lea.vmem [#allocation0], 56
    %v201 = vld [vmem:[%s200] sm:%s146]
    %v202 = vpack.c.bf16 0.0, %v201
    %s203 = sshll.u32 1, %s147
    %s204 = ssub.s32 %s203, 1
    %s205 = smul.addr 4, 7
    %s206 = scalar_lea.vmem %s1, %s205
    %207 = vst [vmem:[%s206] sm:%s204] %v202

// kernel: _lambda_.15
$region0: #{_lambda_.15}
  #allocation0 [shape = 'u32[]', space=smem, size = 0x4, offset = 0x4, fixed_abs, tag = 'smem constant byte address 0x4 - core index']
  #allocation1 [shape = 'u32[144,128]{1,0:T(1,128)}', space=vmem, size = 0x12000, scoped, tag = 'internal scratch']
  %s0 = inlined_call_operand.vmem [shape: bf16[1,4,64], index: 0, kind: input, shape index: {}]
  %s1 = inlined_call_operand.vmem [shape: bf16[1,64,128], index: 1, kind: input, shape index: {}]
  %s2 = inlined_call_operand.vmem [shape: f32[4,1], index: 2, kind: input, shape index: {}]
  %s3 = inlined_call_operand.vmem [shape: f32[4,1], index: 3, kind: input, shape index: {}]
  %s4 = inlined_call_operand.vmem [shape: f32[4,1], index: 4, kind: input, shape index: {}]
  %s5 = inlined_call_operand.vmem [shape: bf16[1,4,128], index: 5, kind: output, shape index: {}]
  %s6 = sld [smem:[#allocation0]]
  $region30: #{_lambda_.15} parent=0
    _
  %s8 = ssub.s32 1, %s6
  %s9 = scalar_select 0, %s8, %s6
  // Predicated region
  $region2: #{_lambda_.15} parent=0 // pred_check
    _
  $region3: #{_lambda_.15} parent=0 // pred_check_branch
    %11 = sbr.rel (0) target = $region5
  $region4: #{_lambda_.15} parent=0 // pred_region
    _
  $region5: #{_lambda_.15} parent=0 // pred_fallthru
    _
  // Predicated region
  $region6: #{_lambda_.15} parent=0 // pred_check
    _
  $region7: #{_lambda_.15} parent=0 // pred_check_branch
    %13 = sbr.rel (0) target = $region9
  $region8: #{_lambda_.15} parent=0 // pred_region
    _
  $region9: #{_lambda_.15} parent=0 // pred_fallthru
    _
  // Predicated region
  $region10: #{_lambda_.15} parent=0 // pred_check
    _
  $region11: #{_lambda_.15} parent=0 // pred_check_branch
    %15 = sbr.rel (0) target = $region13
  $region12: #{_lambda_.15} parent=0 // pred_region
    _
  $region13: #{_lambda_.15} parent=0 // pred_fallthru
    _
  // Predicated region
  $region14: #{_lambda_.15} parent=0 // pred_check
    _
  $region15: #{_lambda_.15} parent=0 // pred_check_branch
    %17 = sbr.rel (0) target = $region17
  $region16: #{_lambda_.15} parent=0 // pred_region
    _
  $region17: #{_lambda_.15} parent=0 // pred_fallthru
    _
  // Predicated region
  $region18: #{_lambda_.15} parent=0 // pred_check
    _
  $region19: #{_lambda_.15} parent=0 // pred_check_branch
    %19 = sbr.rel (0) target = $region21
  $region20: #{_lambda_.15} parent=0 // pred_region
    _
  $region21: #{_lambda_.15} parent=0 // pred_fallthru
    _
  %v21 = vld [vmem:[%s2] sm:$0xf]
  %v22 = vld [vmem:[%s0] sm:$0x3]
  %v23 = vld [vmem:[%s1] sm:$0xf]
  %v24 = vld [vmem:[%s1 + $0x4] sm:$0xf]
  %v25 = vld [vmem:[%s1 + $0x8] sm:$0xf]
  %v26 = vld [vmem:[%s1 + $0xc] sm:$0xf]
  %v27 = vld [vmem:[%s1 + $0x10] sm:$0xf]
  %v28 = vld [vmem:[%s1 + $0x14] sm:$0xf]
  %v29 = vld [vmem:[%s1 + $0x18] sm:$0xf]
  %v30 = vld [vmem:[%s1 + $0x1c] sm:$0xf]
  %32 = vset.pattern.permute.xlu0 0
  %33 = vperm.xlu0 %32, %v21
  %v34 = vpop.permute.xlu0 %33
  %v44 = vunpack.c.l.b16 %v23
  %v45 = vunpack.c.l.b16 %v24
  %v46 = vunpack.c.l.b16 %v25
  %v47 = vunpack.c.l.b16 %v26
  %v48 = vunpack.c.l.b16 %v27
  %v49 = vunpack.c.l.b16 %v28
  %v50 = vunpack.c.l.b16 %v29
  %v51 = vunpack.c.l.b16 %v30
  %v52 = vpack.c.b16 %v45, %v44
  %v53 = vpack.c.b16 %v47, %v46
  %v54 = vpack.c.b16 %v49, %v48
  %v55 = vpack.c.b16 %v51, %v50
  %vm60 = vcmask 523264
  %v62 = vsel %vm60, %v22, 0
  %64 = vmatprep.subr.bf16.mxu0 0
  %65 = vmatpush1.bf16.msra.mxu0 0
  %66 = vmatprep.subr.bf16.mxu0 0
  %67 = vmatpush1.bf16.msra.mxu0 0
  %68 = vmatprep.subr.bf16.mxu0 0
  %69 = vmatpush1.bf16.msra.mxu0 0
  %70 = vmatprep.subr.bf16.mxu0 0
  %71 = vmatpush1.bf16.msra.mxu0 0
  %72 = vmatprep.subr.bf16.mxu0 0
  %73 = vmatpush1.bf16.msra.mxu0 %v55
  %74 = vmatprep.subr.bf16.mxu0 0
  %75 = vmatpush1.bf16.msra.mxu0 %v54
  %76 = vmatprep.subr.bf16.mxu0 0
  %77 = vmatpush1.bf16.msra.mxu0 %v53
  %78 = vmatprep.subr.bf16.mxu0 0
  %79 = vmatpush1.bf16.msra.mxu0 %v52
  %80 = vmatprep.subr.bf16.mxu0 0
  %81 = vmatpush2.bf16.msra.mxu0 0
  %82 = vmatprep.subr.bf16.mxu0 0
  %83 = vmatpush2.bf16.msra.mxu0 0
  %84 = vmatprep.subr.bf16.mxu0 0
  %85 = vmatpush2.bf16.msra.mxu0 0
  %86 = vmatprep.subr.bf16.mxu0 0
  %87 = vmatpush2.bf16.msra.mxu0 0
  %88 = vmatprep.subr.bf16.mxu0 0
  %89 = vmatpush2.bf16.msra.mxu0 0
  %90 = vmatprep.subr.bf16.mxu0 0
  %91 = vmatpush2.bf16.msra.mxu0 0
  %92 = vmatprep.subr.bf16.mxu0 0
  %93 = vmatpush2.bf16.msra.mxu0 0
  %94 = vmatprep.subr.bf16.mxu0 0
  %95 = vmatpush2.bf16.msra.mxu0 0
  %96 = vmatprep.mubr.bf16.mxu0 0
  %97 = vmatmul.mubr.bf16.gmra.mxu0 %v62
  %v98 = vpop.f32.mrf.mxu0
  %v99 = vadd.f32 %v34, %v98
  %v100 = vpop.f32.mrf.mxu0
  %v101 = vpop.f32.mrf.mxu0
  %v102 = vpop.f32.mrf.mxu0
  %103 = vdwg.mxu0
  %vm104 = vcmask 1043456
  %v105 = vsel %vm104, %v99, 0.0
  %106 = vadd.xlane.f32.xlu0 %v105
  %v107 = vpop.xlane.xlu0 %106
  %v108 = vmul.f32 %v99, %v99
  %v109 = vsel %vm104, %v108, 0.0
  %110 = vadd.xlane.f32.xlu0 %v109
  %v111 = vpop.xlane.xlu0 %110
  %v112 = vmul.f32 %v107, 0.0078125
  %v113 = vmul.f32 %v111, 0.0078125
  %v114 = vmul.f32 %v112, %v112
  %v115 = vsub.f32 %v113, %v114
  %v116 = vmax.f32 %v115, 0.0
  %v117 = vld [vmem:[%s3] sm:$0xf]
  %v118 = vadd.f32 %v116, 1e-05
  %v119 = vrsqrt.pop %v118
  %v120 = vmul.f32 %v117, %v119
  %v121 = vld [vmem:[%s4] sm:$0xf]
  %v122 = vmul.f32 %v112, %v120
  %v123 = vsub.f32 %v121, %v122
  %125 = vset.pattern.permute.xlu0 0
  %126 = vperm.xlu0 %125, %v120
  %v127 = vpop.permute.xlu0 %126
  %v129 = vmul.f32 %v99, %v127
  %131 = vset.pattern.permute.xlu0 0
  %132 = vperm.xlu0 %131, %v123
  %v133 = vpop.permute.xlu0 %132
  %v135 = vadd.f32 %v129, %v133
  %vm136 = vcmp.ge.f32.partialorder %v135, 0.0
  %v137 = vmul.f32 %v135, 0.2
  %v138 = vsel %vm136, %v135, %v137
  %v139 = vpack.c.bf16 %v138, %v138
  %140 = vst [vmem:[%s5] sm:$0x3] %v139
  // Predicated region
  $region22: #{_lambda_.15} parent=0 // pred_check
    _
  $region23: #{_lambda_.15} parent=0 // pred_check_branch
    %142 = sbr.rel (0) target = $region25
  $region24: #{_lambda_.15} parent=0 // pred_region
    _
  $region25: #{_lambda_.15} parent=0 // pred_fallthru
    _
  // Predicated region
  $region26: #{_lambda_.15} parent=0 // pred_check
    _
  $region27: #{_lambda_.15} parent=0 // pred_check_branch
    %144 = sbr.rel (0) target = $region29
  $region28: #{_lambda_.15} parent=0 // pred_region
    _
  $region29: #{_lambda_.15} parent=0 // pred_fallthru
    _

// kernel: _lambda_.16
$region0: #{_lambda_.16}
  #allocation0 [shape = 'u32[]', space=smem, size = 0x4, offset = 0x4, fixed_abs, tag = 'smem constant byte address 0x4 - core index']
  #allocation1 [shape = 'u32[144,128]{1,0:T(1,128)}', space=vmem, size = 0x12000, scoped, tag = 'internal scratch']
  %s0 = inlined_call_operand.vmem [shape: bf16[1,4,36], index: 0, kind: input, shape index: {}]
  %s1 = inlined_call_operand.vmem [shape: bf16[1,36,128], index: 1, kind: input, shape index: {}]
  %s2 = inlined_call_operand.vmem [shape: f32[4,1], index: 2, kind: input, shape index: {}]
  %s3 = inlined_call_operand.vmem [shape: f32[4,1], index: 3, kind: input, shape index: {}]
  %s4 = inlined_call_operand.vmem [shape: f32[4,1], index: 4, kind: input, shape index: {}]
  %s5 = inlined_call_operand.vmem [shape: bf16[1,4,128], index: 5, kind: output, shape index: {}]
  %s6 = sld [smem:[#allocation0]]
  $region30: #{_lambda_.16} parent=0
    _
  %s8 = ssub.s32 1, %s6
  %s9 = scalar_select 0, %s8, %s6
  // Predicated region
  $region2: #{_lambda_.16} parent=0 // pred_check
    _
  $region3: #{_lambda_.16} parent=0 // pred_check_branch
    %11 = sbr.rel (0) target = $region5
  $region4: #{_lambda_.16} parent=0 // pred_region
    _
  $region5: #{_lambda_.16} parent=0 // pred_fallthru
    _
  // Predicated region
  $region6: #{_lambda_.16} parent=0 // pred_check
    _
  $region7: #{_lambda_.16} parent=0 // pred_check_branch
    %13 = sbr.rel (0) target = $region9
  $region8: #{_lambda_.16} parent=0 // pred_region
    _
  $region9: #{_lambda_.16} parent=0 // pred_fallthru
    _
  // Predicated region
  $region10: #{_lambda_.16} parent=0 // pred_check
    _
  $region11: #{_lambda_.16} parent=0 // pred_check_branch
    %15 = sbr.rel (0) target = $region13
  $region12: #{_lambda_.16} parent=0 // pred_region
    _
  $region13: #{_lambda_.16} parent=0 // pred_fallthru
    _
  // Predicated region
  $region14: #{_lambda_.16} parent=0 // pred_check
    _
  $region15: #{_lambda_.16} parent=0 // pred_check_branch
    %17 = sbr.rel (0) target = $region17
  $region16: #{_lambda_.16} parent=0 // pred_region
    _
  $region17: #{_lambda_.16} parent=0 // pred_fallthru
    _
  // Predicated region
  $region18: #{_lambda_.16} parent=0 // pred_check
    _
  $region19: #{_lambda_.16} parent=0 // pred_check_branch
    %19 = sbr.rel (0) target = $region21
  $region20: #{_lambda_.16} parent=0 // pred_region
    _
  $region21: #{_lambda_.16} parent=0 // pred_fallthru
    _
  %v21 = vld [vmem:[%s2] sm:$0xf]
  %v22 = vld [vmem:[%s0] sm:$0x3]
  %v23 = vld [vmem:[%s1] sm:$0xf]
  %v24 = vld [vmem:[%s1 + $0x4] sm:$0xf]
  %v25 = vld [vmem:[%s1 + $0x8] sm:$0xf]
  %v26 = vld [vmem:[%s1 + $0xc] sm:$0xf]
  %v27 = vld [vmem:[%s1 + $0x10] sm:$0x3]
  %29 = vset.pattern.permute.xlu0 0
  %30 = vperm.xlu0 %29, %v21
  %v31 = vpop.permute.xlu0 %30
  %v38 = vunpack.c.l.b16 %v23
  %v39 = vunpack.c.l.b16 %v24
  %v40 = vunpack.c.l.b16 %v25
  %v41 = vunpack.c.l.b16 %v26
  %v42 = vunpack.c.l.b16 %v27
  %v43 = vpack.c.b16 %v39, %v38
  %v44 = vpack.c.b16 %v41, %v40
  %v45 = vpack.c.b16 %v42, %v42
  %vm48 = vcmask 293888
  %v50 = vsel %vm48, %v22, 0
  %vm52 = vcmask 1041408
  %v54 = vsel %vm52, %v45, 0
  %56 = vmatprep.subr.bf16.mxu0 0
  %57 = vmatpush1.bf16.msra.mxu0 0
  %58 = vmatprep.subr.bf16.mxu0 0
  %59 = vmatpush1.bf16.msra.mxu0 0
  %60 = vmatprep.subr.bf16.mxu0 0
  %61 = vmatpush1.bf16.msra.mxu0 0
  %62 = vmatprep.subr.bf16.mxu0 0
  %63 = vmatpush1.bf16.msra.mxu0 0
  %64 = vmatprep.subr.bf16.mxu0 0
  %65 = vmatpush1.bf16.msra.mxu0 0
  %66 = vmatprep.subr.bf16.mxu0 0
  %67 = vmatpush1.bf16.msra.mxu0 %v54
  %68 = vmatprep.subr.bf16.mxu0 0
  %69 = vmatpush1.bf16.msra.mxu0 %v44
  %70 = vmatprep.subr.bf16.mxu0 0
  %71 = vmatpush1.bf16.msra.mxu0 %v43
  %72 = vmatprep.subr.bf16.mxu0 0
  %73 = vmatpush2.bf16.msra.mxu0 0
  %74 = vmatprep.subr.bf16.mxu0 0
  %75 = vmatpush2.bf16.msra.mxu0 0
  %76 = vmatprep.subr.bf16.mxu0 0
  %77 = vmatpush2.bf16.msra.mxu0 0
  %78 = vmatprep.subr.bf16.mxu0 0
  %79 = vmatpush2.bf16.msra.mxu0 0
  %80 = vmatprep.subr.bf16.mxu0 0
  %81 = vmatpush2.bf16.msra.mxu0 0
  %82 = vmatprep.subr.bf16.mxu0 0
  %83 = vmatpush2.bf16.msra.mxu0 0
  %84 = vmatprep.subr.bf16.mxu0 0
  %85 = vmatpush2.bf16.msra.mxu0 0
  %86 = vmatprep.subr.bf16.mxu0 0
  %87 = vmatpush2.bf16.msra.mxu0 0
  %88 = vmatprep.mubr.bf16.mxu0 0
  %89 = vmatmul.mubr.bf16.gmra.mxu0 %v50
  %v90 = vpop.f32.mrf.mxu0
  %v91 = vadd.f32 %v31, %v90
  %v92 = vpop.f32.mrf.mxu0
  %v93 = vpop.f32.mrf.mxu0
  %v94 = vpop.f32.mrf.mxu0
  %95 = vdwg.mxu0
  %vm96 = vcmask 1043456
  %v97 = vsel %vm96, %v91, 0.0
  %98 = vadd.xlane.f32.xlu0 %v97
  %v99 = vpop.xlane.xlu0 %98
  %v100 = vmul.f32 %v91, %v91
  %v101 = vsel %vm96, %v100, 0.0
  %102 = vadd.xlane.f32.xlu0 %v101
  %v103 = vpop.xlane.xlu0 %102
  %v104 = vmul.f32 %v99, 0.0078125
  %v105 = vmul.f32 %v103, 0.0078125
  %v106 = vmul.f32 %v104, %v104
  %v107 = vsub.f32 %v105, %v106
  %v108 = vmax.f32 %v107, 0.0
  %v109 = vld [vmem:[%s3] sm:$0xf]
  %v110 = vadd.f32 %v108, 1e-05
  %v111 = vrsqrt.pop %v110
  %v112 = vmul.f32 %v109, %v111
  %v113 = vld [vmem:[%s4] sm:$0xf]
  %v114 = vmul.f32 %v104, %v112
  %v115 = vsub.f32 %v113, %v114
  %117 = vset.pattern.permute.xlu0 0
  %118 = vperm.xlu0 %117, %v112
  %v119 = vpop.permute.xlu0 %118
  %v121 = vmul.f32 %v91, %v119
  %123 = vset.pattern.permute.xlu0 0
  %124 = vperm.xlu0 %123, %v115
  %v125 = vpop.permute.xlu0 %124
  %v127 = vadd.f32 %v121, %v125
  %vm128 = vcmp.ge.f32.partialorder %v127, 0.0
  %v129 = vmul.f32 %v127, 0.2
  %v130 = vsel %vm128, %v127, %v129
  %v131 = vpack.c.bf16 %v130, %v130
  %132 = vst [vmem:[%s5] sm:$0x3] %v131
  // Predicated region
  $region22: #{_lambda_.16} parent=0 // pred_check
    _
  $region23: #{_lambda_.16} parent=0 // pred_check_branch
    %134 = sbr.rel (0) target = $region25
  $region24: #{_lambda_.16} parent=0 // pred_region
    _
  $region25: #{_lambda_.16} parent=0 // pred_fallthru
    _
  // Predicated region
  $region26: #{_lambda_.16} parent=0 // pred_check
    _
  $region27: #{_lambda_.16} parent=0 // pred_check_branch
    %136 = sbr.rel (0) target = $region29
  $region28: #{_lambda_.16} parent=0 // pred_region
    _
  $region29: #{_lambda_.16} parent=0 // pred_fallthru
    _

// kernel: _lambda_.17
$region0: #{_lambda_.17}
  #allocation0 [shape = 'u32[]', space=smem, size = 0x4, offset = 0x4, fixed_abs, tag = 'smem constant byte address 0x4 - core index']
  #allocation1 [shape = 'u32[144,128]{1,0:T(1,128)}', space=vmem, size = 0x12000, scoped, tag = 'internal scratch']
  %s0 = inlined_call_operand.vmem [shape: bf16[1,8,64], index: 0, kind: input, shape index: {}]
  %s1 = inlined_call_operand.vmem [shape: bf16[1,64,32], index: 1, kind: input, shape index: {}]
  %s2 = inlined_call_operand.vmem [shape: f32[8,1], index: 2, kind: input, shape index: {}]
  %s3 = inlined_call_operand.vmem [shape: f32[8,1], index: 3, kind: input, shape index: {}]
  %s4 = inlined_call_operand.vmem [shape: f32[8,1], index: 4, kind: input, shape index: {}]
  %s5 = inlined_call_operand.vmem [shape: bf16[1,8,32], index: 5, kind: output, shape index: {}]
  %s6 = sld [smem:[#allocation0]]
  $region30: #{_lambda_.17} parent=0
    _
  %s8 = ssub.s32 1, %s6
  %s9 = scalar_select 0, %s8, %s6
  // Predicated region
  $region2: #{_lambda_.17} parent=0 // pred_check
    _
  $region3: #{_lambda_.17} parent=0 // pred_check_branch
    %11 = sbr.rel (0) target = $region5
  $region4: #{_lambda_.17} parent=0 // pred_region
    _
  $region5: #{_lambda_.17} parent=0 // pred_fallthru
    _
  // Predicated region
  $region6: #{_lambda_.17} parent=0 // pred_check
    _
  $region7: #{_lambda_.17} parent=0 // pred_check_branch
    %13 = sbr.rel (0) target = $region9
  $region8: #{_lambda_.17} parent=0 // pred_region
    _
  $region9: #{_lambda_.17} parent=0 // pred_fallthru
    _
  // Predicated region
  $region10: #{_lambda_.17} parent=0 // pred_check
    _
  $region11: #{_lambda_.17} parent=0 // pred_check_branch
    %15 = sbr.rel (0) target = $region13
  $region12: #{_lambda_.17} parent=0 // pred_region
    _
  $region13: #{_lambda_.17} parent=0 // pred_fallthru
    _
  // Predicated region
  $region14: #{_lambda_.17} parent=0 // pred_check
    _
  $region15: #{_lambda_.17} parent=0 // pred_check_branch
    %17 = sbr.rel (0) target = $region17
  $region16: #{_lambda_.17} parent=0 // pred_region
    _
  $region17: #{_lambda_.17} parent=0 // pred_fallthru
    _
  // Predicated region
  $region18: #{_lambda_.17} parent=0 // pred_check
    _
  $region19: #{_lambda_.17} parent=0 // pred_check_branch
    %19 = sbr.rel (0) target = $region21
  $region20: #{_lambda_.17} parent=0 // pred_region
    _
  $region21: #{_lambda_.17} parent=0 // pred_fallthru
    _
  %v21 = vld [vmem:[%s2] sm:$0xff]
  %v22 = vld [vmem:[%s0] sm:$0xf]
  %v23 = vld [vmem:[%s1] sm:$0xf]
  %v24 = vld [vmem:[%s1 + $0x4] sm:$0xf]
  %v25 = vld [vmem:[%s1 + $0x8] sm:$0xf]
  %v26 = vld [vmem:[%s1 + $0xc] sm:$0xf]
  %v27 = vld [vmem:[%s1 + $0x10] sm:$0xf]
  %v28 = vld [vmem:[%s1 + $0x14] sm:$0xf]
  %v29 = vld [vmem:[%s1 + $0x18] sm:$0xf]
  %v30 = vld [vmem:[%s1 + $0x1c] sm:$0xf]
  %32 = vset.pattern.permute.xlu0 0
  %33 = vperm.xlu0 %32, %v21
  %v34 = vpop.permute.xlu0 %33
  %v44 = vunpack.c.l.b16 %v23
  %v45 = vunpack.c.l.b16 %v24
  %v46 = vunpack.c.l.b16 %v25
  %v47 = vunpack.c.l.b16 %v26
  %v48 = vunpack.c.l.b16 %v27
  %v49 = vunpack.c.l.b16 %v28
  %v50 = vunpack.c.l.b16 %v29
  %v51 = vunpack.c.l.b16 %v30
  %v52 = vpack.c.b16 %v45, %v44
  %v53 = vpack.c.b16 %v47, %v46
  %v54 = vpack.c.b16 %v49, %v48
  %v55 = vpack.c.b16 %v51, %v50
  %vm60 = vcmask 523264
  %v62 = vsel %vm60, %v22, 0
  %64 = vmatprep.subr.bf16.mxu0 0
  %65 = vmatpush1.bf16.msra.mxu0 0
  %66 = vmatprep.subr.bf16.mxu0 0
  %67 = vmatpush1.bf16.msra.mxu0 0
  %68 = vmatprep.subr.bf16.mxu0 0
  %69 = vmatpush1.bf16.msra.mxu0 0
  %70 = vmatprep.subr.bf16.mxu0 0
  %71 = vmatpush1.bf16.msra.mxu0 0
  %72 = vmatprep.subr.bf16.mxu0 0
  %73 = vmatpush1.bf16.msra.mxu0 %v55
  %74 = vmatprep.subr.bf16.mxu0 0
  %75 = vmatpush1.bf16.msra.mxu0 %v54
  %76 = vmatprep.subr.bf16.mxu0 0
  %77 = vmatpush1.bf16.msra.mxu0 %v53
  %78 = vmatprep.subr.bf16.mxu0 0
  %79 = vmatpush1.bf16.msra.mxu0 %v52
  %80 = vmatprep.subr.bf16.mxu0 0
  %81 = vmatpush2.bf16.msra.mxu0 0
  %82 = vmatprep.subr.bf16.mxu0 0
  %83 = vmatpush2.bf16.msra.mxu0 0
  %84 = vmatprep.subr.bf16.mxu0 0
  %85 = vmatpush2.bf16.msra.mxu0 0
  %86 = vmatprep.subr.bf16.mxu0 0
  %87 = vmatpush2.bf16.msra.mxu0 0
  %88 = vmatprep.subr.bf16.mxu0 0
  %89 = vmatpush2.bf16.msra.mxu0 0
  %90 = vmatprep.subr.bf16.mxu0 0
  %91 = vmatpush2.bf16.msra.mxu0 0
  %92 = vmatprep.subr.bf16.mxu0 0
  %93 = vmatpush2.bf16.msra.mxu0 0
  %94 = vmatprep.subr.bf16.mxu0 0
  %95 = vmatpush2.bf16.msra.mxu0 0
  %96 = vmatprep.mubr.bf16.mxu0 0
  %97 = vmatmul.mubr.bf16.gmra.mxu0 %v62
  %v98 = vpop.f32.mrf.mxu0
  %v99 = vadd.f32 %v34, %v98
  %v100 = vpop.f32.mrf.mxu0
  %v101 = vpop.f32.mrf.mxu0
  %v102 = vpop.f32.mrf.mxu0
  %103 = vdwg.mxu0
  %vm104 = vcmask 261120
  %v105 = vsel %vm104, %v99, 0.0
  %106 = vadd.xlane.f32.xlu0 %v105
  %v107 = vpop.xlane.xlu0 %106
  %v108 = vmul.f32 %v99, %v99
  %v109 = vsel %vm104, %v108, 0.0
  %110 = vadd.xlane.f32.xlu0 %v109
  %v111 = vpop.xlane.xlu0 %110
  %v112 = vmul.f32 %v107, 0.03125
  %v113 = vmul.f32 %v111, 0.03125
  %v114 = vmul.f32 %v112, %v112
  %v115 = vsub.f32 %v113, %v114
  %v116 = vmax.f32 %v115, 0.0
  %v117 = vld [vmem:[%s3] sm:$0xff]
  %v118 = vadd.f32 %v116, 1e-05
  %v119 = vrsqrt.pop %v118
  %v120 = vmul.f32 %v117, %v119
  %v121 = vld [vmem:[%s4] sm:$0xff]
  %v122 = vmul.f32 %v112, %v120
  %v123 = vsub.f32 %v121, %v122
  %125 = vset.pattern.permute.xlu0 0
  %126 = vperm.xlu0 %125, %v120
  %v127 = vpop.permute.xlu0 %126
  %v129 = vmul.f32 %v99, %v127
  %131 = vset.pattern.permute.xlu0 0
  %132 = vperm.xlu0 %131, %v123
  %v133 = vpop.permute.xlu0 %132
  %v135 = vadd.f32 %v129, %v133
  %vm136 = vcmp.ge.f32.partialorder %v135, 0.0
  %v137 = vmul.f32 %v135, 0.2
  %v138 = vsel %vm136, %v135, %v137
  %v139 = vpack.c.bf16 %v138, %v138
  %vm140 = vcmask 257024
  %141 = vst.msk [vmem:[%s5] sm:$0xf] %vm140, %v139
  // Predicated region
  $region22: #{_lambda_.17} parent=0 // pred_check
    _
  $region23: #{_lambda_.17} parent=0 // pred_check_branch
    %143 = sbr.rel (0) target = $region25
  $region24: #{_lambda_.17} parent=0 // pred_region
    _
  $region25: #{_lambda_.17} parent=0 // pred_fallthru
    _
  // Predicated region
  $region26: #{_lambda_.17} parent=0 // pred_check
    _
  $region27: #{_lambda_.17} parent=0 // pred_check_branch
    %145 = sbr.rel (0) target = $region29
  $region28: #{_lambda_.17} parent=0 // pred_region
    _
  $region29: #{_lambda_.17} parent=0 // pred_fallthru
    _

// kernel: _lambda_.18
$region0: #{_lambda_.18}
  #allocation0 [shape = 'u32[]', space=smem, size = 0x4, offset = 0x4, fixed_abs, tag = 'smem constant byte address 0x4 - core index']
  #allocation1 [shape = 'u32[144,128]{1,0:T(1,128)}', space=vmem, size = 0x12000, scoped, tag = 'internal scratch']
  %s0 = inlined_call_operand.vmem [shape: bf16[1,8,72], index: 0, kind: input, shape index: {}]
  %s1 = inlined_call_operand.vmem [shape: bf16[1,72,32], index: 1, kind: input, shape index: {}]
  %s2 = inlined_call_operand.vmem [shape: f32[8,1], index: 2, kind: input, shape index: {}]
  %s3 = inlined_call_operand.vmem [shape: f32[8,1], index: 3, kind: input, shape index: {}]
  %s4 = inlined_call_operand.vmem [shape: f32[8,1], index: 4, kind: input, shape index: {}]
  %s5 = inlined_call_operand.vmem [shape: bf16[1,8,32], index: 5, kind: output, shape index: {}]
  %s6 = sld [smem:[#allocation0]]
  $region30: #{_lambda_.18} parent=0
    _
  %s8 = ssub.s32 1, %s6
  %s9 = scalar_select 0, %s8, %s6
  // Predicated region
  $region2: #{_lambda_.18} parent=0 // pred_check
    _
  $region3: #{_lambda_.18} parent=0 // pred_check_branch
    %11 = sbr.rel (0) target = $region5
  $region4: #{_lambda_.18} parent=0 // pred_region
    _
  $region5: #{_lambda_.18} parent=0 // pred_fallthru
    _
  // Predicated region
  $region6: #{_lambda_.18} parent=0 // pred_check
    _
  $region7: #{_lambda_.18} parent=0 // pred_check_branch
    %13 = sbr.rel (0) target = $region9
  $region8: #{_lambda_.18} parent=0 // pred_region
    _
  $region9: #{_lambda_.18} parent=0 // pred_fallthru
    _
  // Predicated region
  $region10: #{_lambda_.18} parent=0 // pred_check
    _
  $region11: #{_lambda_.18} parent=0 // pred_check_branch
    %15 = sbr.rel (0) target = $region13
  $region12: #{_lambda_.18} parent=0 // pred_region
    _
  $region13: #{_lambda_.18} parent=0 // pred_fallthru
    _
  // Predicated region
  $region14: #{_lambda_.18} parent=0 // pred_check
    _
  $region15: #{_lambda_.18} parent=0 // pred_check_branch
    %17 = sbr.rel (0) target = $region17
  $region16: #{_lambda_.18} parent=0 // pred_region
    _
  $region17: #{_lambda_.18} parent=0 // pred_fallthru
    _
  // Predicated region
  $region18: #{_lambda_.18} parent=0 // pred_check
    _
  $region19: #{_lambda_.18} parent=0 // pred_check_branch
    %19 = sbr.rel (0) target = $region21
  $region20: #{_lambda_.18} parent=0 // pred_region
    _
  $region21: #{_lambda_.18} parent=0 // pred_fallthru
    _
  %v21 = vld [vmem:[%s2] sm:$0xff]
  %v22 = vld [vmem:[%s0] sm:$0xf]
  %v23 = vld [vmem:[%s1] sm:$0xf]
  %v24 = vld [vmem:[%s1 + $0x4] sm:$0xf]
  %v25 = vld [vmem:[%s1 + $0x8] sm:$0xf]
  %v26 = vld [vmem:[%s1 + $0xc] sm:$0xf]
  %v27 = vld [vmem:[%s1 + $0x10] sm:$0xf]
  %v28 = vld [vmem:[%s1 + $0x14] sm:$0xf]
  %v29 = vld [vmem:[%s1 + $0x18] sm:$0xf]
  %v30 = vld [vmem:[%s1 + $0x1c] sm:$0xf]
  %v31 = vld [vmem:[%s1 + $0x20] sm:$0xf]
  %33 = vset.pattern.permute.xlu0 0
  %34 = vperm.xlu0 %33, %v21
  %v35 = vpop.permute.xlu0 %34
  %v46 = vunpack.c.l.b16 %v23
  %v47 = vunpack.c.l.b16 %v24
  %v48 = vunpack.c.l.b16 %v25
  %v49 = vunpack.c.l.b16 %v26
  %v50 = vunpack.c.l.b16 %v27
  %v51 = vunpack.c.l.b16 %v28
  %v52 = vunpack.c.l.b16 %v29
  %v53 = vunpack.c.l.b16 %v30
  %v54 = vunpack.c.l.b16 %v31
  %v55 = vpack.c.b16 %v47, %v46
  %v56 = vpack.c.b16 %v49, %v48
  %v57 = vpack.c.b16 %v51, %v50
  %v58 = vpack.c.b16 %v53, %v52
  %v59 = vpack.c.b16 %v54, %v54
  %vm64 = vcmask 588800
  %v66 = vsel %vm64, %v22, 0
  %vm68 = vcmask 1043456
  %v70 = vsel %vm68, %v59, 0
  %72 = vmatprep.subr.bf16.mxu0 0
  %73 = vmatpush1.bf16.msra.mxu0 0
  %74 = vmatprep.subr.bf16.mxu0 0
  %75 = vmatpush1.bf16.msra.mxu0 0
  %76 = vmatprep.subr.bf16.mxu0 0
  %77 = vmatpush1.bf16.msra.mxu0 0
  %78 = vmatprep.subr.bf16.mxu0 0
  %79 = vmatpush1.bf16.msra.mxu0 %v70
  %80 = vmatprep.subr.bf16.mxu0 0
  %81 = vmatpush1.bf16.msra.mxu0 %v58
  %82 = vmatprep.subr.bf16.mxu0 0
  %83 = vmatpush1.bf16.msra.mxu0 %v57
  %84 = vmatprep.subr.bf16.mxu0 0
  %85 = vmatpush1.bf16.msra.mxu0 %v56
  %86 = vmatprep.subr.bf16.mxu0 0
  %87 = vmatpush1.bf16.msra.mxu0 %v55
  %88 = vmatprep.subr.bf16.mxu0 0
  %89 = vmatpush2.bf16.msra.mxu0 0
  %90 = vmatprep.subr.bf16.mxu0 0
  %91 = vmatpush2.bf16.msra.mxu0 0
  %92 = vmatprep.subr.bf16.mxu0 0
  %93 = vmatpush2.bf16.msra.mxu0 0
  %94 = vmatprep.subr.bf16.mxu0 0
  %95 = vmatpush2.bf16.msra.mxu0 0
  %96 = vmatprep.subr.bf16.mxu0 0
  %97 = vmatpush2.bf16.msra.mxu0 0
  %98 = vmatprep.subr.bf16.mxu0 0
  %99 = vmatpush2.bf16.msra.mxu0 0
  %100 = vmatprep.subr.bf16.mxu0 0
  %101 = vmatpush2.bf16.msra.mxu0 0
  %102 = vmatprep.subr.bf16.mxu0 0
  %103 = vmatpush2.bf16.msra.mxu0 0
  %104 = vmatprep.mubr.bf16.mxu0 0
  %105 = vmatmul.mubr.bf16.gmra.mxu0 %v66
  %v106 = vpop.f32.mrf.mxu0
  %v107 = vadd.f32 %v35, %v106
  %v108 = vpop.f32.mrf.mxu0
  %v109 = vpop.f32.mrf.mxu0
  %v110 = vpop.f32.mrf.mxu0
  %111 = vdwg.mxu0
  %vm112 = vcmask 261120
  %v113 = vsel %vm112, %v107, 0.0
  %114 = vadd.xlane.f32.xlu0 %v113
  %v115 = vpop.xlane.xlu0 %114
  %v116 = vmul.f32 %v107, %v107
  %v117 = vsel %vm112, %v116, 0.0
  %118 = vadd.xlane.f32.xlu0 %v117
  %v119 = vpop.xlane.xlu0 %118
  %v120 = vmul.f32 %v115, 0.03125
  %v121 = vmul.f32 %v119, 0.03125
  %v122 = vmul.f32 %v120, %v120
  %v123 = vsub.f32 %v121, %v122
  %v124 = vmax.f32 %v123, 0.0
  %v125 = vld [vmem:[%s3] sm:$0xff]
  %v126 = vadd.f32 %v124, 1e-05
  %v127 = vrsqrt.pop %v126
  %v128 = vmul.f32 %v125, %v127
  %v129 = vld [vmem:[%s4] sm:$0xff]
  %v130 = vmul.f32 %v120, %v128
  %v131 = vsub.f32 %v129, %v130
  %133 = vset.pattern.permute.xlu0 0
  %134 = vperm.xlu0 %133, %v128
  %v135 = vpop.permute.xlu0 %134
  %v137 = vmul.f32 %v107, %v135
  %139 = vset.pattern.permute.xlu0 0
  %140 = vperm.xlu0 %139, %v131
  %v141 = vpop.permute.xlu0 %140
  %v143 = vadd.f32 %v137, %v141
  %vm144 = vcmp.ge.f32.partialorder %v143, 0.0
  %v145 = vmul.f32 %v143, 0.2
  %v146 = vsel %vm144, %v143, %v145
  %v147 = vpack.c.bf16 %v146, %v146
  %vm148 = vcmask 257024
  %149 = vst.msk [vmem:[%s5] sm:$0xf] %vm148, %v147
  // Predicated region
  $region22: #{_lambda_.18} parent=0 // pred_check
    _
  $region23: #{_lambda_.18} parent=0 // pred_check_branch
    %151 = sbr.rel (0) target = $region25
  $region24: #{_lambda_.18} parent=0 // pred_region
    _
  $region25: #{_lambda_.18} parent=0 // pred_fallthru
    _
  // Predicated region
  $region26: #{_lambda_.18} parent=0 // pred_check
    _
  $region27: #{_lambda_.18} parent=0 // pred_check_branch
    %153 = sbr.rel (0) target = $region29
  $region28: #{_lambda_.18} parent=0 // pred_region
    _
  $region29: #{_lambda_.18} parent=0 // pred_fallthru
    _

// kernel: _lambda_.20
$region0: #{_lambda_.20}
  #allocation0 [shape = 'u32[]', space=smem, size = 0x4, offset = 0x4, fixed_abs, tag = 'smem constant byte address 0x4 - core index']
  #allocation1 [shape = 'u32[144,128]{1,0:T(1,128)}', space=vmem, size = 0x12000, scoped, tag = 'internal scratch']
  %s0 = inlined_call_operand.vmem [shape: bf16[1,16,128], index: 0, kind: input, shape index: {}]
  %s1 = inlined_call_operand.vmem [shape: bf16[1,128,8], index: 1, kind: input, shape index: {}]
  %s2 = inlined_call_operand.vmem [shape: f32[16,1], index: 2, kind: input, shape index: {}]
  %s3 = inlined_call_operand.vmem [shape: f32[16,1], index: 3, kind: input, shape index: {}]
  %s4 = inlined_call_operand.vmem [shape: f32[16,1], index: 4, kind: input, shape index: {}]
  %s5 = inlined_call_operand.vmem [shape: bf16[1,16,8], index: 5, kind: output, shape index: {}]
  %s6 = sld [smem:[#allocation0]]
  $region30: #{_lambda_.20} parent=0
    _
  %s8 = ssub.s32 1, %s6
  %s9 = scalar_select 0, %s8, %s6
  // Predicated region
  $region2: #{_lambda_.20} parent=0 // pred_check
    _
  $region3: #{_lambda_.20} parent=0 // pred_check_branch
    %11 = sbr.rel (0) target = $region5
  $region4: #{_lambda_.20} parent=0 // pred_region
    _
  $region5: #{_lambda_.20} parent=0 // pred_fallthru
    _
  // Predicated region
  $region6: #{_lambda_.20} parent=0 // pred_check
    _
  $region7: #{_lambda_.20} parent=0 // pred_check_branch
    %13 = sbr.rel (0) target = $region9
  $region8: #{_lambda_.20} parent=0 // pred_region
    _
  $region9: #{_lambda_.20} parent=0 // pred_fallthru
    _
  // Predicated region
  $region10: #{_lambda_.20} parent=0 // pred_check
    _
  $region11: #{_lambda_.20} parent=0 // pred_check_branch
    %15 = sbr.rel (0) target = $region13
  $region12: #{_lambda_.20} parent=0 // pred_region
    _
  $region13: #{_lambda_.20} parent=0 // pred_fallthru
    _
  // Predicated region
  $region14: #{_lambda_.20} parent=0 // pred_check
    _
  $region15: #{_lambda_.20} parent=0 // pred_check_branch
    %17 = sbr.rel (0) target = $region17
  $region16: #{_lambda_.20} parent=0 // pred_region
    _
  $region17: #{_lambda_.20} parent=0 // pred_fallthru
    _
  // Predicated region
  $region18: #{_lambda_.20} parent=0 // pred_check
    _
  $region19: #{_lambda_.20} parent=0 // pred_check_branch
    %19 = sbr.rel (0) target = $region21
  $region20: #{_lambda_.20} parent=0 // pred_region
    _
  $region21: #{_lambda_.20} parent=0 // pred_fallthru
    _
  %v21 = vld [vmem:[%s2] sm:$0xff]
  %v22 = vld [vmem:[%s2 + $0x8] sm:$0xff]
  %v23 = vld [vmem:[%s0] sm:$0xf]
  %v24 = vld [vmem:[%s0 + $0x4] sm:$0xf]
  %v25 = vld [vmem:[%s1] sm:$0xf]
  %v26 = vld [vmem:[%s1 + $0x4] sm:$0xf]
  %v27 = vld [vmem:[%s1 + $0x8] sm:$0xf]
  %v28 = vld [vmem:[%s1 + $0xc] sm:$0xf]
  %v29 = vld [vmem:[%s1 + $0x10] sm:$0xf]
  %v30 = vld [vmem:[%s1 + $0x14] sm:$0xf]
  %v31 = vld [vmem:[%s1 + $0x18] sm:$0xf]
  %v32 = vld [vmem:[%s1 + $0x1c] sm:$0xf]
  %v33 = vld [vmem:[%s1 + $0x20] sm:$0xf]
  %v34 = vld [vmem:[%s1 + $0x24] sm:$0xf]
  %v35 = vld [vmem:[%s1 + $0x28] sm:$0xf]
  %v36 = vld [vmem:[%s1 + $0x2c] sm:$0xf]
  %v37 = vld [vmem:[%s1 + $0x30] sm:$0xf]
  %v38 = vld [vmem:[%s1 + $0x34] sm:$0xf]
  %v39 = vld [vmem:[%s1 + $0x38] sm:$0xf]
  %v40 = vld [vmem:[%s1 + $0x3c] sm:$0xf]
  %42 = vset.pattern.permute.xlu0 0
  %43 = vperm.xlu0 %42, %v21
  %v44 = vpop.permute.xlu0 %43
  %47 = vset.pattern.permute.xlu0 0
  %48 = vperm.xlu0 %47, %v22
  %v49 = vpop.permute.xlu0 %48
  %v53 = vunpack.c.l.b16 %v23
  %v54 = vunpack.c.l.b16 %v24
  %v55 = vpack.c.b16 %v54, %v53
  %v73 = vunpack.c.l.b16 %v25
  %v74 = vunpack.c.l.b16 %v26
  %v75 = vunpack.c.l.b16 %v27
  %v76 = vunpack.c.l.b16 %v28
  %v77 = vunpack.c.l.b16 %v29
  %v78 = vunpack.c.l.b16 %v30
  %v79 = vunpack.c.l.b16 %v31
  %v80 = vunpack.c.l.b16 %v32
  %v81 = vunpack.c.l.b16 %v33
  %v82 = vunpack.c.l.b16 %v34
  %v83 = vunpack.c.l.b16 %v35
  %v84 = vunpack.c.l.b16 %v36
  %v85 = vunpack.c.l.b16 %v37
  %v86 = vunpack.c.l.b16 %v38
  %v87 = vunpack.c.l.b16 %v39
  %v88 = vunpack.c.l.b16 %v40
  %v89 = vpack.c.b16 %v74, %v73
  %v90 = vpack.c.b16 %v76, %v75
  %v91 = vpack.c.b16 %v78, %v77
  %v92 = vpack.c.b16 %v80, %v79
  %v93 = vpack.c.b16 %v82, %v81
  %v94 = vpack.c.b16 %v84, %v83
  %v95 = vpack.c.b16 %v86, %v85
  %v96 = vpack.c.b16 %v88, %v87
  %105 = vmatprep.subr.bf16.mxu0 0
  %106 = vmatpush1.bf16.msra.mxu0 %v96
  %107 = vmatprep.subr.bf16.mxu0 0
  %108 = vmatpush1.bf16.msra.mxu0 %v95
  %109 = vmatprep.subr.bf16.mxu0 0
  %110 = vmatpush1.bf16.msra.mxu0 %v94
  %111 = vmatprep.subr.bf16.mxu0 0
  %112 = vmatpush1.bf16.msra.mxu0 %v93
  %113 = vmatprep.subr.bf16.mxu0 0
  %114 = vmatpush1.bf16.msra.mxu0 %v92
  %115 = vmatprep.subr.bf16.mxu0 0
  %116 = vmatpush1.bf16.msra.mxu0 %v91
  %117 = vmatprep.subr.bf16.mxu0 0
  %118 = vmatpush1.bf16.msra.mxu0 %v90
  %119 = vmatprep.subr.bf16.mxu0 0
  %120 = vmatpush1.bf16.msra.mxu0 %v89
  %121 = vmatprep.subr.bf16.mxu0 0
  %122 = vmatpush2.bf16.msra.mxu0 0
  %123 = vmatprep.subr.bf16.mxu0 0
  %124 = vmatpush2.bf16.msra.mxu0 0
  %125 = vmatprep.subr.bf16.mxu0 0
  %126 = vmatpush2.bf16.msra.mxu0 0
  %127 = vmatprep.subr.bf16.mxu0 0
  %128 = vmatpush2.bf16.msra.mxu0 0
  %129 = vmatprep.subr.bf16.mxu0 0
  %130 = vmatpush2.bf16.msra.mxu0 0
  %131 = vmatprep.subr.bf16.mxu0 0
  %132 = vmatpush2.bf16.msra.mxu0 0
  %133 = vmatprep.subr.bf16.mxu0 0
  %134 = vmatpush2.bf16.msra.mxu0 0
  %135 = vmatprep.subr.bf16.mxu0 0
  %136 = vmatpush2.bf16.msra.mxu0 0
  %137 = vmatprep.mubr.bf16.mxu0 0
  %138 = vmatmul.mubr.bf16.gmra.mxu0 %v55
  %v139 = vpop.f32.mrf.mxu0
  %v140 = vadd.f32 %v44, %v139
  %v141 = vpop.f32.mrf.mxu0
  %v142 = vpop.f32.mrf.mxu0
  %v143 = vadd.f32 %v49, %v142
  %v144 = vpop.f32.mrf.mxu0
  %145 = vdwg.mxu0
  %vm146 = vcmask 64512
  %v147 = vsel %vm146, %v140, 0.0
  %148 = vadd.xlane.f32.xlu0 %v147
  %v149 = vpop.xlane.xlu0 %148
  %v150 = vsel %vm146, %v143, 0.0
  %151 = vadd.xlane.f32.xlu0 %v150
  %v152 = vpop.xlane.xlu0 %151
  %v153 = vmul.f32 %v140, %v140
  %v154 = vmul.f32 %v143, %v143
  %v155 = vsel %vm146, %v153, 0.0
  %156 = vadd.xlane.f32.xlu0 %v155
  %v157 = vpop.xlane.xlu0 %156
  %v158 = vsel %vm146, %v154, 0.0
  %159 = vadd.xlane.f32.xlu0 %v158
  %v160 = vpop.xlane.xlu0 %159
  %v161 = vmul.f32 %v149, 0.125
  %v162 = vmul.f32 %v152, 0.125
  %v163 = vmul.f32 %v157, 0.125
  %v164 = vmul.f32 %v160, 0.125
  %v165 = vmul.f32 %v161, %v161
  %v166 = vmul.f32 %v162, %v162
  %v167 = vsub.f32 %v163, %v165
  %v168 = vsub.f32 %v164, %v166
  %v169 = vmax.f32 %v167, 0.0
  %v170 = vmax.f32 %v168, 0.0
  %v171 = vld [vmem:[%s3] sm:$0xff]
  %v172 = vld [vmem:[%s3 + $0x8] sm:$0xff]
  %v173 = vadd.f32 %v169, 1e-05
  %v174 = vadd.f32 %v170, 1e-05
  %v175 = vrsqrt.pop %v173
  %v176 = vrsqrt.pop %v174
  %v177 = vmul.f32 %v171, %v175
  %v178 = vmul.f32 %v172, %v176
  %v179 = vld [vmem:[%s4] sm:$0xff]
  %v180 = vld [vmem:[%s4 + $0x8] sm:$0xff]
  %v181 = vmul.f32 %v161, %v177
  %v182 = vmul.f32 %v162, %v178
  %v183 = vsub.f32 %v179, %v181
  %v184 = vsub.f32 %v180, %v182
  %186 = vset.pattern.permute.xlu0 0
  %187 = vperm.xlu0 %186, %v177
  %v188 = vpop.permute.xlu0 %187
  %191 = vset.pattern.permute.xlu0 0
  %192 = vperm.xlu0 %191, %v178
  %v193 = vpop.permute.xlu0 %192
  %v195 = vmul.f32 %v140, %v188
  %v196 = vmul.f32 %v143, %v193
  %198 = vset.pattern.permute.xlu0 0
  %199 = vperm.xlu0 %198, %v183
  %v200 = vpop.permute.xlu0 %199
  %203 = vset.pattern.permute.xlu0 0
  %204 = vperm.xlu0 %203, %v184
  %v205 = vpop.permute.xlu0 %204
  %v207 = vadd.f32 %v195, %v200
  %v208 = vadd.f32 %v196, %v205
  %vm209 = vcmp.ge.f32.partialorder %v207, 0.0
  %vm210 = vcmp.ge.f32.partialorder %v208, 0.0
  %v211 = vmul.f32 %v207, 0.2
  %v212 = vmul.f32 %v208, 0.2
  %v213 = vsel %vm209, %v207, %v211
  %v214 = vsel %vm210, %v208, %v212
  %v215 = vpack.c.bf16 %v214, %v213
  %v217 = vunpack.c.l.b16 %v215
  %v218 = vunpack.c.h.b16 %v215
  %v219 = vpack.c.b16 %v217, %v217
  %v220 = vpack.c.b16 %v218, %v218
  %vm223 = vcmask 60416
  %224 = vst.msk [vmem:[%s5] sm:$0xf] %vm223, %v219
  %225 = vst.msk [vmem:[%s5 + $0x4] sm:$0xf] %vm223, %v220
  // Predicated region
  $region22: #{_lambda_.20} parent=0 // pred_check
    _
  $region23: #{_lambda_.20} parent=0 // pred_check_branch
    %227 = sbr.rel (0) target = $region25
  $region24: #{_lambda_.20} parent=0 // pred_region
    _
  $region25: #{_lambda_.20} parent=0 // pred_fallthru
    _
  // Predicated region
  $region26: #{_lambda_.20} parent=0 // pred_check
    _
  $region27: #{_lambda_.20} parent=0 // pred_check_branch
    %229 = sbr.rel (0) target = $region29
  $region28: #{_lambda_.20} parent=0 // pred_region
    _
  $region29: #{_lambda_.20} parent=0 // pred_fallthru
    _

// kernel: _lambda_.21
$region0: #{_lambda_.21}
  #allocation0 [shape = 'u32[]', space=smem, size = 0x4, offset = 0x4, fixed_abs, tag = 'smem constant byte address 0x4 - core index']
  #allocation1 [shape = 'u32[144,128]{1,0:T(1,128)}', space=vmem, size = 0x12000, scoped, tag = 'internal scratch']
  %s0 = inlined_call_operand.vmem [shape: bf16[1,16,144], index: 0, kind: input, shape index: {}]
  %s1 = inlined_call_operand.vmem [shape: bf16[1,144,8], index: 1, kind: input, shape index: {}]
  %s2 = inlined_call_operand.vmem [shape: f32[16,1], index: 2, kind: input, shape index: {}]
  %s3 = inlined_call_operand.vmem [shape: f32[16,1], index: 3, kind: input, shape index: {}]
  %s4 = inlined_call_operand.vmem [shape: f32[16,1], index: 4, kind: input, shape index: {}]
  %s5 = inlined_call_operand.vmem [shape: bf16[1,16,8], index: 5, kind: output, shape index: {}]
  %s6 = sld [smem:[#allocation0]]
  $region30: #{_lambda_.21} parent=0
    _
  %s8 = ssub.s32 1, %s6
  %s9 = scalar_select 0, %s8, %s6
  // Predicated region
  $region2: #{_lambda_.21} parent=0 // pred_check
    _
  $region3: #{_lambda_.21} parent=0 // pred_check_branch
    %11 = sbr.rel (0) target = $region5
  $region4: #{_lambda_.21} parent=0 // pred_region
    _
  $region5: #{_lambda_.21} parent=0 // pred_fallthru
    _
  // Predicated region
  $region6: #{_lambda_.21} parent=0 // pred_check
    _
  $region7: #{_lambda_.21} parent=0 // pred_check_branch
    %13 = sbr.rel (0) target = $region9
  $region8: #{_lambda_.21} parent=0 // pred_region
    _
  $region9: #{_lambda_.21} parent=0 // pred_fallthru
    _
  // Predicated region
  $region10: #{_lambda_.21} parent=0 // pred_check
    _
  $region11: #{_lambda_.21} parent=0 // pred_check_branch
    %15 = sbr.rel (0) target = $region13
  $region12: #{_lambda_.21} parent=0 // pred_region
    _
  $region13: #{_lambda_.21} parent=0 // pred_fallthru
    _
  // Predicated region
  $region14: #{_lambda_.21} parent=0 // pred_check
    _
  $region15: #{_lambda_.21} parent=0 // pred_check_branch
    %17 = sbr.rel (0) target = $region17
  $region16: #{_lambda_.21} parent=0 // pred_region
    _
  $region17: #{_lambda_.21} parent=0 // pred_fallthru
    _
  // Predicated region
  $region18: #{_lambda_.21} parent=0 // pred_check
    _
  $region19: #{_lambda_.21} parent=0 // pred_check_branch
    %19 = sbr.rel (0) target = $region21
  $region20: #{_lambda_.21} parent=0 // pred_region
    _
  $region21: #{_lambda_.21} parent=0 // pred_fallthru
    _
  %v21 = vld [vmem:[%s2] sm:$0xff]
  %v22 = vld [vmem:[%s2 + $0x8] sm:$0xff]
  %v23 = vld [vmem:[%s0] sm:$0xff]
  %v24 = vld [vmem:[%s0 + $0x8] sm:$0xff]
  %v25 = vld [vmem:[%s1] sm:$0xf]
  %v26 = vld [vmem:[%s1 + $0x4] sm:$0xf]
  %v27 = vld [vmem:[%s1 + $0x8] sm:$0xf]
  %v28 = vld [vmem:[%s1 + $0xc] sm:$0xf]
  %v29 = vld [vmem:[%s1 + $0x10] sm:$0xf]
  %v30 = vld [vmem:[%s1 + $0x14] sm:$0xf]
  %v31 = vld [vmem:[%s1 + $0x18] sm:$0xf]
  %v32 = vld [vmem:[%s1 + $0x1c] sm:$0xf]
  %v33 = vld [vmem:[%s1 + $0x20] sm:$0xf]
  %v34 = vld [vmem:[%s1 + $0x24] sm:$0xf]
  %v35 = vld [vmem:[%s1 + $0x28] sm:$0xf]
  %v36 = vld [vmem:[%s1 + $0x2c] sm:$0xf]
  %v37 = vld [vmem:[%s1 + $0x30] sm:$0xf]
  %v38 = vld [vmem:[%s1 + $0x34] sm:$0xf]
  %v39 = vld [vmem:[%s1 + $0x38] sm:$0xf]
  %v40 = vld [vmem:[%s1 + $0x3c] sm:$0xf]
  %v41 = vld [vmem:[%s1 + $0x40] sm:$0xf]
  %v42 = vld [vmem:[%s1 + $0x44] sm:$0xf]
  %44 = vset.pattern.permute.xlu0 0
  %45 = vperm.xlu0 %44, %v21
  %v46 = vpop.permute.xlu0 %45
  %49 = vset.pattern.permute.xlu0 0
  %50 = vperm.xlu0 %49, %v22
  %v51 = vpop.permute.xlu0 %50
  %v55 = vunpack.c.l.b16 %v23
  %v56 = vunpack.c.h.b16 %v23
  %v57 = vunpack.c.l.b16 %v24
  %v58 = vunpack.c.h.b16 %v24
  %v59 = vpack.c.b16 %v57, %v55
  %v60 = vpack.c.b16 %v58, %v56
  %v80 = vunpack.c.l.b16 %v25
  %v81 = vunpack.c.l.b16 %v26
  %v82 = vunpack.c.l.b16 %v27
  %v83 = vunpack.c.l.b16 %v28
  %v84 = vunpack.c.l.b16 %v29
  %v85 = vunpack.c.l.b16 %v30
  %v86 = vunpack.c.l.b16 %v31
  %v87 = vunpack.c.l.b16 %v32
  %v88 = vunpack.c.l.b16 %v33
  %v89 = vunpack.c.l.b16 %v34
  %v90 = vunpack.c.l.b16 %v35
  %v91 = vunpack.c.l.b16 %v36
  %v92 = vunpack.c.l.b16 %v37
  %v93 = vunpack.c.l.b16 %v38
  %v94 = vunpack.c.l.b16 %v39
  %v95 = vunpack.c.l.b16 %v40
  %v96 = vunpack.c.l.b16 %v41
  %v97 = vunpack.c.l.b16 %v42
  %v98 = vpack.c.b16 %v81, %v80
  %v99 = vpack.c.b16 %v83, %v82
  %v100 = vpack.c.b16 %v85, %v84
  %v101 = vpack.c.b16 %v87, %v86
  %v102 = vpack.c.b16 %v89, %v88
  %v103 = vpack.c.b16 %v91, %v90
  %v104 = vpack.c.b16 %v93, %v92
  %v105 = vpack.c.b16 %v95, %v94
  %v106 = vpack.c.b16 %v97, %v96
  %vm116 = vcmask 130048
  %v118 = vsel %vm116, %v60, 0
  %120 = vmatprep.subr.bf16.mxu0 0
  %121 = vmatpush1.bf16.msra.mxu0 %v105
  %122 = vmatprep.subr.bf16.mxu0 0
  %123 = vmatpush1.bf16.msra.mxu0 %v104
  %124 = vmatprep.subr.bf16.mxu0 0
  %125 = vmatpush1.bf16.msra.mxu0 %v103
  %126 = vmatprep.subr.bf16.mxu0 0
  %127 = vmatpush1.bf16.msra.mxu0 %v102
  %128 = vmatprep.subr.bf16.mxu0 0
  %129 = vmatpush1.bf16.msra.mxu0 %v101
  %130 = vmatprep.subr.bf16.mxu0 0
  %131 = vmatpush1.bf16.msra.mxu0 %v100
  %132 = vmatprep.subr.bf16.mxu0 0
  %133 = vmatpush1.bf16.msra.mxu0 %v99
  %134 = vmatprep.subr.bf16.mxu0 0
  %135 = vmatpush1.bf16.msra.mxu0 %v98
  %136 = vmatprep.subr.bf16.mxu0 0
  %137 = vmatpush2.bf16.msra.mxu0 0
  %138 = vmatprep.subr.bf16.mxu0 0
  %139 = vmatpush2.bf16.msra.mxu0 0
  %140 = vmatprep.subr.bf16.mxu0 0
  %141 = vmatpush2.bf16.msra.mxu0 0
  %142 = vmatprep.subr.bf16.mxu0 0
  %143 = vmatpush2.bf16.msra.mxu0 0
  %144 = vmatprep.subr.bf16.mxu0 0
  %145 = vmatpush2.bf16.msra.mxu0 0
  %146 = vmatprep.subr.bf16.mxu0 0
  %147 = vmatpush2.bf16.msra.mxu0 0
  %148 = vmatprep.subr.bf16.mxu0 0
  %149 = vmatpush2.bf16.msra.mxu0 0
  %150 = vmatprep.subr.bf16.mxu0 0
  %151 = vmatpush2.bf16.msra.mxu0 %v106
  %152 = vmatprep.mubr.bf16.mxu0 %v118
  %153 = vmatmul.mubr.bf16.gmra.mxu0 %v59
  %v154 = vpop.f32.mrf.mxu0
  %v155 = vadd.f32 %v46, %v154
  %v156 = vpop.f32.mrf.mxu0
  %v157 = vpop.f32.mrf.mxu0
  %v158 = vadd.f32 %v51, %v157
  %v159 = vpop.f32.mrf.mxu0
  %160 = vdwg.mxu0
  %vm161 = vcmp.ge.f32.partialorder %v155, 0.0
  %vm162 = vcmp.ge.f32.partialorder %v158, 0.0
  %v163 = vmul.f32 %v155, 0.2
  %v164 = vmul.f32 %v158, 0.2
  %v165 = vsel %vm161, %v155, %v163
  %v166 = vsel %vm162, %v158, %v164
  %v167 = vpack.c.bf16 %v166, %v165
  %v169 = vunpack.c.l.b16 %v167
  %v170 = vunpack.c.h.b16 %v167
  %v171 = vpack.c.b16 %v169, %v169
  %v172 = vpack.c.b16 %v170, %v170
  %vm175 = vcmask 60416
  %176 = vst.msk [vmem:[%s5] sm:$0xf] %vm175, %v171
  %177 = vst.msk [vmem:[%s5 + $0x4] sm:$0xf] %vm175, %v172
  // Predicated region
  $region22: #{_lambda_.21} parent=0 // pred_check
    _
  $region23: #{_lambda_.21} parent=0 // pred_check_branch
    %179 = sbr.rel (0) target = $region25
  $region24: #{_lambda_.21} parent=0 // pred_region
    _
  $region25: #{_lambda_.21} parent=0 // pred_fallthru
    _
  // Predicated region
  $region26: #{_lambda_.21} parent=0 // pred_check
    _
  $region27: #{_lambda_.21} parent=0 // pred_check_branch
    %181 = sbr.rel (0) target = $region29
  $region28: #{_lambda_.21} parent=0 // pred_region
    _
  $region29: #{_lambda_.21} parent=0 // pred_fallthru
    _

// kernel: _lambda_.22
$region0: #{_lambda_.22}
  #allocation0 [shape = 'u32[]', space=smem, size = 0x4, offset = 0x4, fixed_abs, tag = 'smem constant byte address 0x4 - core index']
  #allocation1 [shape = 'u32[144,128]{1,0:T(1,128)}', space=vmem, size = 0x12000, scoped, tag = 'internal scratch']
  %s0 = inlined_call_operand.vmem [shape: bf16[1,16,256], index: 0, kind: input, shape index: {}]
  %s1 = inlined_call_operand.vmem [shape: bf16[1,256,2], index: 1, kind: input, shape index: {}]
  %s2 = inlined_call_operand.vmem [shape: f32[16,1], index: 2, kind: input, shape index: {}]
  %s3 = inlined_call_operand.vmem [shape: f32[16,1], index: 3, kind: input, shape index: {}]
  %s4 = inlined_call_operand.vmem [shape: f32[16,1], index: 4, kind: input, shape index: {}]
  %s5 = inlined_call_operand.vmem [shape: bf16[1,16,2], index: 5, kind: output, shape index: {}]
  %s6 = sld [smem:[#allocation0]]
  $region30: #{_lambda_.22} parent=0
    _
  %s8 = ssub.s32 1, %s6
  %s9 = scalar_select 0, %s8, %s6
  // Predicated region
  $region2: #{_lambda_.22} parent=0 // pred_check
    _
  $region3: #{_lambda_.22} parent=0 // pred_check_branch
    %11 = sbr.rel (0) target = $region5
  $region4: #{_lambda_.22} parent=0 // pred_region
    _
  $region5: #{_lambda_.22} parent=0 // pred_fallthru
    _
  // Predicated region
  $region6: #{_lambda_.22} parent=0 // pred_check
    _
  $region7: #{_lambda_.22} parent=0 // pred_check_branch
    %13 = sbr.rel (0) target = $region9
  $region8: #{_lambda_.22} parent=0 // pred_region
    _
  $region9: #{_lambda_.22} parent=0 // pred_fallthru
    _
  // Predicated region
  $region10: #{_lambda_.22} parent=0 // pred_check
    _
  $region11: #{_lambda_.22} parent=0 // pred_check_branch
    %15 = sbr.rel (0) target = $region13
  $region12: #{_lambda_.22} parent=0 // pred_region
    _
  $region13: #{_lambda_.22} parent=0 // pred_fallthru
    _
  // Predicated region
  $region14: #{_lambda_.22} parent=0 // pred_check
    _
  $region15: #{_lambda_.22} parent=0 // pred_check_branch
    %17 = sbr.rel (0) target = $region17
  $region16: #{_lambda_.22} parent=0 // pred_region
    _
  $region17: #{_lambda_.22} parent=0 // pred_fallthru
    _
  // Predicated region
  $region18: #{_lambda_.22} parent=0 // pred_check
    _
  $region19: #{_lambda_.22} parent=0 // pred_check_branch
    %19 = sbr.rel (0) target = $region21
  $region20: #{_lambda_.22} parent=0 // pred_region
    _
  $region21: #{_lambda_.22} parent=0 // pred_fallthru
    _
  %v21 = vld [vmem:[%s2] sm:$0xff]
  %v22 = vld [vmem:[%s2 + $0x8] sm:$0xff]
  %v23 = vld [vmem:[%s0] sm:$0xff]
  %v24 = vld [vmem:[%s0 + $0x8] sm:$0xff]
  %v25 = vld [vmem:[%s1] sm:$0xf]
  %v26 = vld [vmem:[%s1 + $0x4] sm:$0xf]
  %v27 = vld [vmem:[%s1 + $0x8] sm:$0xf]
  %v28 = vld [vmem:[%s1 + $0xc] sm:$0xf]
  %v29 = vld [vmem:[%s1 + $0x10] sm:$0xf]
  %v30 = vld [vmem:[%s1 + $0x14] sm:$0xf]
  %v31 = vld [vmem:[%s1 + $0x18] sm:$0xf]
  %v32 = vld [vmem:[%s1 + $0x1c] sm:$0xf]
  %v33 = vld [vmem:[%s1 + $0x20] sm:$0xf]
  %v34 = vld [vmem:[%s1 + $0x24] sm:$0xf]
  %v35 = vld [vmem:[%s1 + $0x28] sm:$0xf]
  %v36 = vld [vmem:[%s1 + $0x2c] sm:$0xf]
  %v37 = vld [vmem:[%s1 + $0x30] sm:$0xf]
  %v38 = vld [vmem:[%s1 + $0x34] sm:$0xf]
  %v39 = vld [vmem:[%s1 + $0x38] sm:$0xf]
  %v40 = vld [vmem:[%s1 + $0x3c] sm:$0xf]
  %v41 = vld [vmem:[%s1 + $0x40] sm:$0xf]
  %v42 = vld [vmem:[%s1 + $0x44] sm:$0xf]
  %v43 = vld [vmem:[%s1 + $0x48] sm:$0xf]
  %v44 = vld [vmem:[%s1 + $0x4c] sm:$0xf]
  %v45 = vld [vmem:[%s1 + $0x50] sm:$0xf]
  %v46 = vld [vmem:[%s1 + $0x54] sm:$0xf]
  %v47 = vld [vmem:[%s1 + $0x58] sm:$0xf]
  %v48 = vld [vmem:[%s1 + $0x5c] sm:$0xf]
  %v49 = vld [vmem:[%s1 + $0x60] sm:$0xf]
  %v50 = vld [vmem:[%s1 + $0x64] sm:$0xf]
  %v51 = vld [vmem:[%s1 + $0x68] sm:$0xf]
  %v52 = vld [vmem:[%s1 + $0x6c] sm:$0xf]
  %v53 = vld [vmem:[%s1 + $0x70] sm:$0xf]
  %v54 = vld [vmem:[%s1 + $0x74] sm:$0xf]
  %v55 = vld [vmem:[%s1 + $0x78] sm:$0xf]
  %v56 = vld [vmem:[%s1 + $0x7c] sm:$0xf]
  %58 = vset.pattern.permute.xlu0 0
  %59 = vperm.xlu0 %58, %v21
  %v60 = vpop.permute.xlu0 %59
  %63 = vset.pattern.permute.xlu0 0
  %64 = vperm.xlu0 %63, %v22
  %v65 = vpop.permute.xlu0 %64
  %v69 = vunpack.c.l.b16 %v23
  %v70 = vunpack.c.h.b16 %v23
  %v71 = vunpack.c.l.b16 %v24
  %v72 = vunpack.c.h.b16 %v24
  %v73 = vpack.c.b16 %v71, %v69
  %v74 = vpack.c.b16 %v72, %v70
  %v109 = vunpack.c.l.b16 %v25
  %v110 = vunpack.c.l.b16 %v26
  %v111 = vunpack.c.l.b16 %v27
  %v112 = vunpack.c.l.b16 %v28
  %v113 = vunpack.c.l.b16 %v29
  %v114 = vunpack.c.l.b16 %v30
  %v115 = vunpack.c.l.b16 %v31
  %v116 = vunpack.c.l.b16 %v32
  %v117 = vunpack.c.l.b16 %v33
  %v118 = vunpack.c.l.b16 %v34
  %v119 = vunpack.c.l.b16 %v35
  %v120 = vunpack.c.l.b16 %v36
  %v121 = vunpack.c.l.b16 %v37
  %v122 = vunpack.c.l.b16 %v38
  %v123 = vunpack.c.l.b16 %v39
  %v124 = vunpack.c.l.b16 %v40
  %v125 = vunpack.c.l.b16 %v41
  %v126 = vunpack.c.l.b16 %v42
  %v127 = vunpack.c.l.b16 %v43
  %v128 = vunpack.c.l.b16 %v44
  %v129 = vunpack.c.l.b16 %v45
  %v130 = vunpack.c.l.b16 %v46
  %v131 = vunpack.c.l.b16 %v47
  %v132 = vunpack.c.l.b16 %v48
  %v133 = vunpack.c.l.b16 %v49
  %v134 = vunpack.c.l.b16 %v50
  %v135 = vunpack.c.l.b16 %v51
  %v136 = vunpack.c.l.b16 %v52
  %v137 = vunpack.c.l.b16 %v53
  %v138 = vunpack.c.l.b16 %v54
  %v139 = vunpack.c.l.b16 %v55
  %v140 = vunpack.c.l.b16 %v56
  %v141 = vpack.c.b16 %v110, %v109
  %v142 = vpack.c.b16 %v112, %v111
  %v143 = vpack.c.b16 %v114, %v113
  %v144 = vpack.c.b16 %v116, %v115
  %v145 = vpack.c.b16 %v118, %v117
  %v146 = vpack.c.b16 %v120, %v119
  %v147 = vpack.c.b16 %v122, %v121
  %v148 = vpack.c.b16 %v124, %v123
  %v149 = vpack.c.b16 %v126, %v125
  %v150 = vpack.c.b16 %v128, %v127
  %v151 = vpack.c.b16 %v130, %v129
  %v152 = vpack.c.b16 %v132, %v131
  %v153 = vpack.c.b16 %v134, %v133
  %v154 = vpack.c.b16 %v136, %v135
  %v155 = vpack.c.b16 %v138, %v137
  %v156 = vpack.c.b16 %v140, %v139
  %173 = vmatprep.subr.bf16.mxu0 0
  %174 = vmatpush1.bf16.msra.mxu0 %v148
  %175 = vmatprep.subr.bf16.mxu0 0
  %176 = vmatpush1.bf16.msra.mxu0 %v147
  %177 = vmatprep.subr.bf16.mxu0 0
  %178 = vmatpush1.bf16.msra.mxu0 %v146
  %179 = vmatprep.subr.bf16.mxu0 0
  %180 = vmatpush1.bf16.msra.mxu0 %v145
  %181 = vmatprep.subr.bf16.mxu0 0
  %182 = vmatpush1.bf16.msra.mxu0 %v144
  %183 = vmatprep.subr.bf16.mxu0 0
  %184 = vmatpush1.bf16.msra.mxu0 %v143
  %185 = vmatprep.subr.bf16.mxu0 0
  %186 = vmatpush1.bf16.msra.mxu0 %v142
  %187 = vmatprep.subr.bf16.mxu0 0
  %188 = vmatpush1.bf16.msra.mxu0 %v141
  %189 = vmatprep.subr.bf16.mxu0 0
  %190 = vmatpush2.bf16.msra.mxu0 %v156
  %191 = vmatprep.subr.bf16.mxu0 0
  %192 = vmatpush2.bf16.msra.mxu0 %v155
  %193 = vmatprep.subr.bf16.mxu0 0
  %194 = vmatpush2.bf16.msra.mxu0 %v154
  %195 = vmatprep.subr.bf16.mxu0 0
  %196 = vmatpush2.bf16.msra.mxu0 %v153
  %197 = vmatprep.subr.bf16.mxu0 0
  %198 = vmatpush2.bf16.msra.mxu0 %v152
  %199 = vmatprep.subr.bf16.mxu0 0
  %200 = vmatpush2.bf16.msra.mxu0 %v151
  %201 = vmatprep.subr.bf16.mxu0 0
  %202 = vmatpush2.bf16.msra.mxu0 %v150
  %203 = vmatprep.subr.bf16.mxu0 0
  %204 = vmatpush2.bf16.msra.mxu0 %v149
  %205 = vmatprep.mubr.bf16.mxu0 %v74
  %206 = vmatmul.mubr.bf16.gmra.mxu0 %v73
  %v207 = vpop.f32.mrf.mxu0
  %v208 = vadd.f32 %v60, %v207
  %v209 = vpop.f32.mrf.mxu0
  %v210 = vpop.f32.mrf.mxu0
  %v211 = vadd.f32 %v65, %v210
  %v212 = vpop.f32.mrf.mxu0
  %213 = vdwg.mxu0
  %vm214 = vcmp.ge.f32.partialorder %v208, 0.0
  %vm215 = vcmp.ge.f32.partialorder %v211, 0.0
  %v216 = vmul.f32 %v208, 0.2
  %v217 = vmul.f32 %v211, 0.2
  %v218 = vsel %vm214, %v208, %v216
  %v219 = vsel %vm215, %v211, %v217
  %v220 = vpack.c.bf16 %v219, %v218
  %v222 = vunpack.c.l.b16 %v220
  %v223 = vunpack.c.h.b16 %v220
  %v224 = vpack.c.b16 %v222, %v222
  %v225 = vpack.c.b16 %v223, %v223
  %vm228 = vcmask 11264
  %229 = vst.msk [vmem:[%s5] sm:$0xf] %vm228, %v224
  %230 = vst.msk [vmem:[%s5 + $0x4] sm:$0xf] %vm228, %v225
  // Predicated region
  $region22: #{_lambda_.22} parent=0 // pred_check
    _
  $region23: #{_lambda_.22} parent=0 // pred_check_branch
    %232 = sbr.rel (0) target = $region25
  $region24: #{_lambda_.22} parent=0 // pred_region
    _
  $region25: #{_lambda_.22} parent=0 // pred_fallthru
    _
  // Predicated region
  $region26: #{_lambda_.22} parent=0 // pred_check
    _
  $region27: #{_lambda_.22} parent=0 // pred_check_branch
    %234 = sbr.rel (0) target = $region29
  $region28: #{_lambda_.22} parent=0 // pred_region
    _
  $region29: #{_lambda_.22} parent=0 // pred_fallthru
    _

// kernel: _lambda_.24
$region0: #{_lambda_.24}
  #allocation0 [shape = 'u32[]', space=smem, size = 0x4, offset = 0x4, fixed_abs, tag = 'smem constant byte address 0x4 - core index']
  #allocation1 [shape = 'u32[144,128]{1,0:T(1,128)}', space=vmem, size = 0x12000, scoped, tag = 'internal scratch']
  %s0 = inlined_call_operand.vmem [shape: bf16[1,16,144], index: 0, kind: input, shape index: {}]
  %s1 = inlined_call_operand.vmem [shape: bf16[1,144,8], index: 1, kind: input, shape index: {}]
  %s2 = inlined_call_operand.vmem [shape: f32[16,1], index: 2, kind: input, shape index: {}]
  %s3 = inlined_call_operand.vmem [shape: f32[16,1], index: 3, kind: input, shape index: {}]
  %s4 = inlined_call_operand.vmem [shape: f32[16,1], index: 4, kind: input, shape index: {}]
  %s5 = inlined_call_operand.vmem [shape: bf16[1,16,8], index: 5, kind: output, shape index: {}]
  %s6 = sld [smem:[#allocation0]]
  $region30: #{_lambda_.24} parent=0
    _
  %s8 = ssub.s32 1, %s6
  %s9 = scalar_select 0, %s8, %s6
  // Predicated region
  $region2: #{_lambda_.24} parent=0 // pred_check
    _
  $region3: #{_lambda_.24} parent=0 // pred_check_branch
    %11 = sbr.rel (0) target = $region5
  $region4: #{_lambda_.24} parent=0 // pred_region
    _
  $region5: #{_lambda_.24} parent=0 // pred_fallthru
    _
  // Predicated region
  $region6: #{_lambda_.24} parent=0 // pred_check
    _
  $region7: #{_lambda_.24} parent=0 // pred_check_branch
    %13 = sbr.rel (0) target = $region9
  $region8: #{_lambda_.24} parent=0 // pred_region
    _
  $region9: #{_lambda_.24} parent=0 // pred_fallthru
    _
  // Predicated region
  $region10: #{_lambda_.24} parent=0 // pred_check
    _
  $region11: #{_lambda_.24} parent=0 // pred_check_branch
    %15 = sbr.rel (0) target = $region13
  $region12: #{_lambda_.24} parent=0 // pred_region
    _
  $region13: #{_lambda_.24} parent=0 // pred_fallthru
    _
  // Predicated region
  $region14: #{_lambda_.24} parent=0 // pred_check
    _
  $region15: #{_lambda_.24} parent=0 // pred_check_branch
    %17 = sbr.rel (0) target = $region17
  $region16: #{_lambda_.24} parent=0 // pred_region
    _
  $region17: #{_lambda_.24} parent=0 // pred_fallthru
    _
  // Predicated region
  $region18: #{_lambda_.24} parent=0 // pred_check
    _
  $region19: #{_lambda_.24} parent=0 // pred_check_branch
    %19 = sbr.rel (0) target = $region21
  $region20: #{_lambda_.24} parent=0 // pred_region
    _
  $region21: #{_lambda_.24} parent=0 // pred_fallthru
    _
  %v21 = vld [vmem:[%s2] sm:$0xff]
  %v22 = vld [vmem:[%s2 + $0x8] sm:$0xff]
  %v23 = vld [vmem:[%s0] sm:$0xff]
  %v24 = vld [vmem:[%s0 + $0x8] sm:$0xff]
  %v25 = vld [vmem:[%s1] sm:$0xf]
  %v26 = vld [vmem:[%s1 + $0x4] sm:$0xf]
  %v27 = vld [vmem:[%s1 + $0x8] sm:$0xf]
  %v28 = vld [vmem:[%s1 + $0xc] sm:$0xf]
  %v29 = vld [vmem:[%s1 + $0x10] sm:$0xf]
  %v30 = vld [vmem:[%s1 + $0x14] sm:$0xf]
  %v31 = vld [vmem:[%s1 + $0x18] sm:$0xf]
  %v32 = vld [vmem:[%s1 + $0x1c] sm:$0xf]
  %v33 = vld [vmem:[%s1 + $0x20] sm:$0xf]
  %v34 = vld [vmem:[%s1 + $0x24] sm:$0xf]
  %v35 = vld [vmem:[%s1 + $0x28] sm:$0xf]
  %v36 = vld [vmem:[%s1 + $0x2c] sm:$0xf]
  %v37 = vld [vmem:[%s1 + $0x30] sm:$0xf]
  %v38 = vld [vmem:[%s1 + $0x34] sm:$0xf]
  %v39 = vld [vmem:[%s1 + $0x38] sm:$0xf]
  %v40 = vld [vmem:[%s1 + $0x3c] sm:$0xf]
  %v41 = vld [vmem:[%s1 + $0x40] sm:$0xf]
  %v42 = vld [vmem:[%s1 + $0x44] sm:$0xf]
  %44 = vset.pattern.permute.xlu0 0
  %45 = vperm.xlu0 %44, %v21
  %v46 = vpop.permute.xlu0 %45
  %49 = vset.pattern.permute.xlu0 0
  %50 = vperm.xlu0 %49, %v22
  %v51 = vpop.permute.xlu0 %50
  %v55 = vunpack.c.l.b16 %v23
  %v56 = vunpack.c.h.b16 %v23
  %v57 = vunpack.c.l.b16 %v24
  %v58 = vunpack.c.h.b16 %v24
  %v59 = vpack.c.b16 %v57, %v55
  %v60 = vpack.c.b16 %v58, %v56
  %v80 = vunpack.c.l.b16 %v25
  %v81 = vunpack.c.l.b16 %v26
  %v82 = vunpack.c.l.b16 %v27
  %v83 = vunpack.c.l.b16 %v28
  %v84 = vunpack.c.l.b16 %v29
  %v85 = vunpack.c.l.b16 %v30
  %v86 = vunpack.c.l.b16 %v31
  %v87 = vunpack.c.l.b16 %v32
  %v88 = vunpack.c.l.b16 %v33
  %v89 = vunpack.c.l.b16 %v34
  %v90 = vunpack.c.l.b16 %v35
  %v91 = vunpack.c.l.b16 %v36
  %v92 = vunpack.c.l.b16 %v37
  %v93 = vunpack.c.l.b16 %v38
  %v94 = vunpack.c.l.b16 %v39
  %v95 = vunpack.c.l.b16 %v40
  %v96 = vunpack.c.l.b16 %v41
  %v97 = vunpack.c.l.b16 %v42
  %v98 = vpack.c.b16 %v81, %v80
  %v99 = vpack.c.b16 %v83, %v82
  %v100 = vpack.c.b16 %v85, %v84
  %v101 = vpack.c.b16 %v87, %v86
  %v102 = vpack.c.b16 %v89, %v88
  %v103 = vpack.c.b16 %v91, %v90
  %v104 = vpack.c.b16 %v93, %v92
  %v105 = vpack.c.b16 %v95, %v94
  %v106 = vpack.c.b16 %v97, %v96
  %vm116 = vcmask 130048
  %v118 = vsel %vm116, %v60, 0
  %120 = vmatprep.subr.bf16.mxu0 0
  %121 = vmatpush1.bf16.msra.mxu0 %v105
  %122 = vmatprep.subr.bf16.mxu0 0
  %123 = vmatpush1.bf16.msra.mxu0 %v104
  %124 = vmatprep.subr.bf16.mxu0 0
  %125 = vmatpush1.bf16.msra.mxu0 %v103
  %126 = vmatprep.subr.bf16.mxu0 0
  %127 = vmatpush1.bf16.msra.mxu0 %v102
  %128 = vmatprep.subr.bf16.mxu0 0
  %129 = vmatpush1.bf16.msra.mxu0 %v101
  %130 = vmatprep.subr.bf16.mxu0 0
  %131 = vmatpush1.bf16.msra.mxu0 %v100
  %132 = vmatprep.subr.bf16.mxu0 0
  %133 = vmatpush1.bf16.msra.mxu0 %v99
  %134 = vmatprep.subr.bf16.mxu0 0
  %135 = vmatpush1.bf16.msra.mxu0 %v98
  %136 = vmatprep.subr.bf16.mxu0 0
  %137 = vmatpush2.bf16.msra.mxu0 0
  %138 = vmatprep.subr.bf16.mxu0 0
  %139 = vmatpush2.bf16.msra.mxu0 0
  %140 = vmatprep.subr.bf16.mxu0 0
  %141 = vmatpush2.bf16.msra.mxu0 0
  %142 = vmatprep.subr.bf16.mxu0 0
  %143 = vmatpush2.bf16.msra.mxu0 0
  %144 = vmatprep.subr.bf16.mxu0 0
  %145 = vmatpush2.bf16.msra.mxu0 0
  %146 = vmatprep.subr.bf16.mxu0 0
  %147 = vmatpush2.bf16.msra.mxu0 0
  %148 = vmatprep.subr.bf16.mxu0 0
  %149 = vmatpush2.bf16.msra.mxu0 0
  %150 = vmatprep.subr.bf16.mxu0 0
  %151 = vmatpush2.bf16.msra.mxu0 %v106
  %152 = vmatprep.mubr.bf16.mxu0 %v118
  %153 = vmatmul.mubr.bf16.gmra.mxu0 %v59
  %v154 = vpop.f32.mrf.mxu0
  %v155 = vadd.f32 %v46, %v154
  %v156 = vpop.f32.mrf.mxu0
  %v157 = vpop.f32.mrf.mxu0
  %v158 = vadd.f32 %v51, %v157
  %v159 = vpop.f32.mrf.mxu0
  %160 = vdwg.mxu0
  %vm161 = vcmp.ge.f32.partialorder %v155, 0.0
  %vm162 = vcmp.ge.f32.partialorder %v158, 0.0
  %v163 = vmul.f32 %v155, 0.0
  %v164 = vmul.f32 %v158, 0.0
  %v165 = vsel %vm161, %v155, %v163
  %v166 = vsel %vm162, %v158, %v164
  %v167 = vpack.c.bf16 %v166, %v165
  %v169 = vunpack.c.l.b16 %v167
  %v170 = vunpack.c.h.b16 %v167
  %v171 = vpack.c.b16 %v169, %v169
  %v172 = vpack.c.b16 %v170, %v170
  %vm175 = vcmask 60416
  %176 = vst.msk [vmem:[%s5] sm:$0xf] %vm175, %v171
  %177 = vst.msk [vmem:[%s5 + $0x4] sm:$0xf] %vm175, %v172
  // Predicated region
  $region22: #{_lambda_.24} parent=0 // pred_check
    _
  $region23: #{_lambda_.24} parent=0 // pred_check_branch
    %179 = sbr.rel (0) target = $region25
  $region24: #{_lambda_.24} parent=0 // pred_region
    _
  $region25: #{_lambda_.24} parent=0 // pred_fallthru
    _
  // Predicated region
  $region26: #{_lambda_.24} parent=0 // pred_check
    _
  $region27: #{_lambda_.24} parent=0 // pred_check_branch
    %181 = sbr.rel (0) target = $region29
  $region28: #{_lambda_.24} parent=0 // pred_region
    _
  $region29: #{_lambda_.24} parent=0 // pred_fallthru
    _

// kernel: _lambda_.23
$region0: #{_lambda_.23}
  #allocation0 [shape = 'u32[]', space=smem, size = 0x4, offset = 0x4, fixed_abs, tag = 'smem constant byte address 0x4 - core index']
  #allocation1 [shape = 'u32[144,128]{1,0:T(1,128)}', space=vmem, size = 0x12000, scoped, tag = 'internal scratch']
  %s0 = inlined_call_operand.vmem [shape: bf16[4,16,64], index: 0, kind: input, shape index: {}]
  %s1 = inlined_call_operand.vmem [shape: bf16[4,64,2], index: 1, kind: input, shape index: {}]
  %s2 = inlined_call_operand.vmem [shape: f32[16,1], index: 2, kind: input, shape index: {}]
  %s3 = inlined_call_operand.vmem [shape: f32[16,1], index: 3, kind: input, shape index: {}]
  %s4 = inlined_call_operand.vmem [shape: f32[16,1], index: 4, kind: input, shape index: {}]
  %s5 = inlined_call_operand.vmem [shape: bf16[4,16,2], index: 5, kind: output, shape index: {}]
  %s6 = sld [smem:[#allocation0]]
  $region30: #{_lambda_.23} parent=0
    _
  %s8 = ssub.s32 1, %s6
  %s9 = scalar_select 0, %s8, %s6
  // Predicated region
  $region2: #{_lambda_.23} parent=0 // pred_check
    _
  $region3: #{_lambda_.23} parent=0 // pred_check_branch
    %11 = sbr.rel (0) target = $region5
  $region4: #{_lambda_.23} parent=0 // pred_region
    _
  $region5: #{_lambda_.23} parent=0 // pred_fallthru
    _
  // Predicated region
  $region6: #{_lambda_.23} parent=0 // pred_check
    _
  $region7: #{_lambda_.23} parent=0 // pred_check_branch
    %13 = sbr.rel (0) target = $region9
  $region8: #{_lambda_.23} parent=0 // pred_region
    _
  $region9: #{_lambda_.23} parent=0 // pred_fallthru
    _
  // Predicated region
  $region10: #{_lambda_.23} parent=0 // pred_check
    _
  $region11: #{_lambda_.23} parent=0 // pred_check_branch
    %15 = sbr.rel (0) target = $region13
  $region12: #{_lambda_.23} parent=0 // pred_region
    _
  $region13: #{_lambda_.23} parent=0 // pred_fallthru
    _
  // Predicated region
  $region14: #{_lambda_.23} parent=0 // pred_check
    _
  $region15: #{_lambda_.23} parent=0 // pred_check_branch
    %17 = sbr.rel (0) target = $region17
  $region16: #{_lambda_.23} parent=0 // pred_region
    _
  $region17: #{_lambda_.23} parent=0 // pred_fallthru
    _
  // Predicated region
  $region18: #{_lambda_.23} parent=0 // pred_check
    _
  $region19: #{_lambda_.23} parent=0 // pred_check_branch
    %19 = sbr.rel (0) target = $region21
  $region20: #{_lambda_.23} parent=0 // pred_region
    _
  $region21: #{_lambda_.23} parent=0 // pred_fallthru
    _
  %v21 = vld [vmem:[%s2] sm:$0xff]
  %v22 = vld [vmem:[%s2 + $0x8] sm:$0xff]
  %v23 = vld [vmem:[%s0] sm:$0xf]
  %v24 = vld [vmem:[%s0 + $0x4] sm:$0xf]
  %v25 = vld [vmem:[%s1] sm:$0xf]
  %v26 = vld [vmem:[%s1 + $0x4] sm:$0xf]
  %v27 = vld [vmem:[%s1 + $0x8] sm:$0xf]
  %v28 = vld [vmem:[%s1 + $0xc] sm:$0xf]
  %v29 = vld [vmem:[%s1 + $0x10] sm:$0xf]
  %v30 = vld [vmem:[%s1 + $0x14] sm:$0xf]
  %v31 = vld [vmem:[%s1 + $0x18] sm:$0xf]
  %v32 = vld [vmem:[%s1 + $0x1c] sm:$0xf]
  %34 = vset.pattern.permute.xlu0 0
  %35 = vperm.xlu0 %34, %v21
  %v36 = vpop.permute.xlu0 %35
  %39 = vset.pattern.permute.xlu0 0
  %40 = vperm.xlu0 %39, %v22
  %v41 = vpop.permute.xlu0 %40
  %v45 = vunpack.c.l.b16 %v23
  %v46 = vunpack.c.l.b16 %v24
  %v47 = vpack.c.b16 %v46, %v45
  %v56 = vunpack.c.l.b16 %v25
  %v57 = vunpack.c.l.b16 %v26
  %v58 = vunpack.c.l.b16 %v27
  %v59 = vunpack.c.l.b16 %v28
  %v60 = vunpack.c.l.b16 %v29
  %v61 = vunpack.c.l.b16 %v30
  %v62 = vunpack.c.l.b16 %v31
  %v63 = vunpack.c.l.b16 %v32
  %v64 = vpack.c.b16 %v57, %v56
  %v65 = vpack.c.b16 %v59, %v58
  %v66 = vpack.c.b16 %v61, %v60
  %v67 = vpack.c.b16 %v63, %v62
  %vm72 = vcmask 523264
  %v74 = vsel %vm72, %v47, 0
  %76 = vmatprep.subr.bf16.mxu0 0
  %77 = vmatpush1.bf16.msra.mxu0 0
  %78 = vmatprep.subr.bf16.mxu0 0
  %79 = vmatpush1.bf16.msra.mxu0 0
  %80 = vmatprep.subr.bf16.mxu0 0
  %81 = vmatpush1.bf16.msra.mxu0 0
  %82 = vmatprep.subr.bf16.mxu0 0
  %83 = vmatpush1.bf16.msra.mxu0 0
  %84 = vmatprep.subr.bf16.mxu0 0
  %85 = vmatpush1.bf16.msra.mxu0 %v67
  %86 = vmatprep.subr.bf16.mxu0 0
  %87 = vmatpush1.bf16.msra.mxu0 %v66
  %88 = vmatprep.subr.bf16.mxu0 0
  %89 = vmatpush1.bf16.msra.mxu0 %v65
  %90 = vmatprep.subr.bf16.mxu0 0
  %91 = vmatpush1.bf16.msra.mxu0 %v64
  %92 = vmatprep.subr.bf16.mxu0 0
  %93 = vmatpush2.bf16.msra.mxu0 0
  %94 = vmatprep.subr.bf16.mxu0 0
  %95 = vmatpush2.bf16.msra.mxu0 0
  %96 = vmatprep.subr.bf16.mxu0 0
  %97 = vmatpush2.bf16.msra.mxu0 0
  %98 = vmatprep.subr.bf16.mxu0 0
  %99 = vmatpush2.bf16.msra.mxu0 0
  %100 = vmatprep.subr.bf16.mxu0 0
  %101 = vmatpush2.bf16.msra.mxu0 0
  %102 = vmatprep.subr.bf16.mxu0 0
  %103 = vmatpush2.bf16.msra.mxu0 0
  %104 = vmatprep.subr.bf16.mxu0 0
  %105 = vmatpush2.bf16.msra.mxu0 0
  %106 = vmatprep.subr.bf16.mxu0 0
  %107 = vmatpush2.bf16.msra.mxu0 0
  %108 = vmatprep.mubr.bf16.mxu0 0
  %109 = vmatmul.mubr.bf16.gmra.mxu0 %v74
  %v110 = vpop.f32.mrf.mxu0
  %v111 = vadd.f32 %v36, %v110
  %v112 = vpop.f32.mrf.mxu0
  %v113 = vpop.f32.mrf.mxu0
  %v114 = vadd.f32 %v41, %v113
  %v115 = vpop.f32.mrf.mxu0
  %116 = vdwg.mxu0
  %s117 = scalar_lea.vmem %s0, 8
  %v118 = vld [vmem:[%s117] sm:$0xf]
  %v119 = vld [vmem:[%s117 + $0x4] sm:$0xf]
  %s120 = scalar_lea.vmem %s1, 32
  %v121 = vld [vmem:[%s120] sm:$0xf]
  %v122 = vld [vmem:[%s120 + $0x4] sm:$0xf]
  %v123 = vld [vmem:[%s120 + $0x8] sm:$0xf]
  %v124 = vld [vmem:[%s120 + $0xc] sm:$0xf]
  %v125 = vld [vmem:[%s120 + $0x10] sm:$0xf]
  %v126 = vld [vmem:[%s120 + $0x14] sm:$0xf]
  %v127 = vld [vmem:[%s120 + $0x18] sm:$0xf]
  %v128 = vld [vmem:[%s120 + $0x1c] sm:$0xf]
  %v131 = vunpack.c.l.b16 %v118
  %v132 = vunpack.c.l.b16 %v119
  %v133 = vpack.c.b16 %v132, %v131
  %v142 = vunpack.c.l.b16 %v121
  %v143 = vunpack.c.l.b16 %v122
  %v144 = vunpack.c.l.b16 %v123
  %v145 = vunpack.c.l.b16 %v124
  %v146 = vunpack.c.l.b16 %v125
  %v147 = vunpack.c.l.b16 %v126
  %v148 = vunpack.c.l.b16 %v127
  %v149 = vunpack.c.l.b16 %v128
  %v150 = vpack.c.b16 %v143, %v142
  %v151 = vpack.c.b16 %v145, %v144
  %v152 = vpack.c.b16 %v147, %v146
  %v153 = vpack.c.b16 %v149, %v148
  %v159 = vsel %vm72, %v133, 0
  %161 = vmatprep.subr.bf16.mxu0 0
  %162 = vmatpush1.bf16.msra.mxu0 0
  %163 = vmatprep.subr.bf16.mxu0 0
  %164 = vmatpush1.bf16.msra.mxu0 0
  %165 = vmatprep.subr.bf16.mxu0 0
  %166 = vmatpush1.bf16.msra.mxu0 0
  %167 = vmatprep.subr.bf16.mxu0 0
  %168 = vmatpush1.bf16.msra.mxu0 0
  %169 = vmatprep.subr.bf16.mxu0 0
  %170 = vmatpush1.bf16.msra.mxu0 %v153
  %171 = vmatprep.subr.bf16.mxu0 0
  %172 = vmatpush1.bf16.msra.mxu0 %v152
  %173 = vmatprep.subr.bf16.mxu0 0
  %174 = vmatpush1.bf16.msra.mxu0 %v151
  %175 = vmatprep.subr.bf16.mxu0 0
  %176 = vmatpush1.bf16.msra.mxu0 %v150
  %177 = vmatprep.subr.bf16.mxu0 0
  %178 = vmatpush2.bf16.msra.mxu0 0
  %179 = vmatprep.subr.bf16.mxu0 0
  %180 = vmatpush2.bf16.msra.mxu0 0
  %181 = vmatprep.subr.bf16.mxu0 0
  %182 = vmatpush2.bf16.msra.mxu0 0
  %183 = vmatprep.subr.bf16.mxu0 0
  %184 = vmatpush2.bf16.msra.mxu0 0
  %185 = vmatprep.subr.bf16.mxu0 0
  %186 = vmatpush2.bf16.msra.mxu0 0
  %187 = vmatprep.subr.bf16.mxu0 0
  %188 = vmatpush2.bf16.msra.mxu0 0
  %189 = vmatprep.subr.bf16.mxu0 0
  %190 = vmatpush2.bf16.msra.mxu0 0
  %191 = vmatprep.subr.bf16.mxu0 0
  %192 = vmatpush2.bf16.msra.mxu0 0
  %193 = vmatprep.mubr.bf16.mxu0 0
  %194 = vmatmul.mubr.bf16.gmra.mxu0 %v159
  %v195 = vpop.f32.mrf.mxu0
  %v196 = vadd.f32 %v36, %v195
  %v197 = vpop.f32.mrf.mxu0
  %v198 = vpop.f32.mrf.mxu0
  %v199 = vadd.f32 %v41, %v198
  %v200 = vpop.f32.mrf.mxu0
  %201 = vdwg.mxu0
  %s202 = scalar_lea.vmem %s0, 16
  %v203 = vld [vmem:[%s202] sm:$0xf]
  %v204 = vld [vmem:[%s202 + $0x4] sm:$0xf]
  %s205 = scalar_lea.vmem %s1, 64
  %v206 = vld [vmem:[%s205] sm:$0xf]
  %v207 = vld [vmem:[%s205 + $0x4] sm:$0xf]
  %v208 = vld [vmem:[%s205 + $0x8] sm:$0xf]
  %v209 = vld [vmem:[%s205 + $0xc] sm:$0xf]
  %v210 = vld [vmem:[%s205 + $0x10] sm:$0xf]
  %v211 = vld [vmem:[%s205 + $0x14] sm:$0xf]
  %v212 = vld [vmem:[%s205 + $0x18] sm:$0xf]
  %v213 = vld [vmem:[%s205 + $0x1c] sm:$0xf]
  %v216 = vunpack.c.l.b16 %v203
  %v217 = vunpack.c.l.b16 %v204
  %v218 = vpack.c.b16 %v217, %v216
  %v227 = vunpack.c.l.b16 %v206
  %v228 = vunpack.c.l.b16 %v207
  %v229 = vunpack.c.l.b16 %v208
  %v230 = vunpack.c.l.b16 %v209
  %v231 = vunpack.c.l.b16 %v210
  %v232 = vunpack.c.l.b16 %v211
  %v233 = vunpack.c.l.b16 %v212
  %v234 = vunpack.c.l.b16 %v213
  %v235 = vpack.c.b16 %v228, %v227
  %v236 = vpack.c.b16 %v230, %v229
  %v237 = vpack.c.b16 %v232, %v231
  %v238 = vpack.c.b16 %v234, %v233
  %v244 = vsel %vm72, %v218, 0
  %246 = vmatprep.subr.bf16.mxu0 0
  %247 = vmatpush1.bf16.msra.mxu0 0
  %248 = vmatprep.subr.bf16.mxu0 0
  %249 = vmatpush1.bf16.msra.mxu0 0
  %250 = vmatprep.subr.bf16.mxu0 0
  %251 = vmatpush1.bf16.msra.mxu0 0
  %252 = vmatprep.subr.bf16.mxu0 0
  %253 = vmatpush1.bf16.msra.mxu0 0
  %254 = vmatprep.subr.bf16.mxu0 0
  %255 = vmatpush1.bf16.msra.mxu0 %v238
  %256 = vmatprep.subr.bf16.mxu0 0
  %257 = vmatpush1.bf16.msra.mxu0 %v237
  %258 = vmatprep.subr.bf16.mxu0 0
  %259 = vmatpush1.bf16.msra.mxu0 %v236
  %260 = vmatprep.subr.bf16.mxu0 0
  %261 = vmatpush1.bf16.msra.mxu0 %v235
  %262 = vmatprep.subr.bf16.mxu0 0
  %263 = vmatpush2.bf16.msra.mxu0 0
  %264 = vmatprep.subr.bf16.mxu0 0
  %265 = vmatpush2.bf16.msra.mxu0 0
  %266 = vmatprep.subr.bf16.mxu0 0
  %267 = vmatpush2.bf16.msra.mxu0 0
  %268 = vmatprep.subr.bf16.mxu0 0
  %269 = vmatpush2.bf16.msra.mxu0 0
  %270 = vmatprep.subr.bf16.mxu0 0
  %271 = vmatpush2.bf16.msra.mxu0 0
  %272 = vmatprep.subr.bf16.mxu0 0
  %273 = vmatpush2.bf16.msra.mxu0 0
  %274 = vmatprep.subr.bf16.mxu0 0
  %275 = vmatpush2.bf16.msra.mxu0 0
  %276 = vmatprep.subr.bf16.mxu0 0
  %277 = vmatpush2.bf16.msra.mxu0 0
  %278 = vmatprep.mubr.bf16.mxu0 0
  %279 = vmatmul.mubr.bf16.gmra.mxu0 %v244
  %v280 = vpop.f32.mrf.mxu0
  %v281 = vadd.f32 %v36, %v280
  %v282 = vpop.f32.mrf.mxu0
  %v283 = vpop.f32.mrf.mxu0
  %v284 = vadd.f32 %v41, %v283
  %v285 = vpop.f32.mrf.mxu0
  %286 = vdwg.mxu0
  %s287 = scalar_lea.vmem %s0, 24
  %v288 = vld [vmem:[%s287] sm:$0xf]
  %v289 = vld [vmem:[%s287 + $0x4] sm:$0xf]
  %s290 = scalar_lea.vmem %s1, 96
  %v291 = vld [vmem:[%s290] sm:$0xf]
  %v292 = vld [vmem:[%s290 + $0x4] sm:$0xf]
  %v293 = vld [vmem:[%s290 + $0x8] sm:$0xf]
  %v294 = vld [vmem:[%s290 + $0xc] sm:$0xf]
  %v295 = vld [vmem:[%s290 + $0x10] sm:$0xf]
  %v296 = vld [vmem:[%s290 + $0x14] sm:$0xf]
  %v297 = vld [vmem:[%s290 + $0x18] sm:$0xf]
  %v298 = vld [vmem:[%s290 + $0x1c] sm:$0xf]
  %v301 = vunpack.c.l.b16 %v288
  %v302 = vunpack.c.l.b16 %v289
  %v303 = vpack.c.b16 %v302, %v301
  %v312 = vunpack.c.l.b16 %v291
  %v313 = vunpack.c.l.b16 %v292
  %v314 = vunpack.c.l.b16 %v293
  %v315 = vunpack.c.l.b16 %v294
  %v316 = vunpack.c.l.b16 %v295
  %v317 = vunpack.c.l.b16 %v296
  %v318 = vunpack.c.l.b16 %v297
  %v319 = vunpack.c.l.b16 %v298
  %v320 = vpack.c.b16 %v313, %v312
  %v321 = vpack.c.b16 %v315, %v314
  %v322 = vpack.c.b16 %v317, %v316
  %v323 = vpack.c.b16 %v319, %v318
  %v329 = vsel %vm72, %v303, 0
  %331 = vmatprep.subr.bf16.mxu0 0
  %332 = vmatpush1.bf16.msra.mxu0 0
  %333 = vmatprep.subr.bf16.mxu0 0
  %334 = vmatpush1.bf16.msra.mxu0 0
  %335 = vmatprep.subr.bf16.mxu0 0
  %336 = vmatpush1.bf16.msra.mxu0 0
  %337 = vmatprep.subr.bf16.mxu0 0
  %338 = vmatpush1.bf16.msra.mxu0 0
  %339 = vmatprep.subr.bf16.mxu0 0
  %340 = vmatpush1.bf16.msra.mxu0 %v323
  %341 = vmatprep.subr.bf16.mxu0 0
  %342 = vmatpush1.bf16.msra.mxu0 %v322
  %343 = vmatprep.subr.bf16.mxu0 0
  %344 = vmatpush1.bf16.msra.mxu0 %v321
  %345 = vmatprep.subr.bf16.mxu0 0
  %346 = vmatpush1.bf16.msra.mxu0 %v320
  %347 = vmatprep.subr.bf16.mxu0 0
  %348 = vmatpush2.bf16.msra.mxu0 0
  %349 = vmatprep.subr.bf16.mxu0 0
  %350 = vmatpush2.bf16.msra.mxu0 0
  %351 = vmatprep.subr.bf16.mxu0 0
  %352 = vmatpush2.bf16.msra.mxu0 0
  %353 = vmatprep.subr.bf16.mxu0 0
  %354 = vmatpush2.bf16.msra.mxu0 0
  %355 = vmatprep.subr.bf16.mxu0 0
  %356 = vmatpush2.bf16.msra.mxu0 0
  %357 = vmatprep.subr.bf16.mxu0 0
  %358 = vmatpush2.bf16.msra.mxu0 0
  %359 = vmatprep.subr.bf16.mxu0 0
  %360 = vmatpush2.bf16.msra.mxu0 0
  %361 = vmatprep.subr.bf16.mxu0 0
  %362 = vmatpush2.bf16.msra.mxu0 0
  %363 = vmatprep.mubr.bf16.mxu0 0
  %364 = vmatmul.mubr.bf16.gmra.mxu0 %v329
  %v365 = vpop.f32.mrf.mxu0
  %v366 = vadd.f32 %v36, %v365
  %v367 = vpop.f32.mrf.mxu0
  %v368 = vpop.f32.mrf.mxu0
  %v369 = vadd.f32 %v41, %v368
  %v370 = vpop.f32.mrf.mxu0
  %371 = vdwg.mxu0
  %vm372 = vcmp.ge.f32.partialorder %v111, 0.0
  %vm373 = vcmp.ge.f32.partialorder %v114, 0.0
  %v374 = vmul.f32 %v111, 0.0
  %v375 = vmul.f32 %v114, 0.0
  %v376 = vsel %vm372, %v111, %v374
  %v377 = vsel %vm373, %v114, %v375
  %v378 = vpack.c.bf16 %v377, %v376
  %v380 = vunpack.c.l.b16 %v378
  %v381 = vunpack.c.h.b16 %v378
  %v382 = vpack.c.b16 %v380, %v380
  %v383 = vpack.c.b16 %v381, %v381
  %vm386 = vcmask 11264
  %387 = vst.msk [vmem:[%s5] sm:$0xf] %vm386, %v382
  %388 = vst.msk [vmem:[%s5 + $0x4] sm:$0xf] %vm386, %v383
  %vm389 = vcmp.ge.f32.partialorder %v196, 0.0
  %vm390 = vcmp.ge.f32.partialorder %v199, 0.0
  %v391 = vmul.f32 %v196, 0.0
  %v392 = vmul.f32 %v199, 0.0
  %v393 = vsel %vm389, %v196, %v391
  %v394 = vsel %vm390, %v199, %v392
  %v395 = vpack.c.bf16 %v394, %v393
  %v397 = vunpack.c.l.b16 %v395
  %v398 = vunpack.c.h.b16 %v395
  %v399 = vpack.c.b16 %v397, %v397
  %v400 = vpack.c.b16 %v398, %v398
  %s403 = scalar_lea.vmem %s5, 8
  %404 = vst.msk [vmem:[%s403] sm:$0xf] %vm386, %v399
  %405 = vst.msk [vmem:[%s403 + $0x4] sm:$0xf] %vm386, %v400
  %vm406 = vcmp.ge.f32.partialorder %v281, 0.0
  %vm407 = vcmp.ge.f32.partialorder %v284, 0.0
  %v408 = vmul.f32 %v281, 0.0
  %v409 = vmul.f32 %v284, 0.0
  %v410 = vsel %vm406, %v281, %v408
  %v411 = vsel %vm407, %v284, %v409
  %v412 = vpack.c.bf16 %v411, %v410
  %v414 = vunpack.c.l.b16 %v412
  %v415 = vunpack.c.h.b16 %v412
  %v416 = vpack.c.b16 %v414, %v414
  %v417 = vpack.c.b16 %v415, %v415
  %s420 = scalar_lea.vmem %s5, 16
  %421 = vst.msk [vmem:[%s420] sm:$0xf] %vm386, %v416
  %422 = vst.msk [vmem:[%s420 + $0x4] sm:$0xf] %vm386, %v417
  %vm423 = vcmp.ge.f32.partialorder %v366, 0.0
  %vm424 = vcmp.ge.f32.partialorder %v369, 0.0
  %v425 = vmul.f32 %v366, 0.0
  %v426 = vmul.f32 %v369, 0.0
  %v427 = vsel %vm423, %v366, %v425
  %v428 = vsel %vm424, %v369, %v426
  %v429 = vpack.c.bf16 %v428, %v427
  %v431 = vunpack.c.l.b16 %v429
  %v432 = vunpack.c.h.b16 %v429
  %v433 = vpack.c.b16 %v431, %v431
  %v434 = vpack.c.b16 %v432, %v432
  %s437 = scalar_lea.vmem %s5, 24
  %438 = vst.msk [vmem:[%s437] sm:$0xf] %vm386, %v433
  %439 = vst.msk [vmem:[%s437 + $0x4] sm:$0xf] %vm386, %v434
  // Predicated region
  $region22: #{_lambda_.23} parent=0 // pred_check
    _
  $region23: #{_lambda_.23} parent=0 // pred_check_branch
    %441 = sbr.rel (0) target = $region25
  $region24: #{_lambda_.23} parent=0 // pred_region
    _
  $region25: #{_lambda_.23} parent=0 // pred_fallthru
    _
  // Predicated region
  $region26: #{_lambda_.23} parent=0 // pred_check
    _
  $region27: #{_lambda_.23} parent=0 // pred_check_branch
    %443 = sbr.rel (0) target = $region29
  $region28: #{_lambda_.23} parent=0 // pred_region
    _
  $region29: #{_lambda_.23} parent=0 // pred_fallthru
    _

// kernel: _lambda_.25
$region0: #{_lambda_.25}
  #allocation0 [shape = 'u32[]', space=smem, size = 0x4, offset = 0x4, fixed_abs, tag = 'smem constant byte address 0x4 - core index']
  #allocation1 [shape = 'u32[144,128]{1,0:T(1,128)}', space=vmem, size = 0x12000, scoped, tag = 'internal scratch']
  %s0 = inlined_call_operand.vmem [shape: bf16[4,8,128], index: 0, kind: input, shape index: {}]
  %s1 = inlined_call_operand.vmem [shape: bf16[4,128,8], index: 1, kind: input, shape index: {}]
  %s2 = inlined_call_operand.vmem [shape: f32[8,1], index: 2, kind: input, shape index: {}]
  %s3 = inlined_call_operand.vmem [shape: f32[8,1], index: 3, kind: input, shape index: {}]
  %s4 = inlined_call_operand.vmem [shape: f32[8,1], index: 4, kind: input, shape index: {}]
  %s5 = inlined_call_operand.vmem [shape: bf16[4,8,8], index: 5, kind: output, shape index: {}]
  %s6 = sld [smem:[#allocation0]]
  $region30: #{_lambda_.25} parent=0
    _
  %s8 = ssub.s32 1, %s6
  %s9 = scalar_select 0, %s8, %s6
  // Predicated region
  $region2: #{_lambda_.25} parent=0 // pred_check
    _
  $region3: #{_lambda_.25} parent=0 // pred_check_branch
    %11 = sbr.rel (0) target = $region5
  $region4: #{_lambda_.25} parent=0 // pred_region
    _
  $region5: #{_lambda_.25} parent=0 // pred_fallthru
    _
  // Predicated region
  $region6: #{_lambda_.25} parent=0 // pred_check
    _
  $region7: #{_lambda_.25} parent=0 // pred_check_branch
    %13 = sbr.rel (0) target = $region9
  $region8: #{_lambda_.25} parent=0 // pred_region
    _
  $region9: #{_lambda_.25} parent=0 // pred_fallthru
    _
  // Predicated region
  $region10: #{_lambda_.25} parent=0 // pred_check
    _
  $region11: #{_lambda_.25} parent=0 // pred_check_branch
    %15 = sbr.rel (0) target = $region13
  $region12: #{_lambda_.25} parent=0 // pred_region
    _
  $region13: #{_lambda_.25} parent=0 // pred_fallthru
    _
  // Predicated region
  $region14: #{_lambda_.25} parent=0 // pred_check
    _
  $region15: #{_lambda_.25} parent=0 // pred_check_branch
    %17 = sbr.rel (0) target = $region17
  $region16: #{_lambda_.25} parent=0 // pred_region
    _
  $region17: #{_lambda_.25} parent=0 // pred_fallthru
    _
  // Predicated region
  $region18: #{_lambda_.25} parent=0 // pred_check
    _
  $region19: #{_lambda_.25} parent=0 // pred_check_branch
    %19 = sbr.rel (0) target = $region21
  $region20: #{_lambda_.25} parent=0 // pred_region
    _
  $region21: #{_lambda_.25} parent=0 // pred_fallthru
    _
  %v21 = vld [vmem:[%s2] sm:$0xff]
  %v22 = vld [vmem:[%s0] sm:$0xf]
  %v23 = vld [vmem:[%s1] sm:$0xf]
  %v24 = vld [vmem:[%s1 + $0x4] sm:$0xf]
  %v25 = vld [vmem:[%s1 + $0x8] sm:$0xf]
  %v26 = vld [vmem:[%s1 + $0xc] sm:$0xf]
  %v27 = vld [vmem:[%s1 + $0x10] sm:$0xf]
  %v28 = vld [vmem:[%s1 + $0x14] sm:$0xf]
  %v29 = vld [vmem:[%s1 + $0x18] sm:$0xf]
  %v30 = vld [vmem:[%s1 + $0x1c] sm:$0xf]
  %v31 = vld [vmem:[%s1 + $0x20] sm:$0xf]
  %v32 = vld [vmem:[%s1 + $0x24] sm:$0xf]
  %v33 = vld [vmem:[%s1 + $0x28] sm:$0xf]
  %v34 = vld [vmem:[%s1 + $0x2c] sm:$0xf]
  %v35 = vld [vmem:[%s1 + $0x30] sm:$0xf]
  %v36 = vld [vmem:[%s1 + $0x34] sm:$0xf]
  %v37 = vld [vmem:[%s1 + $0x38] sm:$0xf]
  %v38 = vld [vmem:[%s1 + $0x3c] sm:$0xf]
  %40 = vset.pattern.permute.xlu0 0
  %41 = vperm.xlu0 %40, %v21
  %v42 = vpop.permute.xlu0 %41
  %v60 = vunpack.c.l.b16 %v23
  %v61 = vunpack.c.l.b16 %v24
  %v62 = vunpack.c.l.b16 %v25
  %v63 = vunpack.c.l.b16 %v26
  %v64 = vunpack.c.l.b16 %v27
  %v65 = vunpack.c.l.b16 %v28
  %v66 = vunpack.c.l.b16 %v29
  %v67 = vunpack.c.l.b16 %v30
  %v68 = vunpack.c.l.b16 %v31
  %v69 = vunpack.c.l.b16 %v32
  %v70 = vunpack.c.l.b16 %v33
  %v71 = vunpack.c.l.b16 %v34
  %v72 = vunpack.c.l.b16 %v35
  %v73 = vunpack.c.l.b16 %v36
  %v74 = vunpack.c.l.b16 %v37
  %v75 = vunpack.c.l.b16 %v38
  %v76 = vpack.c.b16 %v61, %v60
  %v77 = vpack.c.b16 %v63, %v62
  %v78 = vpack.c.b16 %v65, %v64
  %v79 = vpack.c.b16 %v67, %v66
  %v80 = vpack.c.b16 %v69, %v68
  %v81 = vpack.c.b16 %v71, %v70
  %v82 = vpack.c.b16 %v73, %v72
  %v83 = vpack.c.b16 %v75, %v74
  %92 = vmatprep.subr.bf16.mxu0 0
  %93 = vmatpush1.bf16.msra.mxu0 %v83
  %94 = vmatprep.subr.bf16.mxu0 0
  %95 = vmatpush1.bf16.msra.mxu0 %v82
  %96 = vmatprep.subr.bf16.mxu0 0
  %97 = vmatpush1.bf16.msra.mxu0 %v81
  %98 = vmatprep.subr.bf16.mxu0 0
  %99 = vmatpush1.bf16.msra.mxu0 %v80
  %100 = vmatprep.subr.bf16.mxu0 0
  %101 = vmatpush1.bf16.msra.mxu0 %v79
  %102 = vmatprep.subr.bf16.mxu0 0
  %103 = vmatpush1.bf16.msra.mxu0 %v78
  %104 = vmatprep.subr.bf16.mxu0 0
  %105 = vmatpush1.bf16.msra.mxu0 %v77
  %106 = vmatprep.subr.bf16.mxu0 0
  %107 = vmatpush1.bf16.msra.mxu0 %v76
  %108 = vmatprep.subr.bf16.mxu0 0
  %109 = vmatpush2.bf16.msra.mxu0 0
  %110 = vmatprep.subr.bf16.mxu0 0
  %111 = vmatpush2.bf16.msra.mxu0 0
  %112 = vmatprep.subr.bf16.mxu0 0
  %113 = vmatpush2.bf16.msra.mxu0 0
  %114 = vmatprep.subr.bf16.mxu0 0
  %115 = vmatpush2.bf16.msra.mxu0 0
  %116 = vmatprep.subr.bf16.mxu0 0
  %117 = vmatpush2.bf16.msra.mxu0 0
  %118 = vmatprep.subr.bf16.mxu0 0
  %119 = vmatpush2.bf16.msra.mxu0 0
  %120 = vmatprep.subr.bf16.mxu0 0
  %121 = vmatpush2.bf16.msra.mxu0 0
  %122 = vmatprep.subr.bf16.mxu0 0
  %123 = vmatpush2.bf16.msra.mxu0 0
  %124 = vmatprep.mubr.bf16.mxu0 0
  %125 = vmatmul.mubr.bf16.gmra.mxu0 %v22
  %v126 = vpop.f32.mrf.mxu0
  %v127 = vadd.f32 %v42, %v126
  %v128 = vpop.f32.mrf.mxu0
  %v129 = vpop.f32.mrf.mxu0
  %v130 = vpop.f32.mrf.mxu0
  %131 = vdwg.mxu0
  %s132 = scalar_lea.vmem %s0, 4
  %v133 = vld [vmem:[%s132] sm:$0xf]
  %s134 = scalar_lea.vmem %s1, 64
  %v135 = vld [vmem:[%s134] sm:$0xf]
  %v136 = vld [vmem:[%s134 + $0x4] sm:$0xf]
  %v137 = vld [vmem:[%s134 + $0x8] sm:$0xf]
  %v138 = vld [vmem:[%s134 + $0xc] sm:$0xf]
  %v139 = vld [vmem:[%s134 + $0x10] sm:$0xf]
  %v140 = vld [vmem:[%s134 + $0x14] sm:$0xf]
  %v141 = vld [vmem:[%s134 + $0x18] sm:$0xf]
  %v142 = vld [vmem:[%s134 + $0x1c] sm:$0xf]
  %v143 = vld [vmem:[%s134 + $0x20] sm:$0xf]
  %v144 = vld [vmem:[%s134 + $0x24] sm:$0xf]
  %v145 = vld [vmem:[%s134 + $0x28] sm:$0xf]
  %v146 = vld [vmem:[%s134 + $0x2c] sm:$0xf]
  %v147 = vld [vmem:[%s134 + $0x30] sm:$0xf]
  %v148 = vld [vmem:[%s134 + $0x34] sm:$0xf]
  %v149 = vld [vmem:[%s134 + $0x38] sm:$0xf]
  %v150 = vld [vmem:[%s134 + $0x3c] sm:$0xf]
  %v167 = vunpack.c.l.b16 %v135
  %v168 = vunpack.c.l.b16 %v136
  %v169 = vunpack.c.l.b16 %v137
  %v170 = vunpack.c.l.b16 %v138
  %v171 = vunpack.c.l.b16 %v139
  %v172 = vunpack.c.l.b16 %v140
  %v173 = vunpack.c.l.b16 %v141
  %v174 = vunpack.c.l.b16 %v142
  %v175 = vunpack.c.l.b16 %v143
  %v176 = vunpack.c.l.b16 %v144
  %v177 = vunpack.c.l.b16 %v145
  %v178 = vunpack.c.l.b16 %v146
  %v179 = vunpack.c.l.b16 %v147
  %v180 = vunpack.c.l.b16 %v148
  %v181 = vunpack.c.l.b16 %v149
  %v182 = vunpack.c.l.b16 %v150
  %v183 = vpack.c.b16 %v168, %v167
  %v184 = vpack.c.b16 %v170, %v169
  %v185 = vpack.c.b16 %v172, %v171
  %v186 = vpack.c.b16 %v174, %v173
  %v187 = vpack.c.b16 %v176, %v175
  %v188 = vpack.c.b16 %v178, %v177
  %v189 = vpack.c.b16 %v180, %v179
  %v190 = vpack.c.b16 %v182, %v181
  %199 = vmatprep.subr.bf16.mxu0 0
  %200 = vmatpush1.bf16.msra.mxu0 %v190
  %201 = vmatprep.subr.bf16.mxu0 0
  %202 = vmatpush1.bf16.msra.mxu0 %v189
  %203 = vmatprep.subr.bf16.mxu0 0
  %204 = vmatpush1.bf16.msra.mxu0 %v188
  %205 = vmatprep.subr.bf16.mxu0 0
  %206 = vmatpush1.bf16.msra.mxu0 %v187
  %207 = vmatprep.subr.bf16.mxu0 0
  %208 = vmatpush1.bf16.msra.mxu0 %v186
  %209 = vmatprep.subr.bf16.mxu0 0
  %210 = vmatpush1.bf16.msra.mxu0 %v185
  %211 = vmatprep.subr.bf16.mxu0 0
  %212 = vmatpush1.bf16.msra.mxu0 %v184
  %213 = vmatprep.subr.bf16.mxu0 0
  %214 = vmatpush1.bf16.msra.mxu0 %v183
  %215 = vmatprep.subr.bf16.mxu0 0
  %216 = vmatpush2.bf16.msra.mxu0 0
  %217 = vmatprep.subr.bf16.mxu0 0
  %218 = vmatpush2.bf16.msra.mxu0 0
  %219 = vmatprep.subr.bf16.mxu0 0
  %220 = vmatpush2.bf16.msra.mxu0 0
  %221 = vmatprep.subr.bf16.mxu0 0
  %222 = vmatpush2.bf16.msra.mxu0 0
  %223 = vmatprep.subr.bf16.mxu0 0
  %224 = vmatpush2.bf16.msra.mxu0 0
  %225 = vmatprep.subr.bf16.mxu0 0
  %226 = vmatpush2.bf16.msra.mxu0 0
  %227 = vmatprep.subr.bf16.mxu0 0
  %228 = vmatpush2.bf16.msra.mxu0 0
  %229 = vmatprep.subr.bf16.mxu0 0
  %230 = vmatpush2.bf16.msra.mxu0 0
  %231 = vmatprep.mubr.bf16.mxu0 0
  %232 = vmatmul.mubr.bf16.gmra.mxu0 %v133
  %v233 = vpop.f32.mrf.mxu0
  %v234 = vadd.f32 %v42, %v233
  %v235 = vpop.f32.mrf.mxu0
  %v236 = vpop.f32.mrf.mxu0
  %v237 = vpop.f32.mrf.mxu0
  %238 = vdwg.mxu0
  %s239 = scalar_lea.vmem %s0, 8
  %v240 = vld [vmem:[%s239] sm:$0xf]
  %s241 = scalar_lea.vmem %s1, 128
  %v242 = vld [vmem:[%s241] sm:$0xf]
  %v243 = vld [vmem:[%s241 + $0x4] sm:$0xf]
  %v244 = vld [vmem:[%s241 + $0x8] sm:$0xf]
  %v245 = vld [vmem:[%s241 + $0xc] sm:$0xf]
  %v246 = vld [vmem:[%s241 + $0x10] sm:$0xf]
  %v247 = vld [vmem:[%s241 + $0x14] sm:$0xf]
  %v248 = vld [vmem:[%s241 + $0x18] sm:$0xf]
  %v249 = vld [vmem:[%s241 + $0x1c] sm:$0xf]
  %v250 = vld [vmem:[%s241 + $0x20] sm:$0xf]
  %v251 = vld [vmem:[%s241 + $0x24] sm:$0xf]
  %v252 = vld [vmem:[%s241 + $0x28] sm:$0xf]
  %v253 = vld [vmem:[%s241 + $0x2c] sm:$0xf]
  %v254 = vld [vmem:[%s241 + $0x30] sm:$0xf]
  %v255 = vld [vmem:[%s241 + $0x34] sm:$0xf]
  %v256 = vld [vmem:[%s241 + $0x38] sm:$0xf]
  %v257 = vld [vmem:[%s241 + $0x3c] sm:$0xf]
  %v274 = vunpack.c.l.b16 %v242
  %v275 = vunpack.c.l.b16 %v243
  %v276 = vunpack.c.l.b16 %v244
  %v277 = vunpack.c.l.b16 %v245
  %v278 = vunpack.c.l.b16 %v246
  %v279 = vunpack.c.l.b16 %v247
  %v280 = vunpack.c.l.b16 %v248
  %v281 = vunpack.c.l.b16 %v249
  %v282 = vunpack.c.l.b16 %v250
  %v283 = vunpack.c.l.b16 %v251
  %v284 = vunpack.c.l.b16 %v252
  %v285 = vunpack.c.l.b16 %v253
  %v286 = vunpack.c.l.b16 %v254
  %v287 = vunpack.c.l.b16 %v255
  %v288 = vunpack.c.l.b16 %v256
  %v289 = vunpack.c.l.b16 %v257
  %v290 = vpack.c.b16 %v275, %v274
  %v291 = vpack.c.b16 %v277, %v276
  %v292 = vpack.c.b16 %v279, %v278
  %v293 = vpack.c.b16 %v281, %v280
  %v294 = vpack.c.b16 %v283, %v282
  %v295 = vpack.c.b16 %v285, %v284
  %v296 = vpack.c.b16 %v287, %v286
  %v297 = vpack.c.b16 %v289, %v288
  %306 = vmatprep.subr.bf16.mxu0 0
  %307 = vmatpush1.bf16.msra.mxu0 %v297
  %308 = vmatprep.subr.bf16.mxu0 0
  %309 = vmatpush1.bf16.msra.mxu0 %v296
  %310 = vmatprep.subr.bf16.mxu0 0
  %311 = vmatpush1.bf16.msra.mxu0 %v295
  %312 = vmatprep.subr.bf16.mxu0 0
  %313 = vmatpush1.bf16.msra.mxu0 %v294
  %314 = vmatprep.subr.bf16.mxu0 0
  %315 = vmatpush1.bf16.msra.mxu0 %v293
  %316 = vmatprep.subr.bf16.mxu0 0
  %317 = vmatpush1.bf16.msra.mxu0 %v292
  %318 = vmatprep.subr.bf16.mxu0 0
  %319 = vmatpush1.bf16.msra.mxu0 %v291
  %320 = vmatprep.subr.bf16.mxu0 0
  %321 = vmatpush1.bf16.msra.mxu0 %v290
  %322 = vmatprep.subr.bf16.mxu0 0
  %323 = vmatpush2.bf16.msra.mxu0 0
  %324 = vmatprep.subr.bf16.mxu0 0
  %325 = vmatpush2.bf16.msra.mxu0 0
  %326 = vmatprep.subr.bf16.mxu0 0
  %327 = vmatpush2.bf16.msra.mxu0 0
  %328 = vmatprep.subr.bf16.mxu0 0
  %329 = vmatpush2.bf16.msra.mxu0 0
  %330 = vmatprep.subr.bf16.mxu0 0
  %331 = vmatpush2.bf16.msra.mxu0 0
  %332 = vmatprep.subr.bf16.mxu0 0
  %333 = vmatpush2.bf16.msra.mxu0 0
  %334 = vmatprep.subr.bf16.mxu0 0
  %335 = vmatpush2.bf16.msra.mxu0 0
  %336 = vmatprep.subr.bf16.mxu0 0
  %337 = vmatpush2.bf16.msra.mxu0 0
  %338 = vmatprep.mubr.bf16.mxu0 0
  %339 = vmatmul.mubr.bf16.gmra.mxu0 %v240
  %v340 = vpop.f32.mrf.mxu0
  %v341 = vadd.f32 %v42, %v340
  %v342 = vpop.f32.mrf.mxu0
  %v343 = vpop.f32.mrf.mxu0
  %v344 = vpop.f32.mrf.mxu0
  %345 = vdwg.mxu0
  %s346 = scalar_lea.vmem %s0, 12
  %v347 = vld [vmem:[%s346] sm:$0xf]
  %s348 = scalar_lea.vmem %s1, 192
  %v349 = vld [vmem:[%s348] sm:$0xf]
  %v350 = vld [vmem:[%s348 + $0x4] sm:$0xf]
  %v351 = vld [vmem:[%s348 + $0x8] sm:$0xf]
  %v352 = vld [vmem:[%s348 + $0xc] sm:$0xf]
  %v353 = vld [vmem:[%s348 + $0x10] sm:$0xf]
  %v354 = vld [vmem:[%s348 + $0x14] sm:$0xf]
  %v355 = vld [vmem:[%s348 + $0x18] sm:$0xf]
  %v356 = vld [vmem:[%s348 + $0x1c] sm:$0xf]
  %v357 = vld [vmem:[%s348 + $0x20] sm:$0xf]
  %v358 = vld [vmem:[%s348 + $0x24] sm:$0xf]
  %v359 = vld [vmem:[%s348 + $0x28] sm:$0xf]
  %v360 = vld [vmem:[%s348 + $0x2c] sm:$0xf]
  %v361 = vld [vmem:[%s348 + $0x30] sm:$0xf]
  %v362 = vld [vmem:[%s348 + $0x34] sm:$0xf]
  %v363 = vld [vmem:[%s348 + $0x38] sm:$0xf]
  %v364 = vld [vmem:[%s348 + $0x3c] sm:$0xf]
  %v381 = vunpack.c.l.b16 %v349
  %v382 = vunpack.c.l.b16 %v350
  %v383 = vunpack.c.l.b16 %v351
  %v384 = vunpack.c.l.b16 %v352
  %v385 = vunpack.c.l.b16 %v353
  %v386 = vunpack.c.l.b16 %v354
  %v387 = vunpack.c.l.b16 %v355
  %v388 = vunpack.c.l.b16 %v356
  %v389 = vunpack.c.l.b16 %v357
  %v390 = vunpack.c.l.b16 %v358
  %v391 = vunpack.c.l.b16 %v359
  %v392 = vunpack.c.l.b16 %v360
  %v393 = vunpack.c.l.b16 %v361
  %v394 = vunpack.c.l.b16 %v362
  %v395 = vunpack.c.l.b16 %v363
  %v396 = vunpack.c.l.b16 %v364
  %v397 = vpack.c.b16 %v382, %v381
  %v398 = vpack.c.b16 %v384, %v383
  %v399 = vpack.c.b16 %v386, %v385
  %v400 = vpack.c.b16 %v388, %v387
  %v401 = vpack.c.b16 %v390, %v389
  %v402 = vpack.c.b16 %v392, %v391
  %v403 = vpack.c.b16 %v394, %v393
  %v404 = vpack.c.b16 %v396, %v395
  %413 = vmatprep.subr.bf16.mxu0 0
  %414 = vmatpush1.bf16.msra.mxu0 %v404
  %415 = vmatprep.subr.bf16.mxu0 0
  %416 = vmatpush1.bf16.msra.mxu0 %v403
  %417 = vmatprep.subr.bf16.mxu0 0
  %418 = vmatpush1.bf16.msra.mxu0 %v402
  %419 = vmatprep.subr.bf16.mxu0 0
  %420 = vmatpush1.bf16.msra.mxu0 %v401
  %421 = vmatprep.subr.bf16.mxu0 0
  %422 = vmatpush1.bf16.msra.mxu0 %v400
  %423 = vmatprep.subr.bf16.mxu0 0
  %424 = vmatpush1.bf16.msra.mxu0 %v399
  %425 = vmatprep.subr.bf16.mxu0 0
  %426 = vmatpush1.bf16.msra.mxu0 %v398
  %427 = vmatprep.subr.bf16.mxu0 0
  %428 = vmatpush1.bf16.msra.mxu0 %v397
  %429 = vmatprep.subr.bf16.mxu0 0
  %430 = vmatpush2.bf16.msra.mxu0 0
  %431 = vmatprep.subr.bf16.mxu0 0
  %432 = vmatpush2.bf16.msra.mxu0 0
  %433 = vmatprep.subr.bf16.mxu0 0
  %434 = vmatpush2.bf16.msra.mxu0 0
  %435 = vmatprep.subr.bf16.mxu0 0
  %436 = vmatpush2.bf16.msra.mxu0 0
  %437 = vmatprep.subr.bf16.mxu0 0
  %438 = vmatpush2.bf16.msra.mxu0 0
  %439 = vmatprep.subr.bf16.mxu0 0
  %440 = vmatpush2.bf16.msra.mxu0 0
  %441 = vmatprep.subr.bf16.mxu0 0
  %442 = vmatpush2.bf16.msra.mxu0 0
  %443 = vmatprep.subr.bf16.mxu0 0
  %444 = vmatpush2.bf16.msra.mxu0 0
  %445 = vmatprep.mubr.bf16.mxu0 0
  %446 = vmatmul.mubr.bf16.gmra.mxu0 %v347
  %v447 = vpop.f32.mrf.mxu0
  %v448 = vadd.f32 %v42, %v447
  %v449 = vpop.f32.mrf.mxu0
  %v450 = vpop.f32.mrf.mxu0
  %v451 = vpop.f32.mrf.mxu0
  %452 = vdwg.mxu0
  %vm453 = vcmask 64512
  %v454 = vsel %vm453, %v127, 0.0
  %455 = vadd.xlane.f32.xlu0 %v454
  %v456 = vpop.xlane.xlu0 %455
  %v457 = vmul.f32 %v127, %v127
  %v458 = vsel %vm453, %v457, 0.0
  %459 = vadd.xlane.f32.xlu0 %v458
  %v460 = vpop.xlane.xlu0 %459
  %v461 = vsel %vm453, %v234, 0.0
  %462 = vadd.xlane.f32.xlu0 %v461
  %v463 = vpop.xlane.xlu0 %462
  %v464 = vadd.f32 %v456, %v463
  %v465 = vmul.f32 %v234, %v234
  %v466 = vsel %vm453, %v465, 0.0
  %467 = vadd.xlane.f32.xlu0 %v466
  %v468 = vpop.xlane.xlu0 %467
  %v469 = vadd.f32 %v460, %v468
  %v470 = vsel %vm453, %v341, 0.0
  %471 = vadd.xlane.f32.xlu0 %v470
  %v472 = vpop.xlane.xlu0 %471
  %v473 = vadd.f32 %v464, %v472
  %v474 = vmul.f32 %v341, %v341
  %v475 = vsel %vm453, %v474, 0.0
  %476 = vadd.xlane.f32.xlu0 %v475
  %v477 = vpop.xlane.xlu0 %476
  %v478 = vadd.f32 %v469, %v477
  %v479 = vsel %vm453, %v448, 0.0
  %480 = vadd.xlane.f32.xlu0 %v479
  %v481 = vpop.xlane.xlu0 %480
  %v482 = vadd.f32 %v473, %v481
  %v483 = vmul.f32 %v448, %v448
  %v484 = vsel %vm453, %v483, 0.0
  %485 = vadd.xlane.f32.xlu0 %v484
  %v486 = vpop.xlane.xlu0 %485
  %v487 = vadd.f32 %v478, %v486
  %v488 = vmul.f32 %v482, 0.03125
  %v489 = vmul.f32 %v487, 0.03125
  %v490 = vmul.f32 %v488, %v488
  %v491 = vsub.f32 %v489, %v490
  %v492 = vmax.f32 %v491, 0.0
  %v493 = vld [vmem:[%s3] sm:$0xff]
  %v494 = vadd.f32 %v492, 1e-05
  %v495 = vrsqrt.pop %v494
  %v496 = vmul.f32 %v493, %v495
  %v497 = vld [vmem:[%s4] sm:$0xff]
  %v498 = vmul.f32 %v488, %v496
  %v499 = vsub.f32 %v497, %v498
  %501 = vset.pattern.permute.xlu0 0
  %502 = vperm.xlu0 %501, %v496
  %v503 = vpop.permute.xlu0 %502
  %v505 = vmul.f32 %v127, %v503
  %507 = vset.pattern.permute.xlu0 0
  %508 = vperm.xlu0 %507, %v499
  %v509 = vpop.permute.xlu0 %508
  %v511 = vadd.f32 %v505, %v509
  %v512 = vmul.f32 %v234, %v503
  %v513 = vadd.f32 %v512, %v509
  %v514 = vmul.f32 %v341, %v503
  %v515 = vadd.f32 %v514, %v509
  %v516 = vmul.f32 %v448, %v503
  %v517 = vadd.f32 %v516, %v509
  %vm518 = vcmp.ge.f32.partialorder %v511, 0.0
  %v519 = vmul.f32 %v511, 0.0
  %v520 = vsel %vm518, %v511, %v519
  %v521 = vpack.c.bf16 %v520, %v520
  %vm522 = vcmask 60416
  %523 = vst.msk [vmem:[%s5] sm:$0xf] %vm522, %v521
  %vm524 = vcmp.ge.f32.partialorder %v513, 0.0
  %v525 = vmul.f32 %v513, 0.0
  %v526 = vsel %vm524, %v513, %v525
  %v527 = vpack.c.bf16 %v526, %v526
  %s528 = scalar_lea.vmem %s5, 4
  %529 = vst.msk [vmem:[%s528] sm:$0xf] %vm522, %v527
  %vm530 = vcmp.ge.f32.partialorder %v515, 0.0
  %v531 = vmul.f32 %v515, 0.0
  %v532 = vsel %vm530, %v515, %v531
  %v533 = vpack.c.bf16 %v532, %v532
  %s534 = scalar_lea.vmem %s5, 8
  %535 = vst.msk [vmem:[%s534] sm:$0xf] %vm522, %v533
  %vm536 = vcmp.ge.f32.partialorder %v517, 0.0
  %v537 = vmul.f32 %v517, 0.0
  %v538 = vsel %vm536, %v517, %v537
  %v539 = vpack.c.bf16 %v538, %v538
  %s540 = scalar_lea.vmem %s5, 12
  %541 = vst.msk [vmem:[%s540] sm:$0xf] %vm522, %v539
  // Predicated region
  $region22: #{_lambda_.25} parent=0 // pred_check
    _
  $region23: #{_lambda_.25} parent=0 // pred_check_branch
    %543 = sbr.rel (0) target = $region25
  $region24: #{_lambda_.25} parent=0 // pred_region
    _
  $region25: #{_lambda_.25} parent=0 // pred_fallthru
    _
  // Predicated region
  $region26: #{_lambda_.25} parent=0 // pred_check
    _
  $region27: #{_lambda_.25} parent=0 // pred_check_branch
    %545 = sbr.rel (0) target = $region29
  $region28: #{_lambda_.25} parent=0 // pred_region
    _
  $region29: #{_lambda_.25} parent=0 // pred_fallthru
    _

// kernel: _lambda_.26
$region0: #{_lambda_.26}
  #allocation0 [shape = 'u32[]', space=smem, size = 0x4, offset = 0x4, fixed_abs, tag = 'smem constant byte address 0x4 - core index']
  #allocation1 [shape = 'u32[144,128]{1,0:T(1,128)}', space=vmem, size = 0x12000, scoped, tag = 'internal scratch']
  %s0 = inlined_call_operand.vmem [shape: bf16[1,8,72], index: 0, kind: input, shape index: {}]
  %s1 = inlined_call_operand.vmem [shape: bf16[1,72,32], index: 1, kind: input, shape index: {}]
  %s2 = inlined_call_operand.vmem [shape: f32[8,1], index: 2, kind: input, shape index: {}]
  %s3 = inlined_call_operand.vmem [shape: f32[8,1], index: 3, kind: input, shape index: {}]
  %s4 = inlined_call_operand.vmem [shape: f32[8,1], index: 4, kind: input, shape index: {}]
  %s5 = inlined_call_operand.vmem [shape: bf16[1,8,32], index: 5, kind: output, shape index: {}]
  %s6 = sld [smem:[#allocation0]]
  $region30: #{_lambda_.26} parent=0
    _
  %s8 = ssub.s32 1, %s6
  %s9 = scalar_select 0, %s8, %s6
  // Predicated region
  $region2: #{_lambda_.26} parent=0 // pred_check
    _
  $region3: #{_lambda_.26} parent=0 // pred_check_branch
    %11 = sbr.rel (0) target = $region5
  $region4: #{_lambda_.26} parent=0 // pred_region
    _
  $region5: #{_lambda_.26} parent=0 // pred_fallthru
    _
  // Predicated region
  $region6: #{_lambda_.26} parent=0 // pred_check
    _
  $region7: #{_lambda_.26} parent=0 // pred_check_branch
    %13 = sbr.rel (0) target = $region9
  $region8: #{_lambda_.26} parent=0 // pred_region
    _
  $region9: #{_lambda_.26} parent=0 // pred_fallthru
    _
  // Predicated region
  $region10: #{_lambda_.26} parent=0 // pred_check
    _
  $region11: #{_lambda_.26} parent=0 // pred_check_branch
    %15 = sbr.rel (0) target = $region13
  $region12: #{_lambda_.26} parent=0 // pred_region
    _
  $region13: #{_lambda_.26} parent=0 // pred_fallthru
    _
  // Predicated region
  $region14: #{_lambda_.26} parent=0 // pred_check
    _
  $region15: #{_lambda_.26} parent=0 // pred_check_branch
    %17 = sbr.rel (0) target = $region17
  $region16: #{_lambda_.26} parent=0 // pred_region
    _
  $region17: #{_lambda_.26} parent=0 // pred_fallthru
    _
  // Predicated region
  $region18: #{_lambda_.26} parent=0 // pred_check
    _
  $region19: #{_lambda_.26} parent=0 // pred_check_branch
    %19 = sbr.rel (0) target = $region21
  $region20: #{_lambda_.26} parent=0 // pred_region
    _
  $region21: #{_lambda_.26} parent=0 // pred_fallthru
    _
  %v21 = vld [vmem:[%s2] sm:$0xff]
  %v22 = vld [vmem:[%s0] sm:$0xf]
  %v23 = vld [vmem:[%s1] sm:$0xf]
  %v24 = vld [vmem:[%s1 + $0x4] sm:$0xf]
  %v25 = vld [vmem:[%s1 + $0x8] sm:$0xf]
  %v26 = vld [vmem:[%s1 + $0xc] sm:$0xf]
  %v27 = vld [vmem:[%s1 + $0x10] sm:$0xf]
  %v28 = vld [vmem:[%s1 + $0x14] sm:$0xf]
  %v29 = vld [vmem:[%s1 + $0x18] sm:$0xf]
  %v30 = vld [vmem:[%s1 + $0x1c] sm:$0xf]
  %v31 = vld [vmem:[%s1 + $0x20] sm:$0xf]
  %33 = vset.pattern.permute.xlu0 0
  %34 = vperm.xlu0 %33, %v21
  %v35 = vpop.permute.xlu0 %34
  %v46 = vunpack.c.l.b16 %v23
  %v47 = vunpack.c.l.b16 %v24
  %v48 = vunpack.c.l.b16 %v25
  %v49 = vunpack.c.l.b16 %v26
  %v50 = vunpack.c.l.b16 %v27
  %v51 = vunpack.c.l.b16 %v28
  %v52 = vunpack.c.l.b16 %v29
  %v53 = vunpack.c.l.b16 %v30
  %v54 = vunpack.c.l.b16 %v31
  %v55 = vpack.c.b16 %v47, %v46
  %v56 = vpack.c.b16 %v49, %v48
  %v57 = vpack.c.b16 %v51, %v50
  %v58 = vpack.c.b16 %v53, %v52
  %v59 = vpack.c.b16 %v54, %v54
  %vm64 = vcmask 588800
  %v66 = vsel %vm64, %v22, 0
  %vm68 = vcmask 1043456
  %v70 = vsel %vm68, %v59, 0
  %72 = vmatprep.subr.bf16.mxu0 0
  %73 = vmatpush1.bf16.msra.mxu0 0
  %74 = vmatprep.subr.bf16.mxu0 0
  %75 = vmatpush1.bf16.msra.mxu0 0
  %76 = vmatprep.subr.bf16.mxu0 0
  %77 = vmatpush1.bf16.msra.mxu0 0
  %78 = vmatprep.subr.bf16.mxu0 0
  %79 = vmatpush1.bf16.msra.mxu0 %v70
  %80 = vmatprep.subr.bf16.mxu0 0
  %81 = vmatpush1.bf16.msra.mxu0 %v58
  %82 = vmatprep.subr.bf16.mxu0 0
  %83 = vmatpush1.bf16.msra.mxu0 %v57
  %84 = vmatprep.subr.bf16.mxu0 0
  %85 = vmatpush1.bf16.msra.mxu0 %v56
  %86 = vmatprep.subr.bf16.mxu0 0
  %87 = vmatpush1.bf16.msra.mxu0 %v55
  %88 = vmatprep.subr.bf16.mxu0 0
  %89 = vmatpush2.bf16.msra.mxu0 0
  %90 = vmatprep.subr.bf16.mxu0 0
  %91 = vmatpush2.bf16.msra.mxu0 0
  %92 = vmatprep.subr.bf16.mxu0 0
  %93 = vmatpush2.bf16.msra.mxu0 0
  %94 = vmatprep.subr.bf16.mxu0 0
  %95 = vmatpush2.bf16.msra.mxu0 0
  %96 = vmatprep.subr.bf16.mxu0 0
  %97 = vmatpush2.bf16.msra.mxu0 0
  %98 = vmatprep.subr.bf16.mxu0 0
  %99 = vmatpush2.bf16.msra.mxu0 0
  %100 = vmatprep.subr.bf16.mxu0 0
  %101 = vmatpush2.bf16.msra.mxu0 0
  %102 = vmatprep.subr.bf16.mxu0 0
  %103 = vmatpush2.bf16.msra.mxu0 0
  %104 = vmatprep.mubr.bf16.mxu0 0
  %105 = vmatmul.mubr.bf16.gmra.mxu0 %v66
  %v106 = vpop.f32.mrf.mxu0
  %v107 = vadd.f32 %v35, %v106
  %v108 = vpop.f32.mrf.mxu0
  %v109 = vpop.f32.mrf.mxu0
  %v110 = vpop.f32.mrf.mxu0
  %111 = vdwg.mxu0
  %vm112 = vcmask 261120
  %v113 = vsel %vm112, %v107, 0.0
  %114 = vadd.xlane.f32.xlu0 %v113
  %v115 = vpop.xlane.xlu0 %114
  %v116 = vmul.f32 %v107, %v107
  %v117 = vsel %vm112, %v116, 0.0
  %118 = vadd.xlane.f32.xlu0 %v117
  %v119 = vpop.xlane.xlu0 %118
  %v120 = vmul.f32 %v115, 0.03125
  %v121 = vmul.f32 %v119, 0.03125
  %v122 = vmul.f32 %v120, %v120
  %v123 = vsub.f32 %v121, %v122
  %v124 = vmax.f32 %v123, 0.0
  %v125 = vld [vmem:[%s3] sm:$0xff]
  %v126 = vadd.f32 %v124, 1e-05
  %v127 = vrsqrt.pop %v126
  %v128 = vmul.f32 %v125, %v127
  %v129 = vld [vmem:[%s4] sm:$0xff]
  %v130 = vmul.f32 %v120, %v128
  %v131 = vsub.f32 %v129, %v130
  %133 = vset.pattern.permute.xlu0 0
  %134 = vperm.xlu0 %133, %v128
  %v135 = vpop.permute.xlu0 %134
  %v137 = vmul.f32 %v107, %v135
  %139 = vset.pattern.permute.xlu0 0
  %140 = vperm.xlu0 %139, %v131
  %v141 = vpop.permute.xlu0 %140
  %v143 = vadd.f32 %v137, %v141
  %vm144 = vcmp.ge.f32.partialorder %v143, 0.0
  %v145 = vmul.f32 %v143, 0.0
  %v146 = vsel %vm144, %v143, %v145
  %v147 = vpack.c.bf16 %v146, %v146
  %vm148 = vcmask 257024
  %149 = vst.msk [vmem:[%s5] sm:$0xf] %vm148, %v147
  // Predicated region
  $region22: #{_lambda_.26} parent=0 // pred_check
    _
  $region23: #{_lambda_.26} parent=0 // pred_check_branch
    %151 = sbr.rel (0) target = $region25
  $region24: #{_lambda_.26} parent=0 // pred_region
    _
  $region25: #{_lambda_.26} parent=0 // pred_fallthru
    _
  // Predicated region
  $region26: #{_lambda_.26} parent=0 // pred_check
    _
  $region27: #{_lambda_.26} parent=0 // pred_check_branch
    %153 = sbr.rel (0) target = $region29
  $region28: #{_lambda_.26} parent=0 // pred_region
    _
  $region29: #{_lambda_.26} parent=0 // pred_fallthru
    _

// kernel: _lambda_.27
$region0: #{_lambda_.27}
  #allocation0 [shape = 'u32[]', space=smem, size = 0x4, offset = 0x4, fixed_abs, tag = 'smem constant byte address 0x4 - core index']
  #allocation1 [shape = 'u32[144,128]{1,0:T(1,128)}', space=vmem, size = 0x12000, scoped, tag = 'internal scratch']
  %s0 = inlined_call_operand.vmem [shape: bf16[1,4,144], index: 0, kind: input, shape index: {}]
  %s1 = inlined_call_operand.vmem [shape: bf16[1,144,32], index: 1, kind: input, shape index: {}]
  %s2 = inlined_call_operand.vmem [shape: f32[4,1], index: 2, kind: input, shape index: {}]
  %s3 = inlined_call_operand.vmem [shape: f32[4,1], index: 3, kind: input, shape index: {}]
  %s4 = inlined_call_operand.vmem [shape: f32[4,1], index: 4, kind: input, shape index: {}]
  %s5 = inlined_call_operand.vmem [shape: bf16[1,4,32], index: 5, kind: output, shape index: {}]
  %s6 = sld [smem:[#allocation0]]
  $region30: #{_lambda_.27} parent=0
    _
  %s8 = ssub.s32 1, %s6
  %s9 = scalar_select 0, %s8, %s6
  // Predicated region
  $region2: #{_lambda_.27} parent=0 // pred_check
    _
  $region3: #{_lambda_.27} parent=0 // pred_check_branch
    %11 = sbr.rel (0) target = $region5
  $region4: #{_lambda_.27} parent=0 // pred_region
    _
  $region5: #{_lambda_.27} parent=0 // pred_fallthru
    _
  // Predicated region
  $region6: #{_lambda_.27} parent=0 // pred_check
    _
  $region7: #{_lambda_.27} parent=0 // pred_check_branch
    %13 = sbr.rel (0) target = $region9
  $region8: #{_lambda_.27} parent=0 // pred_region
    _
  $region9: #{_lambda_.27} parent=0 // pred_fallthru
    _
  // Predicated region
  $region10: #{_lambda_.27} parent=0 // pred_check
    _
  $region11: #{_lambda_.27} parent=0 // pred_check_branch
    %15 = sbr.rel (0) target = $region13
  $region12: #{_lambda_.27} parent=0 // pred_region
    _
  $region13: #{_lambda_.27} parent=0 // pred_fallthru
    _
  // Predicated region
  $region14: #{_lambda_.27} parent=0 // pred_check
    _
  $region15: #{_lambda_.27} parent=0 // pred_check_branch
    %17 = sbr.rel (0) target = $region17
  $region16: #{_lambda_.27} parent=0 // pred_region
    _
  $region17: #{_lambda_.27} parent=0 // pred_fallthru
    _
  // Predicated region
  $region18: #{_lambda_.27} parent=0 // pred_check
    _
  $region19: #{_lambda_.27} parent=0 // pred_check_branch
    %19 = sbr.rel (0) target = $region21
  $region20: #{_lambda_.27} parent=0 // pred_region
    _
  $region21: #{_lambda_.27} parent=0 // pred_fallthru
    _
  %v21 = vld [vmem:[%s2] sm:$0xf]
  %v22 = vld [vmem:[%s0] sm:$0xf]
  %v23 = vld [vmem:[%s1] sm:$0xf]
  %v24 = vld [vmem:[%s1 + $0x4] sm:$0xf]
  %v25 = vld [vmem:[%s1 + $0x8] sm:$0xf]
  %v26 = vld [vmem:[%s1 + $0xc] sm:$0xf]
  %v27 = vld [vmem:[%s1 + $0x10] sm:$0xf]
  %v28 = vld [vmem:[%s1 + $0x14] sm:$0xf]
  %v29 = vld [vmem:[%s1 + $0x18] sm:$0xf]
  %v30 = vld [vmem:[%s1 + $0x1c] sm:$0xf]
  %v31 = vld [vmem:[%s1 + $0x20] sm:$0xf]
  %v32 = vld [vmem:[%s1 + $0x24] sm:$0xf]
  %v33 = vld [vmem:[%s1 + $0x28] sm:$0xf]
  %v34 = vld [vmem:[%s1 + $0x2c] sm:$0xf]
  %v35 = vld [vmem:[%s1 + $0x30] sm:$0xf]
  %v36 = vld [vmem:[%s1 + $0x34] sm:$0xf]
  %v37 = vld [vmem:[%s1 + $0x38] sm:$0xf]
  %v38 = vld [vmem:[%s1 + $0x3c] sm:$0xf]
  %v39 = vld [vmem:[%s1 + $0x40] sm:$0xf]
  %v40 = vld [vmem:[%s1 + $0x44] sm:$0xf]
  %42 = vset.pattern.permute.xlu0 0
  %43 = vperm.xlu0 %42, %v21
  %v44 = vpop.permute.xlu0 %43
  %v48 = vunpack.c.l.s4 1983009808
  %v49 = vunpack.c.0.s8 %v48
  %v50 = vlaneseq
  %v51 = vshrl.u32 %v50, 7
  %v52 = vsub.s32 %v49, %v51
  %v53 = vrot.slane %v22, %v52
  %v54 = vcombine.high %v53, %v53
  %v74 = vunpack.c.l.b16 %v23
  %v75 = vunpack.c.l.b16 %v24
  %v76 = vunpack.c.l.b16 %v25
  %v77 = vunpack.c.l.b16 %v26
  %v78 = vunpack.c.l.b16 %v27
  %v79 = vunpack.c.l.b16 %v28
  %v80 = vunpack.c.l.b16 %v29
  %v81 = vunpack.c.l.b16 %v30
  %v82 = vunpack.c.l.b16 %v31
  %v83 = vunpack.c.l.b16 %v32
  %v84 = vunpack.c.l.b16 %v33
  %v85 = vunpack.c.l.b16 %v34
  %v86 = vunpack.c.l.b16 %v35
  %v87 = vunpack.c.l.b16 %v36
  %v88 = vunpack.c.l.b16 %v37
  %v89 = vunpack.c.l.b16 %v38
  %v90 = vunpack.c.l.b16 %v39
  %v91 = vunpack.c.l.b16 %v40
  %v92 = vpack.c.b16 %v75, %v74
  %v93 = vpack.c.b16 %v77, %v76
  %v94 = vpack.c.b16 %v79, %v78
  %v95 = vpack.c.b16 %v81, %v80
  %v96 = vpack.c.b16 %v83, %v82
  %v97 = vpack.c.b16 %v85, %v84
  %v98 = vpack.c.b16 %v87, %v86
  %v99 = vpack.c.b16 %v89, %v88
  %v100 = vpack.c.b16 %v91, %v90
  %vm110 = vcmask 130048
  %v112 = vsel %vm110, %v54, 0
  %114 = vmatprep.subr.bf16.mxu0 0
  %115 = vmatpush1.bf16.msra.mxu0 %v99
  %116 = vmatprep.subr.bf16.mxu0 0
  %117 = vmatpush1.bf16.msra.mxu0 %v98
  %118 = vmatprep.subr.bf16.mxu0 0
  %119 = vmatpush1.bf16.msra.mxu0 %v97
  %120 = vmatprep.subr.bf16.mxu0 0
  %121 = vmatpush1.bf16.msra.mxu0 %v96
  %122 = vmatprep.subr.bf16.mxu0 0
  %123 = vmatpush1.bf16.msra.mxu0 %v95
  %124 = vmatprep.subr.bf16.mxu0 0
  %125 = vmatpush1.bf16.msra.mxu0 %v94
  %126 = vmatprep.subr.bf16.mxu0 0
  %127 = vmatpush1.bf16.msra.mxu0 %v93
  %128 = vmatprep.subr.bf16.mxu0 0
  %129 = vmatpush1.bf16.msra.mxu0 %v92
  %130 = vmatprep.subr.bf16.mxu0 0
  %131 = vmatpush2.bf16.msra.mxu0 0
  %132 = vmatprep.subr.bf16.mxu0 0
  %133 = vmatpush2.bf16.msra.mxu0 0
  %134 = vmatprep.subr.bf16.mxu0 0
  %135 = vmatpush2.bf16.msra.mxu0 0
  %136 = vmatprep.subr.bf16.mxu0 0
  %137 = vmatpush2.bf16.msra.mxu0 0
  %138 = vmatprep.subr.bf16.mxu0 0
  %139 = vmatpush2.bf16.msra.mxu0 0
  %140 = vmatprep.subr.bf16.mxu0 0
  %141 = vmatpush2.bf16.msra.mxu0 0
  %142 = vmatprep.subr.bf16.mxu0 0
  %143 = vmatpush2.bf16.msra.mxu0 0
  %144 = vmatprep.subr.bf16.mxu0 0
  %145 = vmatpush2.bf16.msra.mxu0 %v100
  %146 = vmatprep.mubr.bf16.mxu0 %v112
  %147 = vmatmul.mubr.bf16.gmra.mxu0 %v53
  %v148 = vpop.f32.mrf.mxu0
  %v149 = vadd.f32 %v44, %v148
  %v150 = vpop.f32.mrf.mxu0
  %v151 = vpop.f32.mrf.mxu0
  %v152 = vpop.f32.mrf.mxu0
  %153 = vdwg.mxu0
  %vm154 = vcmask 257024
  %v155 = vsel %vm154, %v149, 0.0
  %156 = vadd.xlane.f32.xlu0 %v155
  %v157 = vpop.xlane.xlu0 %156
  %v158 = vmul.f32 %v149, %v149
  %v159 = vsel %vm154, %v158, 0.0
  %160 = vadd.xlane.f32.xlu0 %v159
  %v161 = vpop.xlane.xlu0 %160
  %v162 = vmul.f32 %v157, 0.03125
  %v163 = vmul.f32 %v161, 0.03125
  %v164 = vmul.f32 %v162, %v162
  %v165 = vsub.f32 %v163, %v164
  %v166 = vmax.f32 %v165, 0.0
  %v167 = vld [vmem:[%s3] sm:$0xf]
  %v168 = vadd.f32 %v166, 1e-05
  %v169 = vrsqrt.pop %v168
  %v170 = vmul.f32 %v167, %v169
  %v171 = vld [vmem:[%s4] sm:$0xf]
  %v172 = vmul.f32 %v162, %v170
  %v173 = vsub.f32 %v171, %v172
  %175 = vset.pattern.permute.xlu0 0
  %176 = vperm.xlu0 %175, %v170
  %v177 = vpop.permute.xlu0 %176
  %v179 = vmul.f32 %v149, %v177
  %181 = vset.pattern.permute.xlu0 0
  %182 = vperm.xlu0 %181, %v173
  %v183 = vpop.permute.xlu0 %182
  %v185 = vadd.f32 %v179, %v183
  %vm186 = vcmp.ge.f32.partialorder %v185, 0.0
  %v187 = vmul.f32 %v185, 0.0
  %v188 = vsel %vm186, %v185, %v187
  %v189 = vpack.c.bf16 %v188, %v188
  %vm190 = vcmask 254976
  %191 = vst.msk [vmem:[%s5] sm:$0x3] %vm190, %v189
  // Predicated region
  $region22: #{_lambda_.27} parent=0 // pred_check
    _
  $region23: #{_lambda_.27} parent=0 // pred_check_branch
    %193 = sbr.rel (0) target = $region25
  $region24: #{_lambda_.27} parent=0 // pred_region
    _
  $region25: #{_lambda_.27} parent=0 // pred_fallthru
    _
  // Predicated region
  $region26: #{_lambda_.27} parent=0 // pred_check
    _
  $region27: #{_lambda_.27} parent=0 // pred_check_branch
    %195 = sbr.rel (0) target = $region29
  $region28: #{_lambda_.27} parent=0 // pred_region
    _
  $region29: #{_lambda_.27} parent=0 // pred_fallthru
    _

</llo_original>
